<compile_context>
chip_gen: v5e
topology: v5e:2x2
jax: 0.10.0
libtpu: 0.0.40
codegen_flags: <defaults>
</compile_context>

<pallas_src>
import functools

import jax
import jax.numpy as jnp
from jax.experimental import pallas as pl
from jax.experimental.pallas import tpu as pltpu

LN_EPS = 1e-5               # PyTorch nn.LayerNorm default eps
INV_SQRT2 = 0.7071067811865476


def _default_vmem_limit():
    cap = 128 * 1024 * 1024
    try:
        info = pltpu.get_tpu_info()
        cap = getattr(info, "vmem_capacity_bytes", cap) or cap
    except Exception:
        pass
    # ~3/4 of physical VMEM, capped: 96 MiB on 128 MiB parts, 48 MiB on v7x.
    return int(min(cap * 3 // 4, 100 * 1024 * 1024))


VMEM_LIMIT = _default_vmem_limit()


def _pick_tile(n, target, align):
    """Largest tile <= target that divides n and is a multiple of `align`,
    else the full dimension (full dims are always legal block shapes)."""
    if n <= target:
        return n
    t = (target // align) * align
    while t >= align:
        if n % t == 0:
            return t
        t -= align
    return n


# ---------------------------------------------------------------------------
# Fused LayerNorm + QKV projection, output written as (3, M, D) so the
# attention kernel can address Q / K / V with independent BlockSpecs.
# Grid (M//tm,); full K and full N per block (weight stays resident).
# ---------------------------------------------------------------------------
def _ln_qkv_kernel(x_ref, lw_ref, lb_ref, w_ref, b_ref, o_ref, *, d_out):
    x = x_ref[...].astype(jnp.float32)
    mu = jnp.mean(x, axis=-1, keepdims=True)
    var = jnp.mean((x - mu) ** 2, axis=-1, keepdims=True)
    xn = (x - mu) * jax.lax.rsqrt(var + LN_EPS)
    xn = xn * lw_ref[...].astype(jnp.float32) + lb_ref[...].astype(jnp.float32)
    y = jnp.dot(xn, w_ref[...], preferred_element_type=jnp.float32)
    y = y + b_ref[...].astype(jnp.float32)
    for c in range(3):                                   # q / k / v buckets
        o_ref[c] = y[:, c * d_out:(c + 1) * d_out].astype(o_ref.dtype)


def ln_qkv(x, lw, lb, w, b, tm=512):
    M, K = x.shape
    N = w.shape[1]
    D = N // 3
    tm = _pick_tile(M, tm, 8)
    grid = (M // tm,)
    kernel = functools.partial(_ln_qkv_kernel, d_out=D)
    return pl.pallas_call(
        kernel,
        out_shape=jax.ShapeDtypeStruct((3, M, D), x.dtype),
        grid=grid,
        in_specs=[
            pl.BlockSpec((tm, K), lambda i: (i, 0)),
            pl.BlockSpec((1, K), lambda i: (0, 0)),
            pl.BlockSpec((1, K), lambda i: (0, 0)),
            pl.BlockSpec((K, N), lambda i: (0, 0)),
            pl.BlockSpec((1, N), lambda i: (0, 0)),
        ],
        out_specs=pl.BlockSpec((3, tm, D), lambda i: (0, i, 0)),
        compiler_params=pltpu.CompilerParams(
            dimension_semantics=("parallel",),
            vmem_limit_bytes=VMEM_LIMIT),
    )(x, lw, lb, w, b)


# ---------------------------------------------------------------------------
# Fused LayerNorm + Linear (+ optional exact-erf GELU), generic N tiling.
# Grid (M//tm, N//tn); the normalized x is computed once per M-tile into a
# VMEM scratch (at j == 0) and reused for every N tile.
# ---------------------------------------------------------------------------
def _ln_linear_kernel(x_ref, lw_ref, lb_ref, w_ref, b_ref, o_ref, xn_ref, *,
                      gelu):
    @pl.when(pl.program_id(1) == 0)
    def _():
        x = x_ref[...].astype(jnp.float32)
        mu = jnp.mean(x, axis=-1, keepdims=True)
        var = jnp.mean((x - mu) ** 2, axis=-1, keepdims=True)
        xn = (x - mu) * jax.lax.rsqrt(var + LN_EPS)
        xn_ref[...] = (xn * lw_ref[...].astype(jnp.float32)
                       + lb_ref[...].astype(jnp.float32))

    y = jnp.dot(xn_ref[...], w_ref[...], preferred_element_type=jnp.float32)
    y = y + b_ref[...].astype(jnp.float32)
    if gelu:
        y = 0.5 * y * (1.0 + jax.lax.erf(y * INV_SQRT2))
    o_ref[...] = y.astype(o_ref.dtype)


def ln_linear(x, lw, lb, w, b, gelu=False, tm=512, tn=512):
    M, K = x.shape
    N = w.shape[1]
    tm = _pick_tile(M, tm, 8)
    tn = _pick_tile(N, tn, 128)
    grid = (M // tm, N // tn)
    kernel = functools.partial(_ln_linear_kernel, gelu=gelu)
    return pl.pallas_call(
        kernel,
        out_shape=jax.ShapeDtypeStruct((M, N), x.dtype),
        grid=grid,
        in_specs=[
            pl.BlockSpec((tm, K), lambda i, j: (i, 0)),
            pl.BlockSpec((1, K), lambda i, j: (0, 0)),
            pl.BlockSpec((1, K), lambda i, j: (0, 0)),
            pl.BlockSpec((K, tn), lambda i, j: (0, j)),
            pl.BlockSpec((1, tn), lambda i, j: (0, j)),
        ],
        out_specs=pl.BlockSpec((tm, tn), lambda i, j: (i, j)),
        scratch_shapes=[pltpu.VMEM((tm, K), jnp.float32)],
        compiler_params=pltpu.CompilerParams(
            dimension_semantics=("parallel", "arbitrary"),
            vmem_limit_bytes=VMEM_LIMIT),
    )(x, lw, lb, w, b)


# ---------------------------------------------------------------------------
# Tiled Linear: y = x @ W + b  (+ optional GELU, + optional residual).
# Grid (M//tm, N//tn, K//tk), f32 accumulator scratch, K is the reduction axis.
# ---------------------------------------------------------------------------
def _linear_kernel(x_ref, w_ref, b_ref, *rest, gelu, residual):
    if residual:
        r_ref, o_ref, acc_ref = rest
    else:
        o_ref, acc_ref = rest
    kk = pl.program_id(2)

    @pl.when(kk == 0)
    def _():
        acc_ref[...] = jnp.zeros_like(acc_ref)

    acc_ref[...] += jnp.dot(x_ref[...], w_ref[...],
                            preferred_element_type=jnp.float32)

    @pl.when(kk == pl.num_programs(2) - 1)
    def _():
        y = acc_ref[...] + b_ref[...].astype(jnp.float32)
        if gelu:
            y = 0.5 * y * (1.0 + jax.lax.erf(y * INV_SQRT2))
        if residual:
            y = y + r_ref[...].astype(jnp.float32)
        o_ref[...] = y.astype(o_ref.dtype)


def linear(x, w, b, residual=None, gelu=False, tm=512, tn=512, tk=1024):
    M, K = x.shape
    N = w.shape[1]
    tm = _pick_tile(M, tm, 8)
    tn = _pick_tile(N, tn, 128)
    tk = _pick_tile(K, tk, 128)
    grid = (M // tm, N // tn, K // tk)
    in_specs = [
        pl.BlockSpec((tm, tk), lambda i, j, k: (i, k)),
        pl.BlockSpec((tk, tn), lambda i, j, k: (k, j)),
        pl.BlockSpec((1, tn), lambda i, j, k: (0, j)),
    ]
    args = [x, w, b]
    if residual is not None:
        in_specs.append(pl.BlockSpec((tm, tn), lambda i, j, k: (i, j)))
        args.append(residual)
    kernel = functools.partial(_linear_kernel, gelu=gelu,
                               residual=residual is not None)
    return pl.pallas_call(
        kernel,
        out_shape=jax.ShapeDtypeStruct((M, N), x.dtype),
        grid=grid,
        in_specs=in_specs,
        out_specs=pl.BlockSpec((tm, tn), lambda i, j, k: (i, j)),
        scratch_shapes=[pltpu.VMEM((tm, tn), jnp.float32)],
        compiler_params=pltpu.CompilerParams(
            dimension_semantics=("parallel", "parallel", "arbitrary"),
            vmem_limit_bytes=VMEM_LIMIT),
    )(*args)


# ---------------------------------------------------------------------------
# Hypertoroidal attention kernel.
# Grid (B, T//tq).  Key-side features (head-LN, splat / entry distances) are
# computed ONCE per batch (qi == 0) into persistent VMEM scratch; each query
# tile computes its own features and per-head scores / softmax / PV.
#   * per-head feature layout (lanes): [S surface | S*E entry] contiguous.
#   * ||a-b||^2 = ||a||^2 + ||b||^2 - 2 a.b via block-diagonal point matrices.
# ---------------------------------------------------------------------------
def _hyper_attn_kernel(q_ref, k_ref, v_ref, A_ref, Bb_ref, ln_ref,
                       expand_ref, pmat_ref, const_ref, o_ref, fk_ref, *,
                       n_heads, n_feat):
    f32 = jnp.float32
    H = n_heads
    F0 = n_feat
    D = A_ref.shape[0]
    hd = D // H

    A = A_ref[...].astype(f32)            # (D, H)  per-head mean matrix (1/hd)
    Bb = Bb_ref[...].astype(f32)          # (H, D)  per-head broadcast matrix
    lnc = ln_ref[...].astype(f32)         # (2, D)  head-LN weight / bias
    lw = lnc[0:1, :]
    lb = lnc[1:2, :]
    expand = expand_ref[...].astype(f32)  # (H, HF) per-head lane expansion
    pmat = pmat_ref[...].astype(f32)      # (D, HF) block-diag centers+entries
    c = const_ref[...].astype(f32)        # (6, HF) packed per-column constants
    pn2 = c[0:1, :]                       # ||center / entry||^2
    outer = c[1:2, :]                     # |outer_radius| + 1e-8 (1 on entries)
    hole = c[2:3, :]                      # |hole_radius| (0 on entries)
    qscale = c[3:4, :]                    # amp/S  or  amp/S * gated sigmoid
    is_surf = c[4:5, :] > 0.5
    small_hole = c[5:6, :] > 0.5

    def head_norm(z):                     # LayerNorm over each head's hd lanes
        m = jnp.dot(z, A, preferred_element_type=f32)            # (rows, H)
        ex2 = jnp.dot(z * z, A, preferred_element_type=f32)
        var = jnp.maximum(ex2 - m * m, 0.0)
        rstd = jax.lax.rsqrt(var + LN_EPS)
        m_f = jnp.dot(m, Bb, preferred_element_type=f32)         # (rows, D)
        r_f = jnp.dot(rstd, Bb, preferred_element_type=f32)
        zn = (z - m_f) * r_f * lw + lb
        # TODO(synk): E[z^2]-m^2 / distance expansion are cancellation-prone
        #             in f32; switch to direct (z - c) per head if drift shows.
        zsq = jnp.dot(zn * zn, A, preferred_element_type=f32) * float(hd)
        return zn, zsq                    # normalized rows, per-head ||zn||^2

    def features(zn, zsq):
        zn2 = jnp.dot(zsq, expand, preferred_element_type=f32)   # (rows, HF)
        d2 = jnp.maximum(
            zn2 + pn2 - 2.0 * jnp.dot(zn, pmat, preferred_element_type=f32),
            0.0)
        d = jnp.sqrt(d2)                                          # surface path
        major = jnp.abs(d - outer)
        torus = jnp.sqrt(major * major + hole * hole)
        sd = jnp.where(small_hole, major, jnp.abs(torus - hole))
        arg = jnp.where(is_surf, sd * sd, d2)                     # entry: raw d2
        return jnp.exp(-0.5 * arg)

    # ---- key-side features: computed once per batch, kept in VMEM scratch ---
    @pl.when(pl.program_id(1) == 0)
    def _():
        k = k_ref[0, 0].astype(f32)                               # (T, D)
        kn, ksq = head_norm(k)
        fk_ref[...] = features(kn, ksq)

    # ---- query-side features for this tile -----------------------------------
    q = q_ref[0, 0].astype(f32)                                   # (tq, D)
    qn, qsq = head_norm(q)
    fq = features(qn, qsq) * qscale                               # (tq, HF)

    fk = fk_ref[...]                                              # (T, HF)
    v = v_ref[0, 0].astype(f32)                                   # (T, D)

    for h in range(H):                                            # small, static
        fqh = fq[:, h * F0:(h + 1) * F0]
        fkh = fk[:, h * F0:(h + 1) * F0]
        scores = jax.lax.dot_general(
            fqh, fkh, (((1,), (1,)), ((), ())),
            preferred_element_type=f32)                           # (tq, T)
        m = jnp.max(scores, axis=-1, keepdims=True)
        p = jnp.exp(scores - m)
        s = jnp.sum(p, axis=-1, keepdims=True)
        inv = pl.reciprocal(s, approx=True)                       # EUP
        inv = inv * (2.0 - s * inv)                               # 1 Newton step
        out_h = jnp.dot(p, v[:, h * hd:(h + 1) * hd],
                        preferred_element_type=f32) * inv
        o_ref[0, :, h * hd:(h + 1) * hd] = out_h.astype(o_ref.dtype)


def hypertoroidal_attention(qkv3, p, n_heads, tq_target=256):
    # qkv3: (3, B, T, D)  -- chunk 0 = Q, 1 = K, 2 = V
    _, B, T, D = qkv3.shape
    H = n_heads
    hd = D // H
    f32 = jnp.float32

    centers = p['centers'].astype(f32)            # (H, S, hd)
    entry_points = p['entry_points'].astype(f32)  # (H, S, E, hd)
    S = centers.shape[1]
    E = entry_points.shape[2]
    F0 = S + S * E
    HF = H * F0

    # --- derived constant tensors (tiny, computed once per call under jit) ---
    eyeH = jnp.eye(H, dtype=f32)
    A = jnp.repeat(eyeH, hd, axis=0) / float(hd)              # (D, H)
    Bb = jnp.repeat(eyeH, hd, axis=1)                         # (H, D)
    ln_c = jnp.concatenate(
        [jnp.tile(p['head_ln_w'].reshape(1, hd), (1, H)),
         jnp.tile(p['head_ln_b'].reshape(1, hd), (1, H))], axis=0)   # (2, D)
    expand = jnp.repeat(eyeH, F0, axis=1)                     # (H, HF)

    # per-head points: [centers (S) | entry points (S*E)] -> block-diag (D, HF)
    pts = jnp.concatenate([centers, entry_points.reshape(H, S * E, hd)], axis=1)
    pmat = jnp.einsum('hg,gfd->hdgf', eyeH, pts).reshape(D, HF)
    pn2 = jnp.sum(pts ** 2, axis=-1).reshape(1, HF)

    outer_s = jnp.abs(p['outer_radius'].astype(f32)) + 1e-8   # (H, S)
    hole_s = jnp.abs(p['hole_radius'].astype(f32))
    sscale = p['amplitude'].astype(f32) / float(S)            # (H, S)
    sig = jax.nn.sigmoid(p['entry_strengths'].astype(f32))    # (H, S, E)
    w_eff = jnp.where(sig > 0.1, sig, 0.0)                    # inactive -> 0
    escale = (p['amplitude'].astype(f32) / float(S))[:, :, None] * w_eff

    def per_head_cat(surf_vals, ent_vals):                    # -> (1, HF)
        return jnp.concatenate(
            [surf_vals, ent_vals.reshape(H, S * E)], axis=1).reshape(1, HF)

    outer_r = per_head_cat(outer_s, jnp.ones((H, S, E), f32))
    hole_r = per_head_cat(hole_s, jnp.zeros((H, S, E), f32))
    qscale = per_head_cat(sscale, escale)
    is_surf = per_head_cat(jnp.ones((H, S), f32), jnp.zeros((H, S, E), f32))
    small_hole = (hole_r < 0.1 * outer_r).astype(f32)
    consts = jnp.concatenate(
        [pn2, outer_r, hole_r, qscale, is_surf, small_hole], axis=0)   # (6, HF)

    tq = _pick_tile(T, tq_target, 8)
    grid = (B, T // tq)

    def cfix(arr):
        nd = arr.ndim
        return pl.BlockSpec(arr.shape, lambda b, qi, _nd=nd: (0,) * _nd)

    kernel = functools.partial(_hyper_attn_kernel, n_heads=H, n_feat=F0)
    return pl.pallas_call(
        kernel,
        out_shape=jax.ShapeDtypeStruct((B, T, D), qkv3.dtype),
        grid=grid,
        in_specs=[
            pl.BlockSpec((1, 1, tq, D), lambda b, qi: (0, b, qi, 0)),  # Q tile
            pl.BlockSpec((1, 1, T, D), lambda b, qi: (1, b, 0, 0)),    # K (per-batch resident)
            pl.BlockSpec((1, 1, T, D), lambda b, qi: (2, b, 0, 0)),    # V (per-batch resident)
            cfix(A), cfix(Bb), cfix(ln_c), cfix(expand), cfix(pmat), cfix(consts),
        ],
        out_specs=pl.BlockSpec((1, tq, D), lambda b, qi: (b, qi, 0)),
        scratch_shapes=[pltpu.VMEM((T, HF), jnp.float32)],   # key-side features
        compiler_params=pltpu.CompilerParams(
            dimension_semantics=("parallel", "arbitrary"),
            vmem_limit_bytes=VMEM_LIMIT),
    )(qkv3, qkv3, qkv3, A, Bb, ln_c, expand, pmat, consts)


# ---------------------------------------------------------------------------
# Full transformer block forward (only free reshapes in plain JAX).
# ---------------------------------------------------------------------------
def transformer_block_forward(x, p, n_heads, attn_tq=256):
    B, T, D = x.shape
    xf = x.reshape(B * T, D)

    # attention branch: x + out_proj(attn(norm1(x)))
    qkv3 = ln_qkv(xf, p['ln1_w'], p['ln1_b'], p['qkv_w'], p['qkv_b'])   # (3,BT,D)
    attn = hypertoroidal_attention(qkv3.reshape(3, B, T, D), p, n_heads,
                                   tq_target=attn_tq)                    # (B,T,D)
    x1 = linear(attn.reshape(B * T, D), p['out_w'], p['out_b'], residual=xf)

    # MLP branch: x + mlp(norm2(x))
    m = ln_linear(x1, p['ln2_w'], p['ln2_b'], p['mlp1_w'], p['mlp1_b'], gelu=True)
    x2 = linear(m, p['mlp2_w'], p['mlp2_b'], residual=x1)
    return x2.reshape(B, T, D)


# ---------------------------------------------------------------------------
# Deterministic parameter initialization (shapes per the PyTorch __init__).
# ---------------------------------------------------------------------------
def init_params(key, dim, n_heads, n_splats, n_entries):
    hd = dim // n_heads
    mlp_dim = 4 * dim
    ks = jax.random.split(key, 10)

    def lin(k, fan_in, fan_out):
        kw, kb = jax.random.split(k)
        bound = 1.0 / (fan_in ** 0.5)
        w = jax.random.uniform(kw, (fan_in, fan_out), jnp.float32, -bound, bound)
        b = jax.random.uniform(kb, (1, fan_out), jnp.float32, -bound, bound)
        return w, b

    qkv_w, qkv_b = lin(ks[0], dim, 3 * dim)
    out_w, out_b = lin(ks[1], dim, dim)
    mlp1_w, mlp1_b = lin(ks[2], dim, mlp_dim)
    mlp2_w, mlp2_b = lin(ks[3], mlp_dim, dim)

    H, S, E = n_heads, n_splats, n_entries
    return dict(
        ln1_w=jnp.ones((1, dim), jnp.float32), ln1_b=jnp.zeros((1, dim), jnp.float32),
        ln2_w=jnp.ones((1, dim), jnp.float32), ln2_b=jnp.zeros((1, dim), jnp.float32),
        head_ln_w=jnp.ones((1, hd), jnp.float32), head_ln_b=jnp.zeros((1, hd), jnp.float32),
        qkv_w=qkv_w, qkv_b=qkv_b, out_w=out_w, out_b=out_b,
        mlp1_w=mlp1_w, mlp1_b=mlp1_b, mlp2_w=mlp2_w, mlp2_b=mlp2_b,
        centers=0.1 * jax.random.normal(ks[4], (H, S, hd), jnp.float32),
        entry_points=0.2 * jax.random.normal(ks[5], (H, S, E, hd), jnp.float32),
        # spread so some entries fall below the sigmoid(strength) > 0.1 gate
        entry_strengths=2.0 * jax.random.normal(ks[6], (H, S, E), jnp.float32),
        outer_radius=1.0 + 0.1 * jax.random.uniform(ks[7], (H, S), jnp.float32),
        # hole radii spanning both torus-surface-distance branches
        hole_radius=jax.random.uniform(ks[8], (H, S), jnp.float32, 0.01, 0.35),
        amplitude=1.0 + 0.1 * jax.random.normal(ks[9], (H, S), jnp.float32),
    )


# ---------------------------------------------------------------------------
# Pure-JAX reference (mirrors the PyTorch module) for a correctness check.
# ---------------------------------------------------------------------------
def reference_forward(x, p, n_heads):
    B, T, D = x.shape
    hd = D // n_heads
    S = p['centers'].shape[1]
    E = p['entry_points'].shape[2]

    def ln(z, w, b):
        mu = jnp.mean(z, -1, keepdims=True)
        var = jnp.mean((z - mu) ** 2, -1, keepdims=True)
        return (z - mu) / jnp.sqrt(var + LN_EPS) * w.reshape(-1) + b.reshape(-1)

    h1 = ln(x, p['ln1_w'], p['ln1_b'])
    qkv = h1 @ p['qkv_w'] + p['qkv_b'].reshape(-1)
    q, k, v = jnp.split(qkv, 3, axis=-1)

    def split_heads(z):
        return z.reshape(B, T, n_heads, hd).transpose(0, 2, 1, 3)

    q, k, v = split_heads(q), split_heads(k), split_heads(v)
    q = ln(q, p['head_ln_w'], p['head_ln_b'])
    k = ln(k, p['head_ln_w'], p['head_ln_b'])

    sig = jax.nn.sigmoid(p['entry_strengths'])
    w_eff = jnp.where(sig > 0.1, sig, 0.0)

    heads_out = []
    for h in range(n_heads):
        att = jnp.zeros((B, T, T), jnp.float32)
        for s in range(S):
            cen = p['centers'][h, s]
            outer_r = jnp.abs(p['outer_radius'][h, s]) + 1e-8
            hole_r = jnp.abs(p['hole_radius'][h, s])

            def sdist(d):
                major = jnp.abs(d - outer_r)
                torus = jnp.sqrt(major ** 2 + hole_r ** 2)
                return jnp.where(hole_r / outer_r < 0.1, major,
                                 jnp.abs(torus - hole_r))

            qs = sdist(jnp.linalg.norm(q[:, h] - cen, axis=-1))[:, :, None]
            ks = sdist(jnp.linalg.norm(k[:, h] - cen, axis=-1))[:, None, :]
            surface = jnp.exp(-0.5 * (qs ** 2 + ks ** 2))
            entry = jnp.zeros_like(surface)
            for e in range(E):
                ep = p['entry_points'][h, s, e]
                qe = jnp.exp(-0.5 * jnp.sum((q[:, h] - ep) ** 2, -1))[:, :, None]
                ke = jnp.exp(-0.5 * jnp.sum((k[:, h] - ep) ** 2, -1))[:, None, :]
                entry = entry + w_eff[h, s, e] * qe * ke
            att = att + p['amplitude'][h, s] * (surface + entry) / float(S)
        pm = jax.nn.softmax(att, axis=-1)
        heads_out.append(jnp.einsum('bqk,bkd->bqd', pm, v[:, h]))

    attn_out = jnp.stack(heads_out, axis=2).reshape(B, T, D)
    attn_out = attn_out @ p['out_w'] + p['out_b'].reshape(-1)
    x1 = x + attn_out
    h2 = ln(x1, p['ln2_w'], p['ln2_b'])
    m = jax.nn.gelu(h2 @ p['mlp1_w'] + p['mlp1_b'].reshape(-1), approximate=False)
    return x1 + (m @ p['mlp2_w'] + p['mlp2_b'].reshape(-1))


if __name__ == "__main__":
    # small config consistent with the module: dim=32, n_heads=4 -> head_dim=8,
    # n_splats_per_head=2, n_entries=4 (hard-coded in the splat), B=2, T=16.
    # attn_tq=8 exercises the per-batch key-feature hoist across query tiles.
    B, T, D = 2, 16, 32
    n_heads, n_splats, n_entries = 4, 2, 4

    key = jax.random.PRNGKey(0)
    kp, kx = jax.random.split(key)
    params = init_params(kp, D, n_heads, n_splats, n_entries)
    x = jax.random.normal(kx, (B, T, D), jnp.float32)

    fwd = jax.jit(functools.partial(transformer_block_forward,
                                    n_heads=n_heads, attn_tq=8))
    out = jax.block_until_ready(fwd(x, params))

    assert out.shape == (B, T, D)
    assert bool(jnp.all(jnp.isfinite(out)))

    ref = reference_forward(x, params, n_heads)
    assert bool(jnp.allclose(out, ref, atol=2e-3, rtol=2e-3)), (
        float(jnp.max(jnp.abs(out - ref))))

    # extra check: exercise the multi-N-tile hoisted-LN path of ln_linear
    k1, k2, k3 = jax.random.split(jax.random.PRNGKey(1), 3)
    xt = jax.random.normal(k1, (16, 32), jnp.float32)
    wt = 0.1 * jax.random.normal(k2, (32, 256), jnp.float32)
    bt = 0.1 * jax.random.normal(k3, (1, 256), jnp.float32)
    lwt = 1.3 * jnp.ones((1, 32), jnp.float32)
    lbt = jnp.full((1, 32), 0.1, jnp.float32)
    yt = jax.block_until_ready(ln_linear(xt, lwt, lbt, wt, bt, gelu=True,
                                         tm=8, tn=128))
    mu = jnp.mean(xt, -1, keepdims=True)
    var = jnp.mean((xt - mu) ** 2, -1, keepdims=True)
    xn = (xt - mu) / jnp.sqrt(var + LN_EPS) * lwt + lbt
    yr = jax.nn.gelu(xn @ wt + bt, approximate=False)
    assert bool(jnp.allclose(yt, yr, atol=2e-3, rtol=2e-3)), (
        float(jnp.max(jnp.abs(yt - yr))))

    print("KERNEL_OK")
</pallas_src>

<mosaic_0001>
module attributes {stable_mosaic.version = 11 : i64} {
  func.func @_ln_qkv_kernel(%arg0: i32, %arg1: memref<32x32xf32, #tpu.memory_space<vmem>>, %arg2: memref<1x32xf32, #tpu.memory_space<vmem>>, %arg3: memref<1x32xf32, #tpu.memory_space<vmem>>, %arg4: memref<32x96xf32, #tpu.memory_space<vmem>>, %arg5: memref<1x96xf32, #tpu.memory_space<vmem>>, %arg6: memref<3x32x32xf32, #tpu.memory_space<vmem>>) attributes {dimension_semantics = [#tpu.dimension_semantics<parallel>], iteration_bounds = array<i64: 1>, scalar_prefetch = 0 : i64, scratch_operands = 0 : i64, tpu.core_type = #tpu.core_type<tc>, window_params = [{transform_indices = @transform_0, window_bounds = array<i64: 32, 32>}, {pipeline_mode = #tpu.pipeline_mode<synchronous>, transform_indices = @transform_1, window_bounds = array<i64: 1, 32>}, {pipeline_mode = #tpu.pipeline_mode<synchronous>, transform_indices = @transform_2, window_bounds = array<i64: 1, 32>}, {pipeline_mode = #tpu.pipeline_mode<synchronous>, transform_indices = @transform_3, window_bounds = array<i64: 32, 96>}, {pipeline_mode = #tpu.pipeline_mode<synchronous>, transform_indices = @transform_4, window_bounds = array<i64: 1, 96>}, {transform_indices = @transform_5, window_bounds = array<i64: 3, 32, 32>}]} {
    %c0 = arith.constant 0 : index
    %c0_0 = arith.constant 0 : index
    %0 = vector.load %arg1[%c0, %c0_0] : memref<32x32xf32, #tpu.memory_space<vmem>>, vector<32x32xf32>
    %cst = arith.constant dense<0.000000e+00> : vector<32xf32>
    %1 = vector.multi_reduction <add>, %0, %cst [1] : vector<32x32xf32> to vector<32xf32>
    %2 = vector.shape_cast %1 : vector<32xf32> to vector<32x1xf32>
    %cst_1 = arith.constant 3.200000e+01 : f32
    %3 = vector.broadcast %cst_1 : f32 to vector<32x1xf32>
    %4 = arith.divf %2, %3 : vector<32x1xf32>
    %5 = vector.broadcast %4 : vector<32x1xf32> to vector<32x32xf32>
    %6 = arith.subf %0, %5 : vector<32x32xf32>
    %7 = arith.mulf %6, %6 : vector<32x32xf32>
    %cst_2 = arith.constant dense<0.000000e+00> : vector<32xf32>
    %8 = vector.multi_reduction <add>, %7, %cst_2 [1] : vector<32x32xf32> to vector<32xf32>
    %9 = vector.shape_cast %8 : vector<32xf32> to vector<32x1xf32>
    %cst_3 = arith.constant 3.200000e+01 : f32
    %10 = vector.broadcast %cst_3 : f32 to vector<32x1xf32>
    %11 = arith.divf %9, %10 : vector<32x1xf32>
    %12 = vector.broadcast %4 : vector<32x1xf32> to vector<32x32xf32>
    %13 = arith.subf %0, %12 : vector<32x32xf32>
    %cst_4 = arith.constant 9.99999974E-6 : f32
    %14 = vector.broadcast %cst_4 : f32 to vector<32x1xf32>
    %15 = arith.addf %11, %14 : vector<32x1xf32>
    %16 = math.rsqrt %15 : vector<32x1xf32>
    %17 = vector.broadcast %16 : vector<32x1xf32> to vector<32x32xf32>
    %18 = arith.mulf %13, %17 : vector<32x32xf32>
    %c0_5 = arith.constant 0 : index
    %c0_6 = arith.constant 0 : index
    %19 = vector.load %arg2[%c0_5, %c0_6] : memref<1x32xf32, #tpu.memory_space<vmem>>, vector<1x32xf32>
    %20 = vector.broadcast %19 : vector<1x32xf32> to vector<32x32xf32>
    %21 = arith.mulf %18, %20 : vector<32x32xf32>
    %c0_7 = arith.constant 0 : index
    %c0_8 = arith.constant 0 : index
    %22 = vector.load %arg3[%c0_7, %c0_8] : memref<1x32xf32, #tpu.memory_space<vmem>>, vector<1x32xf32>
    %23 = vector.broadcast %22 : vector<1x32xf32> to vector<32x32xf32>
    %24 = arith.addf %21, %23 : vector<32x32xf32>
    %c0_9 = arith.constant 0 : index
    %c0_10 = arith.constant 0 : index
    %25 = vector.load %arg4[%c0_9, %c0_10] : memref<32x96xf32, #tpu.memory_space<vmem>>, vector<32x96xf32>
    %cst_11 = arith.constant dense<0.000000e+00> : vector<32x96xf32>
    %26 = tpu.matmul %24, %25, %cst_11 {dimension_numbers = #tpu.dot_dimension_numbers<[1], [0], [0], [1], [0, 0, 1, 1], [], []>} : vector<32x32xf32>, vector<32x96xf32>, vector<32x96xf32> -> vector<32x96xf32>
    %c0_12 = arith.constant 0 : index
    %c0_13 = arith.constant 0 : index
    %27 = vector.load %arg5[%c0_12, %c0_13] : memref<1x96xf32, #tpu.memory_space<vmem>>, vector<1x96xf32>
    %28 = vector.broadcast %27 : vector<1x96xf32> to vector<32x96xf32>
    %29 = arith.addf %26, %28 : vector<32x96xf32>
    %30 = vector.extract_strided_slice %29 {offsets = [0, 0], sizes = [32, 32], strides = [1, 1]} : vector<32x96xf32> to vector<32x32xf32>
    %c0_14 = arith.constant 0 : index
    %c0_15 = arith.constant 0 : index
    %c0_16 = arith.constant 0 : index
    %31 = vector.load %arg6[%c0_14, %c0_15, %c0_16] : memref<3x32x32xf32, #tpu.memory_space<vmem>>, vector<1x32x32xf32>
    %32 = vector.shape_cast %31 : vector<1x32x32xf32> to vector<32x32xf32>
    %33 = vector.shape_cast %30 : vector<32x32xf32> to vector<1x32x32xf32>
    tpu.vector_store %arg6[%c0_14, %c0_15, %c0_16], %33 {strides = array<i32>} : memref<3x32x32xf32, #tpu.memory_space<vmem>>, vector<1x32x32xf32>,
    %34 = vector.extract_strided_slice %29 {offsets = [0, 32], sizes = [32, 32], strides = [1, 1]} : vector<32x96xf32> to vector<32x32xf32>
    %c1 = arith.constant 1 : index
    %c0_17 = arith.constant 0 : index
    %c0_18 = arith.constant 0 : index
    %35 = vector.load %arg6[%c1, %c0_17, %c0_18] : memref<3x32x32xf32, #tpu.memory_space<vmem>>, vector<1x32x32xf32>
    %36 = vector.shape_cast %35 : vector<1x32x32xf32> to vector<32x32xf32>
    %37 = vector.shape_cast %34 : vector<32x32xf32> to vector<1x32x32xf32>
    tpu.vector_store %arg6[%c1, %c0_17, %c0_18], %37 {strides = array<i32>} : memref<3x32x32xf32, #tpu.memory_space<vmem>>, vector<1x32x32xf32>,
    %38 = vector.extract_strided_slice %29 {offsets = [0, 64], sizes = [32, 32], strides = [1, 1]} : vector<32x96xf32> to vector<32x32xf32>
    %c2 = arith.constant 2 : index
    %c0_19 = arith.constant 0 : index
    %c0_20 = arith.constant 0 : index
    %39 = vector.load %arg6[%c2, %c0_19, %c0_20] : memref<3x32x32xf32, #tpu.memory_space<vmem>>, vector<1x32x32xf32>
    %40 = vector.shape_cast %39 : vector<1x32x32xf32> to vector<32x32xf32>
    %41 = vector.shape_cast %38 : vector<32x32xf32> to vector<1x32x32xf32>
    tpu.vector_store %arg6[%c2, %c0_19, %c0_20], %41 {strides = array<i32>} : memref<3x32x32xf32, #tpu.memory_space<vmem>>, vector<1x32x32xf32>,
    return
  }
  func.func @transform_0(%arg0: i32) -> (i32, i32) {
    %c0_i32 = arith.constant 0 : i32
    %c0_i32_0 = arith.constant 0 : i32
    return %arg0, %c0_i32 : i32, i32
  }
  func.func @transform_1(%arg0: i32) -> (i32, i32) {
    %c0_i32 = arith.constant 0 : i32
    %c0_i32_0 = arith.constant 0 : i32
    %c0_i32_1 = arith.constant 0 : i32
    return %c0_i32, %c0_i32_0 : i32, i32
  }
  func.func @transform_2(%arg0: i32) -> (i32, i32) {
    %c0_i32 = arith.constant 0 : i32
    %c0_i32_0 = arith.constant 0 : i32
    %c0_i32_1 = arith.constant 0 : i32
    return %c0_i32, %c0_i32_0 : i32, i32
  }
  func.func @transform_3(%arg0: i32) -> (i32, i32) {
    %c0_i32 = arith.constant 0 : i32
    %c0_i32_0 = arith.constant 0 : i32
    %c0_i32_1 = arith.constant 0 : i32
    return %c0_i32, %c0_i32_0 : i32, i32
  }
  func.func @transform_4(%arg0: i32) -> (i32, i32) {
    %c0_i32 = arith.constant 0 : i32
    %c0_i32_0 = arith.constant 0 : i32
    %c0_i32_1 = arith.constant 0 : i32
    return %c0_i32, %c0_i32_0 : i32, i32
  }
  func.func @transform_5(%arg0: i32) -> (i32, i32, i32) {
    %c0_i32 = arith.constant 0 : i32
    %c0_i32_0 = arith.constant 0 : i32
    %c0_i32_1 = arith.constant 0 : i32
    return %c0_i32, %arg0, %c0_i32_0 : i32, i32, i32
  }
}

module attributes {stable_mosaic.version = 11 : i64} {
  func.func @_linear_kernel(%arg0: i32, %arg1: i32, %arg2: i32, %arg3: memref<32x32xf32, #tpu.memory_space<vmem>>, %arg4: memref<32x32xf32, #tpu.memory_space<vmem>>, %arg5: memref<1x32xf32, #tpu.memory_space<vmem>>, %arg6: memref<32x32xf32, #tpu.memory_space<vmem>>, %arg7: memref<32x32xf32, #tpu.memory_space<vmem>>, %arg8: memref<32x32xf32, #tpu.memory_space<vmem>>) attributes {dimension_semantics = [#tpu.dimension_semantics<parallel>, #tpu.dimension_semantics<parallel>, #tpu.dimension_semantics<arbitrary>], iteration_bounds = array<i64: 1, 1, 1>, scalar_prefetch = 0 : i64, scratch_operands = 1 : i64, tpu.core_type = #tpu.core_type<tc>, window_params = [{transform_indices = @transform_0, window_bounds = array<i64: 32, 32>}, {transform_indices = @transform_1, window_bounds = array<i64: 32, 32>}, {transform_indices = @transform_2, window_bounds = array<i64: 1, 32>}, {transform_indices = @transform_3, window_bounds = array<i64: 32, 32>}, {transform_indices = @transform_4, window_bounds = array<i64: 32, 32>}]} {
    %c0_i32 = arith.constant 0 : i32
    %0 = arith.cmpi eq, %arg2, %c0_i32 : i32
    %1 = arith.extui %0 : i1 to i32
    %c0_i32_0 = arith.constant 0 : i32
    %2 = arith.cmpi ne, %1, %c0_i32_0 : i32
    scf.if %2 {
      %cst_10 = arith.constant 0.000000e+00 : f32
      %12 = vector.broadcast %cst_10 : f32 to vector<32x32xf32>
      %c0_11 = arith.constant 0 : index
      %c0_12 = arith.constant 0 : index
      %13 = vector.load %arg8[%c0_11, %c0_12] : memref<32x32xf32, #tpu.memory_space<vmem>>, vector<32x32xf32>
      tpu.vector_store %arg8[%c0_11, %c0_12], %12 {strides = array<i32>} : memref<32x32xf32, #tpu.memory_space<vmem>>, vector<32x32xf32>,
    } else {
    }
    %c0 = arith.constant 0 : index
    %c0_1 = arith.constant 0 : index
    %3 = vector.load %arg8[%c0, %c0_1] : memref<32x32xf32, #tpu.memory_space<vmem>>, vector<32x32xf32>
    %c0_2 = arith.constant 0 : index
    %c0_3 = arith.constant 0 : index
    %4 = vector.load %arg3[%c0_2, %c0_3] : memref<32x32xf32, #tpu.memory_space<vmem>>, vector<32x32xf32>
    %c0_4 = arith.constant 0 : index
    %c0_5 = arith.constant 0 : index
    %5 = vector.load %arg4[%c0_4, %c0_5] : memref<32x32xf32, #tpu.memory_space<vmem>>, vector<32x32xf32>
    %cst = arith.constant dense<0.000000e+00> : vector<32x32xf32>
    %6 = tpu.matmul %4, %5, %cst {dimension_numbers = #tpu.dot_dimension_numbers<[1], [0], [0], [1], [0, 0, 1, 1], [], []>} : vector<32x32xf32>, vector<32x32xf32>, vector<32x32xf32> -> vector<32x32xf32>
    %7 = arith.addf %3, %6 : vector<32x32xf32>
    %c0_6 = arith.constant 0 : index
    %c0_7 = arith.constant 0 : index
    %8 = vector.load %arg8[%c0_6, %c0_7] : memref<32x32xf32, #tpu.memory_space<vmem>>, vector<32x32xf32>
    tpu.vector_store %arg8[%c0_6, %c0_7], %7 {strides = array<i32>} : memref<32x32xf32, #tpu.memory_space<vmem>>, vector<32x32xf32>,
    %c0_i32_8 = arith.constant 0 : i32
    %9 = arith.cmpi eq, %arg2, %c0_i32_8 : i32
    %10 = arith.extui %9 : i1 to i32
    %c0_i32_9 = arith.constant 0 : i32
    %11 = arith.cmpi ne, %10, %c0_i32_9 : i32
    scf.if %11 {
      %c0_10 = arith.constant 0 : index
      %c0_11 = arith.constant 0 : index
      %12 = vector.load %arg8[%c0_10, %c0_11] : memref<32x32xf32, #tpu.memory_space<vmem>>, vector<32x32xf32>
      %c0_12 = arith.constant 0 : index
      %c0_13 = arith.constant 0 : index
      %13 = vector.load %arg5[%c0_12, %c0_13] : memref<1x32xf32, #tpu.memory_space<vmem>>, vector<1x32xf32>
      %14 = vector.broadcast %13 : vector<1x32xf32> to vector<32x32xf32>
      %15 = arith.addf %12, %14 : vector<32x32xf32>
      %c0_14 = arith.constant 0 : index
      %c0_15 = arith.constant 0 : index
      %16 = vector.load %arg6[%c0_14, %c0_15] : memref<32x32xf32, #tpu.memory_space<vmem>>, vector<32x32xf32>
      %17 = arith.addf %15, %16 : vector<32x32xf32>
      %c0_16 = arith.constant 0 : index
      %c0_17 = arith.constant 0 : index
      %18 = vector.load %arg7[%c0_16, %c0_17] : memref<32x32xf32, #tpu.memory_space<vmem>>, vector<32x32xf32>
      tpu.vector_store %arg7[%c0_16, %c0_17], %17 {strides = array<i32>} : memref<32x32xf32, #tpu.memory_space<vmem>>, vector<32x32xf32>,
    } else {
    }
    return
  }
  func.func @transform_0(%arg0: i32, %arg1: i32, %arg2: i32) -> (i32, i32) {
    %c0_i32 = arith.constant 0 : i32
    return %arg0, %arg2 : i32, i32
  }
  func.func @transform_1(%arg0: i32, %arg1: i32, %arg2: i32) -> (i32, i32) {
    %c0_i32 = arith.constant 0 : i32
    return %arg2, %arg1 : i32, i32
  }
  func.func @transform_2(%arg0: i32, %arg1: i32, %arg2: i32) -> (i32, i32) {
    %c0_i32 = arith.constant 0 : i32
    %c0_i32_0 = arith.constant 0 : i32
    return %c0_i32, %arg1 : i32, i32
  }
  func.func @transform_3(%arg0: i32, %arg1: i32, %arg2: i32) -> (i32, i32) {
    %c0_i32 = arith.constant 0 : i32
    return %arg0, %arg1 : i32, i32
  }
  func.func @transform_4(%arg0: i32, %arg1: i32, %arg2: i32) -> (i32, i32) {
    %c0_i32 = arith.constant 0 : i32
    return %arg0, %arg1 : i32, i32
  }
}

module attributes {stable_mosaic.version = 11 : i64} {
  func.func @_ln_linear_kernel(%arg0: i32, %arg1: i32, %arg2: memref<32x32xf32, #tpu.memory_space<vmem>>, %arg3: memref<1x32xf32, #tpu.memory_space<vmem>>, %arg4: memref<1x32xf32, #tpu.memory_space<vmem>>, %arg5: memref<32x128xf32, #tpu.memory_space<vmem>>, %arg6: memref<1x128xf32, #tpu.memory_space<vmem>>, %arg7: memref<32x128xf32, #tpu.memory_space<vmem>>, %arg8: memref<32x32xf32, #tpu.memory_space<vmem>>) attributes {dimension_semantics = [#tpu.dimension_semantics<parallel>, #tpu.dimension_semantics<arbitrary>], iteration_bounds = array<i64: 1, 1>, scalar_prefetch = 0 : i64, scratch_operands = 1 : i64, tpu.core_type = #tpu.core_type<tc>, window_params = [{transform_indices = @transform_0, window_bounds = array<i64: 32, 32>}, {pipeline_mode = #tpu.pipeline_mode<synchronous>, transform_indices = @transform_1, window_bounds = array<i64: 1, 32>}, {pipeline_mode = #tpu.pipeline_mode<synchronous>, transform_indices = @transform_2, window_bounds = array<i64: 1, 32>}, {transform_indices = @transform_3, window_bounds = array<i64: 32, 128>}, {transform_indices = @transform_4, window_bounds = array<i64: 1, 128>}, {transform_indices = @transform_5, window_bounds = array<i64: 32, 128>}]} {
    %c0_i32 = arith.constant 0 : i32
    %0 = arith.cmpi eq, %arg1, %c0_i32 : i32
    %1 = arith.extui %0 : i1 to i32
    %c0_i32_0 = arith.constant 0 : i32
    %2 = arith.cmpi ne, %1, %c0_i32_0 : i32
    scf.if %2 {
      %c0_11 = arith.constant 0 : index
      %c0_12 = arith.constant 0 : index
      %18 = vector.load %arg2[%c0_11, %c0_12] : memref<32x32xf32, #tpu.memory_space<vmem>>, vector<32x32xf32>
      %cst_13 = arith.constant dense<0.000000e+00> : vector<32xf32>
      %19 = vector.multi_reduction <add>, %18, %cst_13 [1] : vector<32x32xf32> to vector<32xf32>
      %20 = vector.shape_cast %19 : vector<32xf32> to vector<32x1xf32>
      %cst_14 = arith.constant 3.200000e+01 : f32
      %21 = vector.broadcast %cst_14 : f32 to vector<32x1xf32>
      %22 = arith.divf %20, %21 : vector<32x1xf32>
      %23 = vector.broadcast %22 : vector<32x1xf32> to vector<32x32xf32>
      %24 = arith.subf %18, %23 : vector<32x32xf32>
      %25 = arith.mulf %24, %24 : vector<32x32xf32>
      %cst_15 = arith.constant dense<0.000000e+00> : vector<32xf32>
      %26 = vector.multi_reduction <add>, %25, %cst_15 [1] : vector<32x32xf32> to vector<32xf32>
      %27 = vector.shape_cast %26 : vector<32xf32> to vector<32x1xf32>
      %cst_16 = arith.constant 3.200000e+01 : f32
      %28 = vector.broadcast %cst_16 : f32 to vector<32x1xf32>
      %29 = arith.divf %27, %28 : vector<32x1xf32>
      %30 = vector.broadcast %22 : vector<32x1xf32> to vector<32x32xf32>
      %31 = arith.subf %18, %30 : vector<32x32xf32>
      %cst_17 = arith.constant 9.99999974E-6 : f32
      %32 = vector.broadcast %cst_17 : f32 to vector<32x1xf32>
      %33 = arith.addf %29, %32 : vector<32x1xf32>
      %34 = math.rsqrt %33 : vector<32x1xf32>
      %35 = vector.broadcast %34 : vector<32x1xf32> to vector<32x32xf32>
      %36 = arith.mulf %31, %35 : vector<32x32xf32>
      %c0_18 = arith.constant 0 : index
      %c0_19 = arith.constant 0 : index
      %37 = vector.load %arg3[%c0_18, %c0_19] : memref<1x32xf32, #tpu.memory_space<vmem>>, vector<1x32xf32>
      %38 = vector.broadcast %37 : vector<1x32xf32> to vector<32x32xf32>
      %39 = arith.mulf %36, %38 : vector<32x32xf32>
      %c0_20 = arith.constant 0 : index
      %c0_21 = arith.constant 0 : index
      %40 = vector.load %arg4[%c0_20, %c0_21] : memref<1x32xf32, #tpu.memory_space<vmem>>, vector<1x32xf32>
      %41 = vector.broadcast %40 : vector<1x32xf32> to vector<32x32xf32>
      %42 = arith.addf %39, %41 : vector<32x32xf32>
      %c0_22 = arith.constant 0 : index
      %c0_23 = arith.constant 0 : index
      %43 = vector.load %arg8[%c0_22, %c0_23] : memref<32x32xf32, #tpu.memory_space<vmem>>, vector<32x32xf32>
      tpu.vector_store %arg8[%c0_22, %c0_23], %42 {strides = array<i32>} : memref<32x32xf32, #tpu.memory_space<vmem>>, vector<32x32xf32>,
    } else {
    }
    %c0 = arith.constant 0 : index
    %c0_1 = arith.constant 0 : index
    %3 = vector.load %arg8[%c0, %c0_1] : memref<32x32xf32, #tpu.memory_space<vmem>>, vector<32x32xf32>
    %c0_2 = arith.constant 0 : index
    %c0_3 = arith.constant 0 : index
    %4 = vector.load %arg5[%c0_2, %c0_3] : memref<32x128xf32, #tpu.memory_space<vmem>>, vector<32x128xf32>
    %cst = arith.constant dense<0.000000e+00> : vector<32x128xf32>
    %5 = tpu.matmul %3, %4, %cst {dimension_numbers = #tpu.dot_dimension_numbers<[1], [0], [0], [1], [0, 0, 1, 1], [], []>} : vector<32x32xf32>, vector<32x128xf32>, vector<32x128xf32> -> vector<32x128xf32>
    %c0_4 = arith.constant 0 : index
    %c0_5 = arith.constant 0 : index
    %6 = vector.load %arg6[%c0_4, %c0_5] : memref<1x128xf32, #tpu.memory_space<vmem>>, vector<1x128xf32>
    %7 = vector.broadcast %6 : vector<1x128xf32> to vector<32x128xf32>
    %8 = arith.addf %5, %7 : vector<32x128xf32>
    %cst_6 = arith.constant 5.000000e-01 : f32
    %9 = vector.broadcast %cst_6 : f32 to vector<32x128xf32>
    %10 = arith.mulf %9, %8 : vector<32x128xf32>
    %cst_7 = arith.constant 0.707106769 : f32
    %11 = vector.broadcast %cst_7 : f32 to vector<32x128xf32>
    %12 = arith.mulf %8, %11 : vector<32x128xf32>
    %13 = math.erf %12 : vector<32x128xf32>
    %cst_8 = arith.constant 1.000000e+00 : f32
    %14 = vector.broadcast %cst_8 : f32 to vector<32x128xf32>
    %15 = arith.addf %14, %13 : vector<32x128xf32>
    %16 = arith.mulf %10, %15 : vector<32x128xf32>
    %c0_9 = arith.constant 0 : index
    %c0_10 = arith.constant 0 : index
    %17 = vector.load %arg7[%c0_9, %c0_10] : memref<32x128xf32, #tpu.memory_space<vmem>>, vector<32x128xf32>
    tpu.vector_store %arg7[%c0_9, %c0_10], %16 {strides = array<i32>} : memref<32x128xf32, #tpu.memory_space<vmem>>, vector<32x128xf32>,
    return
  }
  func.func @transform_0(%arg0: i32, %arg1: i32) -> (i32, i32) {
    %c0_i32 = arith.constant 0 : i32
    %c0_i32_0 = arith.constant 0 : i32
    return %arg0, %c0_i32 : i32, i32
  }
  func.func @transform_1(%arg0: i32, %arg1: i32) -> (i32, i32) {
    %c0_i32 = arith.constant 0 : i32
    %c0_i32_0 = arith.constant 0 : i32
    %c0_i32_1 = arith.constant 0 : i32
    return %c0_i32, %c0_i32_0 : i32, i32
  }
  func.func @transform_2(%arg0: i32, %arg1: i32) -> (i32, i32) {
    %c0_i32 = arith.constant 0 : i32
    %c0_i32_0 = arith.constant 0 : i32
    %c0_i32_1 = arith.constant 0 : i32
    return %c0_i32, %c0_i32_0 : i32, i32
  }
  func.func @transform_3(%arg0: i32, %arg1: i32) -> (i32, i32) {
    %c0_i32 = arith.constant 0 : i32
    %c0_i32_0 = arith.constant 0 : i32
    return %c0_i32, %arg1 : i32, i32
  }
  func.func @transform_4(%arg0: i32, %arg1: i32) -> (i32, i32) {
    %c0_i32 = arith.constant 0 : i32
    %c0_i32_0 = arith.constant 0 : i32
    return %c0_i32, %arg1 : i32, i32
  }
  func.func @transform_5(%arg0: i32, %arg1: i32) -> (i32, i32) {
    %c0_i32 = arith.constant 0 : i32
    return %arg0, %arg1 : i32, i32
  }
}

module attributes {stable_mosaic.version = 11 : i64} {
  func.func @_hyper_attn_kernel(%arg0: i32, %arg1: i32, %arg2: memref<1x1x8x32xf32, #tpu.memory_space<vmem>>, %arg3: memref<1x1x16x32xf32, #tpu.memory_space<vmem>>, %arg4: memref<1x1x16x32xf32, #tpu.memory_space<vmem>>, %arg5: memref<32x4xf32, #tpu.memory_space<vmem>>, %arg6: memref<4x32xf32, #tpu.memory_space<vmem>>, %arg7: memref<2x32xf32, #tpu.memory_space<vmem>>, %arg8: memref<4x40xf32, #tpu.memory_space<vmem>>, %arg9: memref<32x40xf32, #tpu.memory_space<vmem>>, %arg10: memref<6x40xf32, #tpu.memory_space<vmem>>, %arg11: memref<1x8x32xf32, #tpu.memory_space<vmem>>, %arg12: memref<16x40xf32, #tpu.memory_space<vmem>>) attributes {dimension_semantics = [#tpu.dimension_semantics<parallel>, #tpu.dimension_semantics<arbitrary>], iteration_bounds = array<i64: 2, 2>, scalar_prefetch = 0 : i64, scratch_operands = 1 : i64, tpu.core_type = #tpu.core_type<tc>, window_params = [{transform_indices = @transform_0, window_bounds = array<i64: 1, 1, 8, 32>}, {transform_indices = @transform_1, window_bounds = array<i64: 1, 1, 16, 32>}, {transform_indices = @transform_2, window_bounds = array<i64: 1, 1, 16, 32>}, {pipeline_mode = #tpu.pipeline_mode<synchronous>, transform_indices = @transform_3, window_bounds = array<i64: 32, 4>}, {pipeline_mode = #tpu.pipeline_mode<synchronous>, transform_indices = @transform_4, window_bounds = array<i64: 4, 32>}, {pipeline_mode = #tpu.pipeline_mode<synchronous>, transform_indices = @transform_5, window_bounds = array<i64: 2, 32>}, {pipeline_mode = #tpu.pipeline_mode<synchronous>, transform_indices = @transform_6, window_bounds = array<i64: 4, 40>}, {pipeline_mode = #tpu.pipeline_mode<synchronous>, transform_indices = @transform_7, window_bounds = array<i64: 32, 40>}, {pipeline_mode = #tpu.pipeline_mode<synchronous>, transform_indices = @transform_8, window_bounds = array<i64: 6, 40>}, {transform_indices = @transform_9, window_bounds = array<i64: 1, 8, 32>}]} {
    %c0 = arith.constant 0 : index
    %c0_0 = arith.constant 0 : index
    %0 = vector.load %arg5[%c0, %c0_0] : memref<32x4xf32, #tpu.memory_space<vmem>>, vector<32x4xf32>
    %c0_1 = arith.constant 0 : index
    %c0_2 = arith.constant 0 : index
    %1 = vector.load %arg6[%c0_1, %c0_2] : memref<4x32xf32, #tpu.memory_space<vmem>>, vector<4x32xf32>
    %c0_3 = arith.constant 0 : index
    %c0_4 = arith.constant 0 : index
    %2 = vector.load %arg7[%c0_3, %c0_4] : memref<2x32xf32, #tpu.memory_space<vmem>>, vector<2x32xf32>
    %3 = vector.extract_strided_slice %2 {offsets = [0, 0], sizes = [1, 32], strides = [1, 1]} : vector<2x32xf32> to vector<1x32xf32>
    %4 = vector.extract_strided_slice %2 {offsets = [1, 0], sizes = [1, 32], strides = [1, 1]} : vector<2x32xf32> to vector<1x32xf32>
    %c0_5 = arith.constant 0 : index
    %c0_6 = arith.constant 0 : index
    %5 = vector.load %arg8[%c0_5, %c0_6] : memref<4x40xf32, #tpu.memory_space<vmem>>, vector<4x40xf32>
    %c0_7 = arith.constant 0 : index
    %c0_8 = arith.constant 0 : index
    %6 = vector.load %arg9[%c0_7, %c0_8] : memref<32x40xf32, #tpu.memory_space<vmem>>, vector<32x40xf32>
    %c0_9 = arith.constant 0 : index
    %c0_10 = arith.constant 0 : index
    %7 = vector.load %arg10[%c0_9, %c0_10] : memref<6x40xf32, #tpu.memory_space<vmem>>, vector<6x40xf32>
    %8 = vector.extract_strided_slice %7 {offsets = [0, 0], sizes = [1, 40], strides = [1, 1]} : vector<6x40xf32> to vector<1x40xf32>
    %9 = vector.extract_strided_slice %7 {offsets = [1, 0], sizes = [1, 40], strides = [1, 1]} : vector<6x40xf32> to vector<1x40xf32>
    %10 = vector.extract_strided_slice %7 {offsets = [2, 0], sizes = [1, 40], strides = [1, 1]} : vector<6x40xf32> to vector<1x40xf32>
    %11 = vector.extract_strided_slice %7 {offsets = [3, 0], sizes = [1, 40], strides = [1, 1]} : vector<6x40xf32> to vector<1x40xf32>
    %12 = vector.extract_strided_slice %7 {offsets = [4, 0], sizes = [1, 40], strides = [1, 1]} : vector<6x40xf32> to vector<1x40xf32>
    %cst = arith.constant 5.000000e-01 : f32
    %13 = vector.broadcast %cst : f32 to vector<1x40xf32>
    %14 = arith.cmpf ogt, %12, %13 : vector<1x40xf32>
    %15 = vector.extract_strided_slice %7 {offsets = [5, 0], sizes = [1, 40], strides = [1, 1]} : vector<6x40xf32> to vector<1x40xf32>
    %cst_11 = arith.constant 5.000000e-01 : f32
    %16 = vector.broadcast %cst_11 : f32 to vector<1x40xf32>
    %17 = arith.cmpf ogt, %15, %16 : vector<1x40xf32>
    %c0_i32 = arith.constant 0 : i32
    %18 = arith.cmpi eq, %arg1, %c0_i32 : i32
    %19 = arith.extui %18 : i1 to i32
    %c0_i32_12 = arith.constant 0 : i32
    %20 = arith.cmpi ne, %19, %c0_i32_12 : i32
    scf.if %20 {
      %c0_65 = arith.constant 0 : index
      %c0_66 = arith.constant 0 : index
      %c0_67 = arith.constant 0 : index
      %c0_68 = arith.constant 0 : index
      %169 = vector.load %arg3[%c0_65, %c0_66, %c0_67, %c0_68] : memref<1x1x16x32xf32, #tpu.memory_space<vmem>>, vector<1x1x16x32xf32>
      %170 = vector.shape_cast %169 : vector<1x1x16x32xf32> to vector<16x32xf32>
      %cst_69 = arith.constant dense<0.000000e+00> : vector<16x4xf32>
      %171 = tpu.matmul %170, %0, %cst_69 {dimension_numbers = #tpu.dot_dimension_numbers<[1], [0], [0], [1], [0, 0, 1, 1], [], []>} : vector<16x32xf32>, vector<32x4xf32>, vector<16x4xf32> -> vector<16x4xf32>
      %172 = arith.mulf %170, %170 : vector<16x32xf32>
      %cst_70 = arith.constant dense<0.000000e+00> : vector<16x4xf32>
      %173 = tpu.matmul %172, %0, %cst_70 {dimension_numbers = #tpu.dot_dimension_numbers<[1], [0], [0], [1], [0, 0, 1, 1], [], []>} : vector<16x32xf32>, vector<32x4xf32>, vector<16x4xf32> -> vector<16x4xf32>
      %174 = arith.mulf %171, %171 : vector<16x4xf32>
      %175 = arith.subf %173, %174 : vector<16x4xf32>
      %cst_71 = arith.constant 0.000000e+00 : f32
      %176 = vector.broadcast %cst_71 : f32 to vector<16x4xf32>
      %177 = arith.maximumf %175, %176 : vector<16x4xf32>
      %cst_72 = arith.constant 9.99999974E-6 : f32
      %178 = vector.broadcast %cst_72 : f32 to vector<16x4xf32>
      %179 = arith.addf %177, %178 : vector<16x4xf32>
      %180 = math.rsqrt %179 : vector<16x4xf32>
      %cst_73 = arith.constant dense<0.000000e+00> : vector<16x32xf32>
      %181 = tpu.matmul %171, %1, %cst_73 {dimension_numbers = #tpu.dot_dimension_numbers<[1], [0], [0], [1], [0, 0, 1, 1], [], []>} : vector<16x4xf32>, vector<4x32xf32>, vector<16x32xf32> -> vector<16x32xf32>
      %cst_74 = arith.constant dense<0.000000e+00> : vector<16x32xf32>
      %182 = tpu.matmul %180, %1, %cst_74 {dimension_numbers = #tpu.dot_dimension_numbers<[1], [0], [0], [1], [0, 0, 1, 1], [], []>} : vector<16x4xf32>, vector<4x32xf32>, vector<16x32xf32> -> vector<16x32xf32>
      %183 = arith.subf %170, %181 : vector<16x32xf32>
      %184 = arith.mulf %183, %182 : vector<16x32xf32>
      %185 = vector.broadcast %3 : vector<1x32xf32> to vector<16x32xf32>
      %186 = arith.mulf %184, %185 : vector<16x32xf32>
      %187 = vector.broadcast %4 : vector<1x32xf32> to vector<16x32xf32>
      %188 = arith.addf %186, %187 : vector<16x32xf32>
      %189 = arith.mulf %188, %188 : vector<16x32xf32>
      %cst_75 = arith.constant dense<0.000000e+00> : vector<16x4xf32>
      %190 = tpu.matmul %189, %0, %cst_75 {dimension_numbers = #tpu.dot_dimension_numbers<[1], [0], [0], [1], [0, 0, 1, 1], [], []>} : vector<16x32xf32>, vector<32x4xf32>, vector<16x4xf32> -> vector<16x4xf32>
      %cst_76 = arith.constant 8.000000e+00 : f32
      %191 = vector.broadcast %cst_76 : f32 to vector<16x4xf32>
      %192 = arith.mulf %190, %191 : vector<16x4xf32>
      %cst_77 = arith.constant dense<0.000000e+00> : vector<16x40xf32>
      %193 = tpu.matmul %192, %5, %cst_77 {dimension_numbers = #tpu.dot_dimension_numbers<[1], [0], [0], [1], [0, 0, 1, 1], [], []>} : vector<16x4xf32>, vector<4x40xf32>, vector<16x40xf32> -> vector<16x40xf32>
      %194 = vector.broadcast %8 : vector<1x40xf32> to vector<16x40xf32>
      %195 = arith.addf %193, %194 : vector<16x40xf32>
      %cst_78 = arith.constant dense<0.000000e+00> : vector<16x40xf32>
      %196 = tpu.matmul %188, %6, %cst_78 {dimension_numbers = #tpu.dot_dimension_numbers<[1], [0], [0], [1], [0, 0, 1, 1], [], []>} : vector<16x32xf32>, vector<32x40xf32>, vector<16x40xf32> -> vector<16x40xf32>
      %cst_79 = arith.constant 2.000000e+00 : f32
      %197 = vector.broadcast %cst_79 : f32 to vector<16x40xf32>
      %198 = arith.mulf %197, %196 : vector<16x40xf32>
      %199 = arith.subf %195, %198 : vector<16x40xf32>
      %cst_80 = arith.constant 0.000000e+00 : f32
      %200 = vector.broadcast %cst_80 : f32 to vector<16x40xf32>
      %201 = arith.maximumf %199, %200 : vector<16x40xf32>
      %202 = math.sqrt %201 : vector<16x40xf32>
      %203 = vector.broadcast %9 : vector<1x40xf32> to vector<16x40xf32>
      %204 = arith.subf %202, %203 : vector<16x40xf32>
      %205 = math.absf %204 : vector<16x40xf32>
      %206 = arith.mulf %205, %205 : vector<16x40xf32>
      %207 = arith.mulf %10, %10 : vector<1x40xf32>
      %208 = vector.broadcast %207 : vector<1x40xf32> to vector<16x40xf32>
      %209 = arith.addf %206, %208 : vector<16x40xf32>
      %210 = math.sqrt %209 : vector<16x40xf32>
      %211 = vector.broadcast %10 : vector<1x40xf32> to vector<16x40xf32>
      %212 = arith.subf %210, %211 : vector<16x40xf32>
      %213 = math.absf %212 : vector<16x40xf32>
      %214 = vector.shape_cast %17 : vector<1x40xi1> to vector<1x40xi1>
      %215 = vector.broadcast %214 : vector<1x40xi1> to vector<16x40xi1>
      %216 = arith.select %215, %205, %213 : vector<16x40xi1>, vector<16x40xf32>
      %217 = arith.mulf %216, %216 : vector<16x40xf32>
      %218 = vector.shape_cast %14 : vector<1x40xi1> to vector<1x40xi1>
      %219 = vector.broadcast %218 : vector<1x40xi1> to vector<16x40xi1>
      %220 = arith.select %219, %217, %201 : vector<16x40xi1>, vector<16x40xf32>
      %cst_81 = arith.constant -5.000000e-01 : f32
      %221 = vector.broadcast %cst_81 : f32 to vector<16x40xf32>
      %222 = arith.mulf %221, %220 : vector<16x40xf32>
      %223 = math.exp %222 : vector<16x40xf32>
      %c0_82 = arith.constant 0 : index
      %c0_83 = arith.constant 0 : index
      %224 = vector.load %arg12[%c0_82, %c0_83] : memref<16x40xf32, #tpu.memory_space<vmem>>, vector<16x40xf32>
      tpu.vector_store %arg12[%c0_82, %c0_83], %223 {strides = array<i32>} : memref<16x40xf32, #tpu.memory_space<vmem>>, vector<16x40xf32>,
    } else {
    }
    %c0_13 = arith.constant 0 : index
    %c0_14 = arith.constant 0 : index
    %c0_15 = arith.constant 0 : index
    %c0_16 = arith.constant 0 : index
    %21 = vector.load %arg2[%c0_13, %c0_14, %c0_15, %c0_16] : memref<1x1x8x32xf32, #tpu.memory_space<vmem>>, vector<1x1x8x32xf32>
    %22 = vector.shape_cast %21 : vector<1x1x8x32xf32> to vector<8x32xf32>
    %cst_17 = arith.constant dense<0.000000e+00> : vector<8x4xf32>
    %23 = tpu.matmul %22, %0, %cst_17 {dimension_numbers = #tpu.dot_dimension_numbers<[1], [0], [0], [1], [0, 0, 1, 1], [], []>} : vector<8x32xf32>, vector<32x4xf32>, vector<8x4xf32> -> vector<8x4xf32>
    %24 = arith.mulf %22, %22 : vector<8x32xf32>
    %cst_18 = arith.constant dense<0.000000e+00> : vector<8x4xf32>
    %25 = tpu.matmul %24, %0, %cst_18 {dimension_numbers = #tpu.dot_dimension_numbers<[1], [0], [0], [1], [0, 0, 1, 1], [], []>} : vector<8x32xf32>, vector<32x4xf32>, vector<8x4xf32> -> vector<8x4xf32>
    %26 = arith.mulf %23, %23 : vector<8x4xf32>
    %27 = arith.subf %25, %26 : vector<8x4xf32>
    %cst_19 = arith.constant 0.000000e+00 : f32
    %28 = vector.broadcast %cst_19 : f32 to vector<8x4xf32>
    %29 = arith.maximumf %27, %28 : vector<8x4xf32>
    %cst_20 = arith.constant 9.99999974E-6 : f32
    %30 = vector.broadcast %cst_20 : f32 to vector<8x4xf32>
    %31 = arith.addf %29, %30 : vector<8x4xf32>
    %32 = math.rsqrt %31 : vector<8x4xf32>
    %cst_21 = arith.constant dense<0.000000e+00> : vector<8x32xf32>
    %33 = tpu.matmul %23, %1, %cst_21 {dimension_numbers = #tpu.dot_dimension_numbers<[1], [0], [0], [1], [0, 0, 1, 1], [], []>} : vector<8x4xf32>, vector<4x32xf32>, vector<8x32xf32> -> vector<8x32xf32>
    %cst_22 = arith.constant dense<0.000000e+00> : vector<8x32xf32>
    %34 = tpu.matmul %32, %1, %cst_22 {dimension_numbers = #tpu.dot_dimension_numbers<[1], [0], [0], [1], [0, 0, 1, 1], [], []>} : vector<8x4xf32>, vector<4x32xf32>, vector<8x32xf32> -> vector<8x32xf32>
    %35 = arith.subf %22, %33 : vector<8x32xf32>
    %36 = arith.mulf %35, %34 : vector<8x32xf32>
    %37 = vector.broadcast %3 : vector<1x32xf32> to vector<8x32xf32>
    %38 = arith.mulf %36, %37 : vector<8x32xf32>
    %39 = vector.broadcast %4 : vector<1x32xf32> to vector<8x32xf32>
    %40 = arith.addf %38, %39 : vector<8x32xf32>
    %41 = arith.mulf %40, %40 : vector<8x32xf32>
    %cst_23 = arith.constant dense<0.000000e+00> : vector<8x4xf32>
    %42 = tpu.matmul %41, %0, %cst_23 {dimension_numbers = #tpu.dot_dimension_numbers<[1], [0], [0], [1], [0, 0, 1, 1], [], []>} : vector<8x32xf32>, vector<32x4xf32>, vector<8x4xf32> -> vector<8x4xf32>
    %cst_24 = arith.constant 8.000000e+00 : f32
    %43 = vector.broadcast %cst_24 : f32 to vector<8x4xf32>
    %44 = arith.mulf %42, %43 : vector<8x4xf32>
    %cst_25 = arith.constant dense<0.000000e+00> : vector<8x40xf32>
    %45 = tpu.matmul %44, %5, %cst_25 {dimension_numbers = #tpu.dot_dimension_numbers<[1], [0], [0], [1], [0, 0, 1, 1], [], []>} : vector<8x4xf32>, vector<4x40xf32>, vector<8x40xf32> -> vector<8x40xf32>
    %46 = vector.broadcast %8 : vector<1x40xf32> to vector<8x40xf32>
    %47 = arith.addf %45, %46 : vector<8x40xf32>
    %cst_26 = arith.constant dense<0.000000e+00> : vector<8x40xf32>
    %48 = tpu.matmul %40, %6, %cst_26 {dimension_numbers = #tpu.dot_dimension_numbers<[1], [0], [0], [1], [0, 0, 1, 1], [], []>} : vector<8x32xf32>, vector<32x40xf32>, vector<8x40xf32> -> vector<8x40xf32>
    %cst_27 = arith.constant 2.000000e+00 : f32
    %49 = vector.broadcast %cst_27 : f32 to vector<8x40xf32>
    %50 = arith.mulf %49, %48 : vector<8x40xf32>
    %51 = arith.subf %47, %50 : vector<8x40xf32>
    %cst_28 = arith.constant 0.000000e+00 : f32
    %52 = vector.broadcast %cst_28 : f32 to vector<8x40xf32>
    %53 = arith.maximumf %51, %52 : vector<8x40xf32>
    %54 = math.sqrt %53 : vector<8x40xf32>
    %55 = vector.broadcast %9 : vector<1x40xf32> to vector<8x40xf32>
    %56 = arith.subf %54, %55 : vector<8x40xf32>
    %57 = math.absf %56 : vector<8x40xf32>
    %58 = arith.mulf %57, %57 : vector<8x40xf32>
    %59 = arith.mulf %10, %10 : vector<1x40xf32>
    %60 = vector.broadcast %59 : vector<1x40xf32> to vector<8x40xf32>
    %61 = arith.addf %58, %60 : vector<8x40xf32>
    %62 = math.sqrt %61 : vector<8x40xf32>
    %63 = vector.broadcast %10 : vector<1x40xf32> to vector<8x40xf32>
    %64 = arith.subf %62, %63 : vector<8x40xf32>
    %65 = math.absf %64 : vector<8x40xf32>
    %66 = vector.shape_cast %17 : vector<1x40xi1> to vector<1x40xi1>
    %67 = vector.broadcast %66 : vector<1x40xi1> to vector<8x40xi1>
    %68 = arith.select %67, %57, %65 : vector<8x40xi1>, vector<8x40xf32>
    %69 = arith.mulf %68, %68 : vector<8x40xf32>
    %70 = vector.shape_cast %14 : vector<1x40xi1> to vector<1x40xi1>
    %71 = vector.broadcast %70 : vector<1x40xi1> to vector<8x40xi1>
    %72 = arith.select %71, %69, %53 : vector<8x40xi1>, vector<8x40xf32>
    %cst_29 = arith.constant -5.000000e-01 : f32
    %73 = vector.broadcast %cst_29 : f32 to vector<8x40xf32>
    %74 = arith.mulf %73, %72 : vector<8x40xf32>
    %75 = math.exp %74 : vector<8x40xf32>
    %76 = vector.broadcast %11 : vector<1x40xf32> to vector<8x40xf32>
    %77 = arith.mulf %75, %76 : vector<8x40xf32>
    %c0_30 = arith.constant 0 : index
    %c0_31 = arith.constant 0 : index
    %78 = vector.load %arg12[%c0_30, %c0_31] : memref<16x40xf32, #tpu.memory_space<vmem>>, vector<16x40xf32>
    %c0_32 = arith.constant 0 : index
    %c0_33 = arith.constant 0 : index
    %c0_34 = arith.constant 0 : index
    %c0_35 = arith.constant 0 : index
    %79 = vector.load %arg4[%c0_32, %c0_33, %c0_34, %c0_35] : memref<1x1x16x32xf32, #tpu.memory_space<vmem>>, vector<1x1x16x32xf32>
    %80 = vector.shape_cast %79 : vector<1x1x16x32xf32> to vector<16x32xf32>
    %81 = vector.extract_strided_slice %77 {offsets = [0, 0], sizes = [8, 10], strides = [1, 1]} : vector<8x40xf32> to vector<8x10xf32>
    %82 = vector.extract_strided_slice %78 {offsets = [0, 0], sizes = [16, 10], strides = [1, 1]} : vector<16x40xf32> to vector<16x10xf32>
    %cst_36 = arith.constant dense<0.000000e+00> : vector<8x16xf32>
    %83 = tpu.matmul %81, %82, %cst_36 {dimension_numbers = #tpu.dot_dimension_numbers<[1], [1], [0], [0], [0, 0, 1, 0], [], []>} : vector<8x10xf32>, vector<16x10xf32>, vector<8x16xf32> -> vector<8x16xf32>
    %cst_37 = arith.constant dense<0xFF800000> : vector<8xf32>
    %84 = vector.multi_reduction <maximumf>, %83, %cst_37 [1] : vector<8x16xf32> to vector<8xf32>
    %85 = vector.shape_cast %84 : vector<8xf32> to vector<8x1xf32>
    %86 = vector.broadcast %85 : vector<8x1xf32> to vector<8x16xf32>
    %87 = arith.subf %83, %86 : vector<8x16xf32>
    %88 = math.exp %87 : vector<8x16xf32>
    %cst_38 = arith.constant dense<0.000000e+00> : vector<8xf32>
    %89 = vector.multi_reduction <add>, %88, %cst_38 [1] : vector<8x16xf32> to vector<8xf32>
    %90 = vector.shape_cast %89 : vector<8xf32> to vector<8x1xf32>
    %91 = tpu.reciprocal %90 {approx = true} : vector<8x1xf32> -> vector<8x1xf32>
    %92 = arith.mulf %90, %91 : vector<8x1xf32>
    %cst_39 = arith.constant 2.000000e+00 : f32
    %93 = vector.broadcast %cst_39 : f32 to vector<8x1xf32>
    %94 = arith.subf %93, %92 : vector<8x1xf32>
    %95 = arith.mulf %91, %94 : vector<8x1xf32>
    %96 = vector.extract_strided_slice %80 {offsets = [0, 0], sizes = [16, 8], strides = [1, 1]} : vector<16x32xf32> to vector<16x8xf32>
    %cst_40 = arith.constant dense<0.000000e+00> : vector<8x8xf32>
    %97 = tpu.matmul %88, %96, %cst_40 {dimension_numbers = #tpu.dot_dimension_numbers<[1], [0], [0], [1], [0, 0, 1, 1], [], []>} : vector<8x16xf32>, vector<16x8xf32>, vector<8x8xf32> -> vector<8x8xf32>
    %98 = vector.broadcast %95 : vector<8x1xf32> to vector<8x8xf32>
    %99 = arith.mulf %97, %98 : vector<8x8xf32>
    %c0_41 = arith.constant 0 : index
    %c0_42 = arith.constant 0 : index
    %c0_43 = arith.constant 0 : index
    %100 = vector.load %arg11[%c0_41, %c0_42, %c0_43] : memref<1x8x32xf32, #tpu.memory_space<vmem>>, vector<1x8x8xf32>
    %101 = vector.shape_cast %100 : vector<1x8x8xf32> to vector<8x8xf32>
    %102 = vector.shape_cast %99 : vector<8x8xf32> to vector<1x8x8xf32>
    tpu.vector_store %arg11[%c0_41, %c0_42, %c0_43], %102 {strides = array<i32>} : memref<1x8x32xf32, #tpu.memory_space<vmem>>, vector<1x8x8xf32>,
    %103 = vector.extract_strided_slice %77 {offsets = [0, 10], sizes = [8, 10], strides = [1, 1]} : vector<8x40xf32> to vector<8x10xf32>
    %104 = vector.extract_strided_slice %78 {offsets = [0, 10], sizes = [16, 10], strides = [1, 1]} : vector<16x40xf32> to vector<16x10xf32>
    %cst_44 = arith.constant dense<0.000000e+00> : vector<8x16xf32>
    %105 = tpu.matmul %103, %104, %cst_44 {dimension_numbers = #tpu.dot_dimension_numbers<[1], [1], [0], [0], [0, 0, 1, 0], [], []>} : vector<8x10xf32>, vector<16x10xf32>, vector<8x16xf32> -> vector<8x16xf32>
    %cst_45 = arith.constant dense<0xFF800000> : vector<8xf32>
    %106 = vector.multi_reduction <maximumf>, %105, %cst_45 [1] : vector<8x16xf32> to vector<8xf32>
    %107 = vector.shape_cast %106 : vector<8xf32> to vector<8x1xf32>
    %108 = vector.broadcast %107 : vector<8x1xf32> to vector<8x16xf32>
    %109 = arith.subf %105, %108 : vector<8x16xf32>
    %110 = math.exp %109 : vector<8x16xf32>
    %cst_46 = arith.constant dense<0.000000e+00> : vector<8xf32>
    %111 = vector.multi_reduction <add>, %110, %cst_46 [1] : vector<8x16xf32> to vector<8xf32>
    %112 = vector.shape_cast %111 : vector<8xf32> to vector<8x1xf32>
    %113 = tpu.reciprocal %112 {approx = true} : vector<8x1xf32> -> vector<8x1xf32>
    %114 = arith.mulf %112, %113 : vector<8x1xf32>
    %cst_47 = arith.constant 2.000000e+00 : f32
    %115 = vector.broadcast %cst_47 : f32 to vector<8x1xf32>
    %116 = arith.subf %115, %114 : vector<8x1xf32>
    %117 = arith.mulf %113, %116 : vector<8x1xf32>
    %118 = vector.extract_strided_slice %80 {offsets = [0, 8], sizes = [16, 8], strides = [1, 1]} : vector<16x32xf32> to vector<16x8xf32>
    %cst_48 = arith.constant dense<0.000000e+00> : vector<8x8xf32>
    %119 = tpu.matmul %110, %118, %cst_48 {dimension_numbers = #tpu.dot_dimension_numbers<[1], [0], [0], [1], [0, 0, 1, 1], [], []>} : vector<8x16xf32>, vector<16x8xf32>, vector<8x8xf32> -> vector<8x8xf32>
    %120 = vector.broadcast %117 : vector<8x1xf32> to vector<8x8xf32>
    %121 = arith.mulf %119, %120 : vector<8x8xf32>
    %c0_49 = arith.constant 0 : index
    %c0_50 = arith.constant 0 : index
    %c8 = arith.constant 8 : index
    %122 = vector.load %arg11[%c0_49, %c0_50, %c8] : memref<1x8x32xf32, #tpu.memory_space<vmem>>, vector<1x8x8xf32>
    %123 = vector.shape_cast %122 : vector<1x8x8xf32> to vector<8x8xf32>
    %124 = vector.shape_cast %121 : vector<8x8xf32> to vector<1x8x8xf32>
    tpu.vector_store %arg11[%c0_49, %c0_50, %c8], %124 {strides = array<i32>} : memref<1x8x32xf32, #tpu.memory_space<vmem>>, vector<1x8x8xf32>,
    %125 = vector.extract_strided_slice %77 {offsets = [0, 20], sizes = [8, 10], strides = [1, 1]} : vector<8x40xf32> to vector<8x10xf32>
    %126 = vector.extract_strided_slice %78 {offsets = [0, 20], sizes = [16, 10], strides = [1, 1]} : vector<16x40xf32> to vector<16x10xf32>
    %cst_51 = arith.constant dense<0.000000e+00> : vector<8x16xf32>
    %127 = tpu.matmul %125, %126, %cst_51 {dimension_numbers = #tpu.dot_dimension_numbers<[1], [1], [0], [0], [0, 0, 1, 0], [], []>} : vector<8x10xf32>, vector<16x10xf32>, vector<8x16xf32> -> vector<8x16xf32>
    %cst_52 = arith.constant dense<0xFF800000> : vector<8xf32>
    %128 = vector.multi_reduction <maximumf>, %127, %cst_52 [1] : vector<8x16xf32> to vector<8xf32>
    %129 = vector.shape_cast %128 : vector<8xf32> to vector<8x1xf32>
    %130 = vector.broadcast %129 : vector<8x1xf32> to vector<8x16xf32>
    %131 = arith.subf %127, %130 : vector<8x16xf32>
    %132 = math.exp %131 : vector<8x16xf32>
    %cst_53 = arith.constant dense<0.000000e+00> : vector<8xf32>
    %133 = vector.multi_reduction <add>, %132, %cst_53 [1] : vector<8x16xf32> to vector<8xf32>
    %134 = vector.shape_cast %133 : vector<8xf32> to vector<8x1xf32>
    %135 = tpu.reciprocal %134 {approx = true} : vector<8x1xf32> -> vector<8x1xf32>
    %136 = arith.mulf %134, %135 : vector<8x1xf32>
    %cst_54 = arith.constant 2.000000e+00 : f32
    %137 = vector.broadcast %cst_54 : f32 to vector<8x1xf32>
    %138 = arith.subf %137, %136 : vector<8x1xf32>
    %139 = arith.mulf %135, %138 : vector<8x1xf32>
    %140 = vector.extract_strided_slice %80 {offsets = [0, 16], sizes = [16, 8], strides = [1, 1]} : vector<16x32xf32> to vector<16x8xf32>
    %cst_55 = arith.constant dense<0.000000e+00> : vector<8x8xf32>
    %141 = tpu.matmul %132, %140, %cst_55 {dimension_numbers = #tpu.dot_dimension_numbers<[1], [0], [0], [1], [0, 0, 1, 1], [], []>} : vector<8x16xf32>, vector<16x8xf32>, vector<8x8xf32> -> vector<8x8xf32>
    %142 = vector.broadcast %139 : vector<8x1xf32> to vector<8x8xf32>
    %143 = arith.mulf %141, %142 : vector<8x8xf32>
    %c0_56 = arith.constant 0 : index
    %c0_57 = arith.constant 0 : index
    %c16 = arith.constant 16 : index
    %144 = vector.load %arg11[%c0_56, %c0_57, %c16] : memref<1x8x32xf32, #tpu.memory_space<vmem>>, vector<1x8x8xf32>
    %145 = vector.shape_cast %144 : vector<1x8x8xf32> to vector<8x8xf32>
    %146 = vector.shape_cast %143 : vector<8x8xf32> to vector<1x8x8xf32>
    tpu.vector_store %arg11[%c0_56, %c0_57, %c16], %146 {strides = array<i32>} : memref<1x8x32xf32, #tpu.memory_space<vmem>>, vector<1x8x8xf32>,
    %147 = vector.extract_strided_slice %77 {offsets = [0, 30], sizes = [8, 10], strides = [1, 1]} : vector<8x40xf32> to vector<8x10xf32>
    %148 = vector.extract_strided_slice %78 {offsets = [0, 30], sizes = [16, 10], strides = [1, 1]} : vector<16x40xf32> to vector<16x10xf32>
    %cst_58 = arith.constant dense<0.000000e+00> : vector<8x16xf32>
    %149 = tpu.matmul %147, %148, %cst_58 {dimension_numbers = #tpu.dot_dimension_numbers<[1], [1], [0], [0], [0, 0, 1, 0], [], []>} : vector<8x10xf32>, vector<16x10xf32>, vector<8x16xf32> -> vector<8x16xf32>
    %cst_59 = arith.constant dense<0xFF800000> : vector<8xf32>
    %150 = vector.multi_reduction <maximumf>, %149, %cst_59 [1] : vector<8x16xf32> to vector<8xf32>
    %151 = vector.shape_cast %150 : vector<8xf32> to vector<8x1xf32>
    %152 = vector.broadcast %151 : vector<8x1xf32> to vector<8x16xf32>
    %153 = arith.subf %149, %152 : vector<8x16xf32>
    %154 = math.exp %153 : vector<8x16xf32>
    %cst_60 = arith.constant dense<0.000000e+00> : vector<8xf32>
    %155 = vector.multi_reduction <add>, %154, %cst_60 [1] : vector<8x16xf32> to vector<8xf32>
    %156 = vector.shape_cast %155 : vector<8xf32> to vector<8x1xf32>
    %157 = tpu.reciprocal %156 {approx = true} : vector<8x1xf32> -> vector<8x1xf32>
    %158 = arith.mulf %156, %157 : vector<8x1xf32>
    %cst_61 = arith.constant 2.000000e+00 : f32
    %159 = vector.broadcast %cst_61 : f32 to vector<8x1xf32>
    %160 = arith.subf %159, %158 : vector<8x1xf32>
    %161 = arith.mulf %157, %160 : vector<8x1xf32>
    %162 = vector.extract_strided_slice %80 {offsets = [0, 24], sizes = [16, 8], strides = [1, 1]} : vector<16x32xf32> to vector<16x8xf32>
    %cst_62 = arith.constant dense<0.000000e+00> : vector<8x8xf32>
    %163 = tpu.matmul %154, %162, %cst_62 {dimension_numbers = #tpu.dot_dimension_numbers<[1], [0], [0], [1], [0, 0, 1, 1], [], []>} : vector<8x16xf32>, vector<16x8xf32>, vector<8x8xf32> -> vector<8x8xf32>
    %164 = vector.broadcast %161 : vector<8x1xf32> to vector<8x8xf32>
    %165 = arith.mulf %163, %164 : vector<8x8xf32>
    %c0_63 = arith.constant 0 : index
    %c0_64 = arith.constant 0 : index
    %c24 = arith.constant 24 : index
    %166 = vector.load %arg11[%c0_63, %c0_64, %c24] : memref<1x8x32xf32, #tpu.memory_space<vmem>>, vector<1x8x8xf32>
    %167 = vector.shape_cast %166 : vector<1x8x8xf32> to vector<8x8xf32>
    %168 = vector.shape_cast %165 : vector<8x8xf32> to vector<1x8x8xf32>
    tpu.vector_store %arg11[%c0_63, %c0_64, %c24], %168 {strides = array<i32>} : memref<1x8x32xf32, #tpu.memory_space<vmem>>, vector<1x8x8xf32>,
    return
  }
  func.func @transform_0(%arg0: i32, %arg1: i32) -> (i32, i32, i32, i32) {
    %c0_i32 = arith.constant 0 : i32
    %c0_i32_0 = arith.constant 0 : i32
    %c0_i32_1 = arith.constant 0 : i32
    return %c0_i32, %arg0, %arg1, %c0_i32_0 : i32, i32, i32, i32
  }
  func.func @transform_1(%arg0: i32, %arg1: i32) -> (i32, i32, i32, i32) {
    %c1_i32 = arith.constant 1 : i32
    %c0_i32 = arith.constant 0 : i32
    %c0_i32_0 = arith.constant 0 : i32
    %c0_i32_1 = arith.constant 0 : i32
    return %c1_i32, %arg0, %c0_i32, %c0_i32_0 : i32, i32, i32, i32
  }
  func.func @transform_2(%arg0: i32, %arg1: i32) -> (i32, i32, i32, i32) {
    %c2_i32 = arith.constant 2 : i32
    %c0_i32 = arith.constant 0 : i32
    %c0_i32_0 = arith.constant 0 : i32
    %c0_i32_1 = arith.constant 0 : i32
    return %c2_i32, %arg0, %c0_i32, %c0_i32_0 : i32, i32, i32, i32
  }
  func.func @transform_3(%arg0: i32, %arg1: i32) -> (i32, i32) {
    %c0_i32 = arith.constant 0 : i32
    %c0_i32_0 = arith.constant 0 : i32
    %c0_i32_1 = arith.constant 0 : i32
    return %c0_i32, %c0_i32_0 : i32, i32
  }
  func.func @transform_4(%arg0: i32, %arg1: i32) -> (i32, i32) {
    %c0_i32 = arith.constant 0 : i32
    %c0_i32_0 = arith.constant 0 : i32
    %c0_i32_1 = arith.constant 0 : i32
    return %c0_i32, %c0_i32_0 : i32, i32
  }
  func.func @transform_5(%arg0: i32, %arg1: i32) -> (i32, i32) {
    %c0_i32 = arith.constant 0 : i32
    %c0_i32_0 = arith.constant 0 : i32
    %c0_i32_1 = arith.constant 0 : i32
    return %c0_i32, %c0_i32_0 : i32, i32
  }
  func.func @transform_6(%arg0: i32, %arg1: i32) -> (i32, i32) {
    %c0_i32 = arith.constant 0 : i32
    %c0_i32_0 = arith.constant 0 : i32
    %c0_i32_1 = arith.constant 0 : i32
    return %c0_i32, %c0_i32_0 : i32, i32
  }
  func.func @transform_7(%arg0: i32, %arg1: i32) -> (i32, i32) {
    %c0_i32 = arith.constant 0 : i32
    %c0_i32_0 = arith.constant 0 : i32
    %c0_i32_1 = arith.constant 0 : i32
    return %c0_i32, %c0_i32_0 : i32, i32
  }
  func.func @transform_8(%arg0: i32, %arg1: i32) -> (i32, i32) {
    %c0_i32 = arith.constant 0 : i32
    %c0_i32_0 = arith.constant 0 : i32
    %c0_i32_1 = arith.constant 0 : i32
    return %c0_i32, %c0_i32_0 : i32, i32
  }
  func.func @transform_9(%arg0: i32, %arg1: i32) -> (i32, i32, i32) {
    %c0_i32 = arith.constant 0 : i32
    %c0_i32_0 = arith.constant 0 : i32
    return %arg0, %arg1, %c0_i32 : i32, i32, i32
  }
}

module attributes {stable_mosaic.version = 11 : i64} {
  func.func @_linear_kernel(%arg0: i32, %arg1: i32, %arg2: i32, %arg3: memref<32x128xf32, #tpu.memory_space<vmem>>, %arg4: memref<128x32xf32, #tpu.memory_space<vmem>>, %arg5: memref<1x32xf32, #tpu.memory_space<vmem>>, %arg6: memref<32x32xf32, #tpu.memory_space<vmem>>, %arg7: memref<32x32xf32, #tpu.memory_space<vmem>>, %arg8: memref<32x32xf32, #tpu.memory_space<vmem>>) attributes {dimension_semantics = [#tpu.dimension_semantics<parallel>, #tpu.dimension_semantics<parallel>, #tpu.dimension_semantics<arbitrary>], iteration_bounds = array<i64: 1, 1, 1>, scalar_prefetch = 0 : i64, scratch_operands = 1 : i64, tpu.core_type = #tpu.core_type<tc>, window_params = [{transform_indices = @transform_0, window_bounds = array<i64: 32, 128>}, {transform_indices = @transform_1, window_bounds = array<i64: 128, 32>}, {transform_indices = @transform_2, window_bounds = array<i64: 1, 32>}, {transform_indices = @transform_3, window_bounds = array<i64: 32, 32>}, {transform_indices = @transform_4, window_bounds = array<i64: 32, 32>}]} {
    %c0_i32 = arith.constant 0 : i32
    %0 = arith.cmpi eq, %arg2, %c0_i32 : i32
    %1 = arith.extui %0 : i1 to i32
    %c0_i32_0 = arith.constant 0 : i32
    %2 = arith.cmpi ne, %1, %c0_i32_0 : i32
    scf.if %2 {
      %cst_10 = arith.constant 0.000000e+00 : f32
      %12 = vector.broadcast %cst_10 : f32 to vector<32x32xf32>
      %c0_11 = arith.constant 0 : index
      %c0_12 = arith.constant 0 : index
      %13 = vector.load %arg8[%c0_11, %c0_12] : memref<32x32xf32, #tpu.memory_space<vmem>>, vector<32x32xf32>
      tpu.vector_store %arg8[%c0_11, %c0_12], %12 {strides = array<i32>} : memref<32x32xf32, #tpu.memory_space<vmem>>, vector<32x32xf32>,
    } else {
    }
    %c0 = arith.constant 0 : index
    %c0_1 = arith.constant 0 : index
    %3 = vector.load %arg8[%c0, %c0_1] : memref<32x32xf32, #tpu.memory_space<vmem>>, vector<32x32xf32>
    %c0_2 = arith.constant 0 : index
    %c0_3 = arith.constant 0 : index
    %4 = vector.load %arg3[%c0_2, %c0_3] : memref<32x128xf32, #tpu.memory_space<vmem>>, vector<32x128xf32>
    %c0_4 = arith.constant 0 : index
    %c0_5 = arith.constant 0 : index
    %5 = vector.load %arg4[%c0_4, %c0_5] : memref<128x32xf32, #tpu.memory_space<vmem>>, vector<128x32xf32>
    %cst = arith.constant dense<0.000000e+00> : vector<32x32xf32>
    %6 = tpu.matmul %4, %5, %cst {dimension_numbers = #tpu.dot_dimension_numbers<[1], [0], [0], [1], [0, 0, 1, 1], [], []>} : vector<32x128xf32>, vector<128x32xf32>, vector<32x32xf32> -> vector<32x32xf32>
    %7 = arith.addf %3, %6 : vector<32x32xf32>
    %c0_6 = arith.constant 0 : index
    %c0_7 = arith.constant 0 : index
    %8 = vector.load %arg8[%c0_6, %c0_7] : memref<32x32xf32, #tpu.memory_space<vmem>>, vector<32x32xf32>
    tpu.vector_store %arg8[%c0_6, %c0_7], %7 {strides = array<i32>} : memref<32x32xf32, #tpu.memory_space<vmem>>, vector<32x32xf32>,
    %c0_i32_8 = arith.constant 0 : i32
    %9 = arith.cmpi eq, %arg2, %c0_i32_8 : i32
    %10 = arith.extui %9 : i1 to i32
    %c0_i32_9 = arith.constant 0 : i32
    %11 = arith.cmpi ne, %10, %c0_i32_9 : i32
    scf.if %11 {
      %c0_10 = arith.constant 0 : index
      %c0_11 = arith.constant 0 : index
      %12 = vector.load %arg8[%c0_10, %c0_11] : memref<32x32xf32, #tpu.memory_space<vmem>>, vector<32x32xf32>
      %c0_12 = arith.constant 0 : index
      %c0_13 = arith.constant 0 : index
      %13 = vector.load %arg5[%c0_12, %c0_13] : memref<1x32xf32, #tpu.memory_space<vmem>>, vector<1x32xf32>
      %14 = vector.broadcast %13 : vector<1x32xf32> to vector<32x32xf32>
      %15 = arith.addf %12, %14 : vector<32x32xf32>
      %c0_14 = arith.constant 0 : index
      %c0_15 = arith.constant 0 : index
      %16 = vector.load %arg6[%c0_14, %c0_15] : memref<32x32xf32, #tpu.memory_space<vmem>>, vector<32x32xf32>
      %17 = arith.addf %15, %16 : vector<32x32xf32>
      %c0_16 = arith.constant 0 : index
      %c0_17 = arith.constant 0 : index
      %18 = vector.load %arg7[%c0_16, %c0_17] : memref<32x32xf32, #tpu.memory_space<vmem>>, vector<32x32xf32>
      tpu.vector_store %arg7[%c0_16, %c0_17], %17 {strides = array<i32>} : memref<32x32xf32, #tpu.memory_space<vmem>>, vector<32x32xf32>,
    } else {
    }
    return
  }
  func.func @transform_0(%arg0: i32, %arg1: i32, %arg2: i32) -> (i32, i32) {
    %c0_i32 = arith.constant 0 : i32
    return %arg0, %arg2 : i32, i32
  }
  func.func @transform_1(%arg0: i32, %arg1: i32, %arg2: i32) -> (i32, i32) {
    %c0_i32 = arith.constant 0 : i32
    return %arg2, %arg1 : i32, i32
  }
  func.func @transform_2(%arg0: i32, %arg1: i32, %arg2: i32) -> (i32, i32) {
    %c0_i32 = arith.constant 0 : i32
    %c0_i32_0 = arith.constant 0 : i32
    return %c0_i32, %arg1 : i32, i32
  }
  func.func @transform_3(%arg0: i32, %arg1: i32, %arg2: i32) -> (i32, i32) {
    %c0_i32 = arith.constant 0 : i32
    return %arg0, %arg1 : i32, i32
  }
  func.func @transform_4(%arg0: i32, %arg1: i32, %arg2: i32) -> (i32, i32) {
    %c0_i32 = arith.constant 0 : i32
    return %arg0, %arg1 : i32, i32
  }
}

</mosaic_0001>

<llo_original>
// kernel: transformer_block_forward.5
$region0: #{transformer_block_forward.5}
  #allocation0 [shape = 'u32[]', space=smem, size = 0x4, offset = 0x4, fixed_abs, tag = 'smem constant byte address 0x4 - core index']
  #allocation1 [shape = 'u32[72,128]{1,0:T(1,128)}', space=vmem, size = 0x9000, scoped, tag = 'internal scratch']
  %s0 = inlined_call_operand.vmem [shape: f32[32,32], index: 0, kind: input, shape index: {}]
  %s1 = inlined_call_operand.vmem [shape: f32[1,32], index: 1, kind: input, shape index: {}]
  %s2 = inlined_call_operand.vmem [shape: f32[1,32], index: 2, kind: input, shape index: {}]
  %s3 = inlined_call_operand.vmem [shape: f32[32,96], index: 3, kind: input, shape index: {}]
  %s4 = inlined_call_operand.vmem [shape: f32[1,96], index: 4, kind: input, shape index: {}]
  %s5 = inlined_call_operand.vmem [shape: f32[3,32,32], index: 5, kind: output, shape index: {}]
  %s6 = sld [smem:[#allocation0]]
  $region30: #{transformer_block_forward.5} parent=0
    _
  %s8 = ssub.s32 1, %s6
  %s9 = scalar_select 0, %s8, %s6
  // Predicated region
  $region2: #{transformer_block_forward.5} parent=0 // pred_check
    _
  $region3: #{transformer_block_forward.5} parent=0 // pred_check_branch
    %11 = sbr.rel (0) target = $region5
  $region4: #{transformer_block_forward.5} parent=0 // pred_region
    _
  $region5: #{transformer_block_forward.5} parent=0 // pred_fallthru
    _
  // Predicated region
  $region6: #{transformer_block_forward.5} parent=0 // pred_check
    _
  $region7: #{transformer_block_forward.5} parent=0 // pred_check_branch
    %13 = sbr.rel (0) target = $region9
  $region8: #{transformer_block_forward.5} parent=0 // pred_region
    _
  $region9: #{transformer_block_forward.5} parent=0 // pred_fallthru
    _
  // Predicated region
  $region10: #{transformer_block_forward.5} parent=0 // pred_check
    _
  $region11: #{transformer_block_forward.5} parent=0 // pred_check_branch
    %15 = sbr.rel (0) target = $region13
  $region12: #{transformer_block_forward.5} parent=0 // pred_region
    _
  $region13: #{transformer_block_forward.5} parent=0 // pred_fallthru
    _
  // Predicated region
  $region14: #{transformer_block_forward.5} parent=0 // pred_check
    _
  $region15: #{transformer_block_forward.5} parent=0 // pred_check_branch
    %17 = sbr.rel (0) target = $region17
  $region16: #{transformer_block_forward.5} parent=0 // pred_region
    _
  $region17: #{transformer_block_forward.5} parent=0 // pred_fallthru
    _
  // Predicated region
  $region18: #{transformer_block_forward.5} parent=0 // pred_check
    _
  $region19: #{transformer_block_forward.5} parent=0 // pred_check_branch
    %19 = sbr.rel (0) target = $region21
  $region20: #{transformer_block_forward.5} parent=0 // pred_region
    _
  $region21: #{transformer_block_forward.5} parent=0 // pred_fallthru
    _
  %v20 = vld [vmem:[%s0] sm:$0xff]
  %v21 = vld [vmem:[%s0 + $0x8] sm:$0xff]
  %v22 = vld [vmem:[%s0 + $0x10] sm:$0xff]
  %v23 = vld [vmem:[%s0 + $0x18] sm:$0xff]
  %vm24 = vcmask 261120
  %v25 = vsel %vm24, %v20, 0.0
  %26 = vadd.xlane.f32.xlu0 %v25
  %v27 = vpop.xlane.xlu0 %26
  %v28 = vsel %vm24, %v21, 0.0
  %29 = vadd.xlane.f32.xlu0 %v28
  %v30 = vpop.xlane.xlu0 %29
  %v31 = vsel %vm24, %v22, 0.0
  %32 = vadd.xlane.f32.xlu0 %v31
  %v33 = vpop.xlane.xlu0 %32
  %v34 = vsel %vm24, %v23, 0.0
  %35 = vadd.xlane.f32.xlu0 %v34
  %v36 = vpop.xlane.xlu0 %35
  %v37 = vrcp.pop 32.0
  %v38 = vmul.f32 32.0, %v37
  %v39 = vsub.f32 1.0, %v38
  %v40 = vmul.f32 %v37, %v39
  %v41 = vadd.f32 %v37, %v40
  %vm42 = vweird.f32 %v37
  %v43 = vsel %vm42, %v37, %v41
  %v44 = vmul.f32 %v27, %v43
  %v45 = vmul.f32 %v30, %v43
  %v46 = vmul.f32 %v33, %v43
  %v47 = vmul.f32 %v36, %v43
  %v48 = vsub.f32 %v20, %v44
  %v49 = vsub.f32 %v21, %v45
  %v50 = vsub.f32 %v22, %v46
  %v51 = vsub.f32 %v23, %v47
  %v52 = vmul.f32 %v48, %v48
  %v53 = vmul.f32 %v49, %v49
  %v54 = vmul.f32 %v50, %v50
  %v55 = vmul.f32 %v51, %v51
  %v56 = vsel %vm24, %v52, 0.0
  %57 = vadd.xlane.f32.xlu0 %v56
  %v58 = vpop.xlane.xlu0 %57
  %v59 = vsel %vm24, %v53, 0.0
  %60 = vadd.xlane.f32.xlu0 %v59
  %v61 = vpop.xlane.xlu0 %60
  %v62 = vsel %vm24, %v54, 0.0
  %63 = vadd.xlane.f32.xlu0 %v62
  %v64 = vpop.xlane.xlu0 %63
  %v65 = vsel %vm24, %v55, 0.0
  %66 = vadd.xlane.f32.xlu0 %v65
  %v67 = vpop.xlane.xlu0 %66
  %v68 = vmul.f32 %v58, %v43
  %v69 = vmul.f32 %v61, %v43
  %v70 = vmul.f32 %v64, %v43
  %v71 = vmul.f32 %v67, %v43
  %v72 = vadd.f32 %v68, 1e-05
  %v73 = vadd.f32 %v69, 1e-05
  %v74 = vadd.f32 %v70, 1e-05
  %v75 = vadd.f32 %v71, 1e-05
  %v76 = vrsqrt.pop %v72
  %v77 = vmul.f32 %v76, %v72
  %v78 = vmul.f32 %v77, %v76
  %v79 = vmul.f32 0.5, %v78
  %v80 = vsub.f32 1.5, %v79
  %v81 = vmul.f32 %v76, %v80
  %vm82 = vweird.f32 %v72
  %vm83 = vweird.f32 %v76
  %vm84 = vmor %vm82, %vm83
  %v85 = vsel %vm84, %v76, %v81
  %v86 = vrsqrt.pop %v73
  %v87 = vmul.f32 %v86, %v73
  %v88 = vmul.f32 %v87, %v86
  %v89 = vmul.f32 0.5, %v88
  %v90 = vsub.f32 1.5, %v89
  %v91 = vmul.f32 %v86, %v90
  %vm92 = vweird.f32 %v73
  %vm93 = vweird.f32 %v86
  %vm94 = vmor %vm92, %vm93
  %v95 = vsel %vm94, %v86, %v91
  %v96 = vrsqrt.pop %v74
  %v97 = vmul.f32 %v96, %v74
  %v98 = vmul.f32 %v97, %v96
  %v99 = vmul.f32 0.5, %v98
  %v100 = vsub.f32 1.5, %v99
  %v101 = vmul.f32 %v96, %v100
  %vm102 = vweird.f32 %v74
  %vm103 = vweird.f32 %v96
  %vm104 = vmor %vm102, %vm103
  %v105 = vsel %vm104, %v96, %v101
  %v106 = vrsqrt.pop %v75
  %v107 = vmul.f32 %v106, %v75
  %v108 = vmul.f32 %v107, %v106
  %v109 = vmul.f32 0.5, %v108
  %v110 = vsub.f32 1.5, %v109
  %v111 = vmul.f32 %v106, %v110
  %vm112 = vweird.f32 %v75
  %vm113 = vweird.f32 %v106
  %vm114 = vmor %vm112, %vm113
  %v115 = vsel %vm114, %v106, %v111
  %v116 = vmul.f32 %v48, %v85
  %v117 = vmul.f32 %v49, %v95
  %v118 = vmul.f32 %v50, %v105
  %v119 = vmul.f32 %v51, %v115
  %v120 = vld [vmem:[%s1] sm:$0x1]
  %v122 = vperm.slane %v120, 0
  %v124 = vmul.f32 %v116, %v122
  %v125 = vmul.f32 %v117, %v122
  %v126 = vmul.f32 %v118, %v122
  %v127 = vmul.f32 %v119, %v122
  %v128 = vld [vmem:[%s2] sm:$0x1]
  %v130 = vperm.slane %v128, 0
  %v132 = vadd.f32 %v124, %v130
  %v133 = vadd.f32 %v125, %v130
  %v134 = vadd.f32 %v126, %v130
  %v135 = vadd.f32 %v127, %v130
  %v136 = vld [vmem:[%s3] sm:$0xff]
  %v137 = vld [vmem:[%s3 + $0x8] sm:$0xff]
  %v138 = vld [vmem:[%s3 + $0x10] sm:$0xff]
  %v139 = vld [vmem:[%s3 + $0x18] sm:$0xff]
  %v140 = vld [vmem:[%s4] sm:$0x1]
  %v142 = vperm.slane %v140, 0
  %v145 = vsel %vm24, %v132, 0
  %v148 = vsel %vm24, %v133, 0
  %v151 = vsel %vm24, %v134, 0
  %v154 = vsel %vm24, %v135, 0
  %156 = vmatpush.msra.mxu0 0.0
  %157 = vmatpush.msra.mxu0 0.0
  %158 = vmatpush.msra.mxu0 0.0
  %159 = vmatpush.msra.mxu0 0.0
  %160 = vmatpush.msra.mxu0 0.0
  %161 = vmatpush.msra.mxu0 0.0
  %162 = vmatpush.msra.mxu0 0.0
  %163 = vmatpush.msra.mxu0 0.0
  %164 = vmatpush.msra.mxu0 0.0
  %165 = vmatpush.msra.mxu0 0.0
  %166 = vmatpush.msra.mxu0 0.0
  %167 = vmatpush.msra.mxu0 0.0
  %168 = vmatpush.msra.mxu0 %v139
  %169 = vmatpush.msra.mxu0 %v138
  %170 = vmatpush.msra.mxu0 %v137
  %171 = vmatpush.msra.mxu0 %v136
  %172 = vmatmul.f32.gmra.mxu0 %v145
  %v173 = vpop.f32.mrf.mxu0
  %v174 = vadd.f32 %v142, %v173
  %175 = vmatmul.f32.gmra.mxu0 %v148
  %v176 = vpop.f32.mrf.mxu0
  %v177 = vadd.f32 %v142, %v176
  %178 = vmatmul.f32.gmra.mxu0 %v151
  %v179 = vpop.f32.mrf.mxu0
  %v180 = vadd.f32 %v142, %v179
  %181 = vmatmul.f32.gmra.mxu0 %v154
  %v182 = vpop.f32.mrf.mxu0
  %v183 = vadd.f32 %v142, %v182
  %184 = vdwg.mxu0
  %185 = vst.msk [vmem:[%s5] sm:$0xff] %vm24, %v174
  %186 = vst.msk [vmem:[%s5 + $0x8] sm:$0xff] %vm24, %v177
  %187 = vst.msk [vmem:[%s5 + $0x10] sm:$0xff] %vm24, %v180
  %188 = vst.msk [vmem:[%s5 + $0x18] sm:$0xff] %vm24, %v183
  %193 = vrot.lane.b32.xlu0 %v174, 96
  %v194 = vpop.permute.xlu0 %193
  %195 = vrot.lane.b32.xlu0 %v177, 96
  %v196 = vpop.permute.xlu0 %195
  %197 = vrot.lane.b32.xlu0 %v180, 96
  %v198 = vpop.permute.xlu0 %197
  %199 = vrot.lane.b32.xlu0 %v183, 96
  %v200 = vpop.permute.xlu0 %199
  %s205 = scalar_lea.vmem %s5, 32
  %206 = vst.msk [vmem:[%s205] sm:$0xff] %vm24, %v194
  %207 = vst.msk [vmem:[%s205 + $0x8] sm:$0xff] %vm24, %v196
  %208 = vst.msk [vmem:[%s205 + $0x10] sm:$0xff] %vm24, %v198
  %209 = vst.msk [vmem:[%s205 + $0x18] sm:$0xff] %vm24, %v200
  %210 = vrot.lane.b32.xlu0 %v174, 64
  %v211 = vpop.permute.xlu0 %210
  %212 = vrot.lane.b32.xlu0 %v177, 64
  %v213 = vpop.permute.xlu0 %212
  %214 = vrot.lane.b32.xlu0 %v180, 64
  %v215 = vpop.permute.xlu0 %214
  %216 = vrot.lane.b32.xlu0 %v183, 64
  %v217 = vpop.permute.xlu0 %216
  %s222 = scalar_lea.vmem %s5, 64
  %223 = vst.msk [vmem:[%s222] sm:$0xff] %vm24, %v211
  %224 = vst.msk [vmem:[%s222 + $0x8] sm:$0xff] %vm24, %v213
  %225 = vst.msk [vmem:[%s222 + $0x10] sm:$0xff] %vm24, %v215
  %226 = vst.msk [vmem:[%s222 + $0x18] sm:$0xff] %vm24, %v217
  // Predicated region
  $region22: #{transformer_block_forward.5} parent=0 // pred_check
    _
  $region23: #{transformer_block_forward.5} parent=0 // pred_check_branch
    %228 = sbr.rel (0) target = $region25
  $region24: #{transformer_block_forward.5} parent=0 // pred_region
    _
  $region25: #{transformer_block_forward.5} parent=0 // pred_fallthru
    _
  // Predicated region
  $region26: #{transformer_block_forward.5} parent=0 // pred_check
    _
  $region27: #{transformer_block_forward.5} parent=0 // pred_check_branch
    %230 = sbr.rel (0) target = $region29
  $region28: #{transformer_block_forward.5} parent=0 // pred_region
    _
  $region29: #{transformer_block_forward.5} parent=0 // pred_fallthru
    _

// kernel: transformer_block_forward.7
$region0: #{transformer_block_forward.7}
  #allocation0 [shape = 'u32[]', space=smem, size = 0x4, offset = 0x4, fixed_abs, tag = 'smem constant byte address 0x4 - core index']
  #allocation1 [shape = 'u32[72,128]{1,0:T(1,128)}', space=vmem, size = 0x9000, scoped, tag = 'internal scratch']
  #allocation2 [shape = 'f32[32,32]{1,0:T(8,128)}', space=vmem, size = 0x4000, scoped, tag = 'scratch operand']
  %s0 = inlined_call_operand.vmem [shape: f32[32,32], index: 0, kind: input, shape index: {}]
  %s1 = inlined_call_operand.vmem [shape: f32[32,32], index: 1, kind: input, shape index: {}]
  %s2 = inlined_call_operand.vmem [shape: f32[1,32], index: 2, kind: input, shape index: {}]
  %s3 = inlined_call_operand.vmem [shape: f32[32,32], index: 3, kind: input, shape index: {}]
  %s4 = inlined_call_operand.vmem [shape: f32[32,32], index: 4, kind: output, shape index: {}]
  %s5 = sld [smem:[#allocation0]]
  $region34: #{transformer_block_forward.7} parent=0
    _
  %s7 = ssub.s32 1, %s5
  %s8 = scalar_select 0, %s7, %s5
  // Predicated region
  $region2: #{transformer_block_forward.7} parent=0 // pred_check
    _
  $region3: #{transformer_block_forward.7} parent=0 // pred_check_branch
    %10 = sbr.rel (0) target = $region5
  $region4: #{transformer_block_forward.7} parent=0 // pred_region
    _
  $region5: #{transformer_block_forward.7} parent=0 // pred_fallthru
    _
  // Predicated region
  $region6: #{transformer_block_forward.7} parent=0 // pred_check
    _
  $region7: #{transformer_block_forward.7} parent=0 // pred_check_branch
    %12 = sbr.rel (0) target = $region9
  $region8: #{transformer_block_forward.7} parent=0 // pred_region
    _
  $region9: #{transformer_block_forward.7} parent=0 // pred_fallthru
    _
  // Predicated region
  $region10: #{transformer_block_forward.7} parent=0 // pred_check
    _
  $region11: #{transformer_block_forward.7} parent=0 // pred_check_branch
    %14 = sbr.rel (0) target = $region13
  $region12: #{transformer_block_forward.7} parent=0 // pred_region
    _
  $region13: #{transformer_block_forward.7} parent=0 // pred_fallthru
    _
  // Predicated region
  $region14: #{transformer_block_forward.7} parent=0 // pred_check
    _
  $region15: #{transformer_block_forward.7} parent=0 // pred_check_branch
    %16 = sbr.rel (0) target = $region17
  $region16: #{transformer_block_forward.7} parent=0 // pred_region
    _
  $region17: #{transformer_block_forward.7} parent=0 // pred_fallthru
    _
  %p17 = scmp.eq.s32.totalorder 0, 0
  // Predicated region
  $region18: #{transformer_block_forward.7} parent=0 // pred_check
    %p18 = pneg %p17
  $region19: #{transformer_block_forward.7} parent=0 // pred_check_branch
    %20 = sbr.rel (%p18) target = $region21
  $region20: #{transformer_block_forward.7} parent=0 // pred_region
    %vm21 = vcmask 261120
    %22 = vst.msk [vmem:[#allocation2] sm:$0xff] %vm21, 0.0
    %23 = vst.msk [vmem:[#allocation2 + $0x8] sm:$0xff] %vm21, 0.0
    %24 = vst.msk [vmem:[#allocation2 + $0x10] sm:$0xff] %vm21, 0.0
    %25 = vst.msk [vmem:[#allocation2 + $0x18] sm:$0xff] %vm21, 0.0
  $region21: #{transformer_block_forward.7} parent=0 // pred_fallthru
    _
  %v26 = vld [vmem:[#allocation2] sm:$0xff]
  %v27 = vld [vmem:[#allocation2 + $0x8] sm:$0xff]
  %v28 = vld [vmem:[#allocation2 + $0x10] sm:$0xff]
  %v29 = vld [vmem:[#allocation2 + $0x18] sm:$0xff]
  %v30 = vld [vmem:[%s0] sm:$0xff]
  %v31 = vld [vmem:[%s0 + $0x8] sm:$0xff]
  %v32 = vld [vmem:[%s0 + $0x10] sm:$0xff]
  %v33 = vld [vmem:[%s0 + $0x18] sm:$0xff]
  %v34 = vld [vmem:[%s1] sm:$0xff]
  %v35 = vld [vmem:[%s1 + $0x8] sm:$0xff]
  %v36 = vld [vmem:[%s1 + $0x10] sm:$0xff]
  %v37 = vld [vmem:[%s1 + $0x18] sm:$0xff]
  %vm38 = vcmask 261120
  %v40 = vsel %vm38, %v30, 0
  %v43 = vsel %vm38, %v31, 0
  %v46 = vsel %vm38, %v32, 0
  %v49 = vsel %vm38, %v33, 0
  %51 = vmatpush.msra.mxu0 0.0
  %52 = vmatpush.msra.mxu0 0.0
  %53 = vmatpush.msra.mxu0 0.0
  %54 = vmatpush.msra.mxu0 0.0
  %55 = vmatpush.msra.mxu0 0.0
  %56 = vmatpush.msra.mxu0 0.0
  %57 = vmatpush.msra.mxu0 0.0
  %58 = vmatpush.msra.mxu0 0.0
  %59 = vmatpush.msra.mxu0 0.0
  %60 = vmatpush.msra.mxu0 0.0
  %61 = vmatpush.msra.mxu0 0.0
  %62 = vmatpush.msra.mxu0 0.0
  %63 = vmatpush.msra.mxu0 %v37
  %64 = vmatpush.msra.mxu0 %v36
  %65 = vmatpush.msra.mxu0 %v35
  %66 = vmatpush.msra.mxu0 %v34
  %67 = vmatmul.f32.gmra.mxu0 %v40
  %v68 = vpop.f32.mrf.mxu0
  %v69 = vadd.f32 0.0, %v68
  %70 = vmatmul.f32.gmra.mxu0 %v43
  %v71 = vpop.f32.mrf.mxu0
  %v72 = vadd.f32 0.0, %v71
  %73 = vmatmul.f32.gmra.mxu0 %v46
  %v74 = vpop.f32.mrf.mxu0
  %v75 = vadd.f32 0.0, %v74
  %76 = vmatmul.f32.gmra.mxu0 %v49
  %v77 = vpop.f32.mrf.mxu0
  %v78 = vadd.f32 0.0, %v77
  %79 = vdwg.mxu0
  %v80 = vadd.f32 %v26, %v69
  %v81 = vadd.f32 %v27, %v72
  %v82 = vadd.f32 %v28, %v75
  %v83 = vadd.f32 %v29, %v78
  %84 = vst.msk [vmem:[#allocation2] sm:$0xff] %vm38, %v80
  %85 = vst.msk [vmem:[#allocation2 + $0x8] sm:$0xff] %vm38, %v81
  %86 = vst.msk [vmem:[#allocation2 + $0x10] sm:$0xff] %vm38, %v82
  %87 = vst.msk [vmem:[#allocation2 + $0x18] sm:$0xff] %vm38, %v83
  // Predicated region
  $region22: #{transformer_block_forward.7} parent=0 // pred_check
    %p88 = pneg %p17
  $region23: #{transformer_block_forward.7} parent=0 // pred_check_branch
    %90 = sbr.rel (%p88) target = $region25
  $region24: #{transformer_block_forward.7} parent=0 // pred_region
    %v91 = vld [vmem:[#allocation2] sm:$0xff]
    %v92 = vld [vmem:[#allocation2 + $0x8] sm:$0xff]
    %v93 = vld [vmem:[#allocation2 + $0x10] sm:$0xff]
    %v94 = vld [vmem:[#allocation2 + $0x18] sm:$0xff]
    %v95 = vld [vmem:[%s2] sm:$0x1]
    %v97 = vperm.slane %v95, 0
    %v99 = vadd.f32 %v91, %v97
    %v100 = vadd.f32 %v92, %v97
    %v101 = vadd.f32 %v93, %v97
    %v102 = vadd.f32 %v94, %v97
    %v103 = vld [vmem:[%s3] sm:$0xff]
    %v104 = vld [vmem:[%s3 + $0x8] sm:$0xff]
    %v105 = vld [vmem:[%s3 + $0x10] sm:$0xff]
    %v106 = vld [vmem:[%s3 + $0x18] sm:$0xff]
    %v107 = vadd.f32 %v99, %v103
    %v108 = vadd.f32 %v100, %v104
    %v109 = vadd.f32 %v101, %v105
    %v110 = vadd.f32 %v102, %v106
    %111 = vst.msk [vmem:[%s4] sm:$0xff] %vm38, %v107
    %112 = vst.msk [vmem:[%s4 + $0x8] sm:$0xff] %vm38, %v108
    %113 = vst.msk [vmem:[%s4 + $0x10] sm:$0xff] %vm38, %v109
    %114 = vst.msk [vmem:[%s4 + $0x18] sm:$0xff] %vm38, %v110
  $region25: #{transformer_block_forward.7} parent=0 // pred_fallthru
    _
  // Predicated region
  $region26: #{transformer_block_forward.7} parent=0 // pred_check
    _
  $region27: #{transformer_block_forward.7} parent=0 // pred_check_branch
    %116 = sbr.rel (0) target = $region29
  $region28: #{transformer_block_forward.7} parent=0 // pred_region
    _
  $region29: #{transformer_block_forward.7} parent=0 // pred_fallthru
    _
  // Predicated region
  $region30: #{transformer_block_forward.7} parent=0 // pred_check
    _
  $region31: #{transformer_block_forward.7} parent=0 // pred_check_branch
    %118 = sbr.rel (0) target = $region33
  $region32: #{transformer_block_forward.7} parent=0 // pred_region
    _
  $region33: #{transformer_block_forward.7} parent=0 // pred_fallthru
    _

// kernel: transformer_block_forward.8
$region0: #{transformer_block_forward.8}
  #allocation0 [shape = 'u32[]', space=smem, size = 0x4, offset = 0x4, fixed_abs, tag = 'smem constant byte address 0x4 - core index']
  #allocation1 [shape = 'u32[72,128]{1,0:T(1,128)}', space=vmem, size = 0x9000, scoped, tag = 'internal scratch']
  #allocation2 [shape = 'f32[32,32]{1,0:T(8,128)}', space=vmem, size = 0x4000, scoped, tag = 'scratch operand']
  %s0 = inlined_call_operand.vmem [shape: f32[32,32], index: 0, kind: input, shape index: {}]
  %s1 = inlined_call_operand.vmem [shape: f32[1,32], index: 1, kind: input, shape index: {}]
  %s2 = inlined_call_operand.vmem [shape: f32[1,32], index: 2, kind: input, shape index: {}]
  %s3 = inlined_call_operand.vmem [shape: f32[32,128], index: 3, kind: input, shape index: {}]
  %s4 = inlined_call_operand.vmem [shape: f32[1,128], index: 4, kind: input, shape index: {}]
  %s5 = inlined_call_operand.vmem [shape: f32[32,128], index: 5, kind: output, shape index: {}]
  %s6 = sld [smem:[#allocation0]]
  $region34: #{transformer_block_forward.8} parent=0
    _
  %s8 = ssub.s32 1, %s6
  %s9 = scalar_select 0, %s8, %s6
  // Predicated region
  $region2: #{transformer_block_forward.8} parent=0 // pred_check
    _
  $region3: #{transformer_block_forward.8} parent=0 // pred_check_branch
    %11 = sbr.rel (0) target = $region5
  $region4: #{transformer_block_forward.8} parent=0 // pred_region
    _
  $region5: #{transformer_block_forward.8} parent=0 // pred_fallthru
    _
  // Predicated region
  $region6: #{transformer_block_forward.8} parent=0 // pred_check
    _
  $region7: #{transformer_block_forward.8} parent=0 // pred_check_branch
    %13 = sbr.rel (0) target = $region9
  $region8: #{transformer_block_forward.8} parent=0 // pred_region
    _
  $region9: #{transformer_block_forward.8} parent=0 // pred_fallthru
    _
  // Predicated region
  $region10: #{transformer_block_forward.8} parent=0 // pred_check
    _
  $region11: #{transformer_block_forward.8} parent=0 // pred_check_branch
    %15 = sbr.rel (0) target = $region13
  $region12: #{transformer_block_forward.8} parent=0 // pred_region
    _
  $region13: #{transformer_block_forward.8} parent=0 // pred_fallthru
    _
  // Predicated region
  $region14: #{transformer_block_forward.8} parent=0 // pred_check
    _
  $region15: #{transformer_block_forward.8} parent=0 // pred_check_branch
    %17 = sbr.rel (0) target = $region17
  $region16: #{transformer_block_forward.8} parent=0 // pred_region
    _
  $region17: #{transformer_block_forward.8} parent=0 // pred_fallthru
    _
  // Predicated region
  $region18: #{transformer_block_forward.8} parent=0 // pred_check
    _
  $region19: #{transformer_block_forward.8} parent=0 // pred_check_branch
    %19 = sbr.rel (0) target = $region21
  $region20: #{transformer_block_forward.8} parent=0 // pred_region
    _
  $region21: #{transformer_block_forward.8} parent=0 // pred_fallthru
    _
  %p20 = scmp.eq.s32.totalorder 0, 0
  // Predicated region
  $region22: #{transformer_block_forward.8} parent=0 // pred_check
    %p21 = pneg %p20
  $region23: #{transformer_block_forward.8} parent=0 // pred_check_branch
    %23 = sbr.rel (%p21) target = $region25
  $region24: #{transformer_block_forward.8} parent=0 // pred_region
    %v24 = vld [vmem:[%s0] sm:$0xff]
    %v25 = vld [vmem:[%s0 + $0x8] sm:$0xff]
    %v26 = vld [vmem:[%s0 + $0x10] sm:$0xff]
    %v27 = vld [vmem:[%s0 + $0x18] sm:$0xff]
    %vm28 = vcmask 261120
    %v29 = vsel %vm28, %v24, 0.0
    %30 = vadd.xlane.f32.xlu0 %v29
    %v31 = vpop.xlane.xlu0 %30
    %v32 = vsel %vm28, %v25, 0.0
    %33 = vadd.xlane.f32.xlu0 %v32
    %v34 = vpop.xlane.xlu0 %33
    %v35 = vsel %vm28, %v26, 0.0
    %36 = vadd.xlane.f32.xlu0 %v35
    %v37 = vpop.xlane.xlu0 %36
    %v38 = vsel %vm28, %v27, 0.0
    %39 = vadd.xlane.f32.xlu0 %v38
    %v40 = vpop.xlane.xlu0 %39
    %v41 = vrcp.pop 32.0
    %v42 = vmul.f32 32.0, %v41
    %v43 = vsub.f32 1.0, %v42
    %v44 = vmul.f32 %v41, %v43
    %v45 = vadd.f32 %v41, %v44
    %vm46 = vweird.f32 %v41
    %v47 = vsel %vm46, %v41, %v45
    %v48 = vmul.f32 %v31, %v47
    %v49 = vmul.f32 %v34, %v47
    %v50 = vmul.f32 %v37, %v47
    %v51 = vmul.f32 %v40, %v47
    %v52 = vsub.f32 %v24, %v48
    %v53 = vsub.f32 %v25, %v49
    %v54 = vsub.f32 %v26, %v50
    %v55 = vsub.f32 %v27, %v51
    %v56 = vmul.f32 %v52, %v52
    %v57 = vmul.f32 %v53, %v53
    %v58 = vmul.f32 %v54, %v54
    %v59 = vmul.f32 %v55, %v55
    %v60 = vsel %vm28, %v56, 0.0
    %61 = vadd.xlane.f32.xlu0 %v60
    %v62 = vpop.xlane.xlu0 %61
    %v63 = vsel %vm28, %v57, 0.0
    %64 = vadd.xlane.f32.xlu0 %v63
    %v65 = vpop.xlane.xlu0 %64
    %v66 = vsel %vm28, %v58, 0.0
    %67 = vadd.xlane.f32.xlu0 %v66
    %v68 = vpop.xlane.xlu0 %67
    %v69 = vsel %vm28, %v59, 0.0
    %70 = vadd.xlane.f32.xlu0 %v69
    %v71 = vpop.xlane.xlu0 %70
    %v72 = vmul.f32 %v62, %v47
    %v73 = vmul.f32 %v65, %v47
    %v74 = vmul.f32 %v68, %v47
    %v75 = vmul.f32 %v71, %v47
    %v76 = vadd.f32 %v72, 1e-05
    %v77 = vadd.f32 %v73, 1e-05
    %v78 = vadd.f32 %v74, 1e-05
    %v79 = vadd.f32 %v75, 1e-05
    %v80 = vrsqrt.pop %v76
    %v81 = vmul.f32 %v80, %v76
    %v82 = vmul.f32 %v81, %v80
    %v83 = vmul.f32 0.5, %v82
    %v84 = vsub.f32 1.5, %v83
    %v85 = vmul.f32 %v80, %v84
    %vm86 = vweird.f32 %v76
    %vm87 = vweird.f32 %v80
    %vm88 = vmor %vm86, %vm87
    %v89 = vsel %vm88, %v80, %v85
    %v90 = vrsqrt.pop %v77
    %v91 = vmul.f32 %v90, %v77
    %v92 = vmul.f32 %v91, %v90
    %v93 = vmul.f32 0.5, %v92
    %v94 = vsub.f32 1.5, %v93
    %v95 = vmul.f32 %v90, %v94
    %vm96 = vweird.f32 %v77
    %vm97 = vweird.f32 %v90
    %vm98 = vmor %vm96, %vm97
    %v99 = vsel %vm98, %v90, %v95
    %v100 = vrsqrt.pop %v78
    %v101 = vmul.f32 %v100, %v78
    %v102 = vmul.f32 %v101, %v100
    %v103 = vmul.f32 0.5, %v102
    %v104 = vsub.f32 1.5, %v103
    %v105 = vmul.f32 %v100, %v104
    %vm106 = vweird.f32 %v78
    %vm107 = vweird.f32 %v100
    %vm108 = vmor %vm106, %vm107
    %v109 = vsel %vm108, %v100, %v105
    %v110 = vrsqrt.pop %v79
    %v111 = vmul.f32 %v110, %v79
    %v112 = vmul.f32 %v111, %v110
    %v113 = vmul.f32 0.5, %v112
    %v114 = vsub.f32 1.5, %v113
    %v115 = vmul.f32 %v110, %v114
    %vm116 = vweird.f32 %v79
    %vm117 = vweird.f32 %v110
    %vm118 = vmor %vm116, %vm117
    %v119 = vsel %vm118, %v110, %v115
    %v120 = vmul.f32 %v52, %v89
    %v121 = vmul.f32 %v53, %v99
    %v122 = vmul.f32 %v54, %v109
    %v123 = vmul.f32 %v55, %v119
    %v124 = vld [vmem:[%s1] sm:$0x1]
    %v126 = vperm.slane %v124, 0
    %v128 = vmul.f32 %v120, %v126
    %v129 = vmul.f32 %v121, %v126
    %v130 = vmul.f32 %v122, %v126
    %v131 = vmul.f32 %v123, %v126
    %v132 = vld [vmem:[%s2] sm:$0x1]
    %v134 = vperm.slane %v132, 0
    %v136 = vadd.f32 %v128, %v134
    %v137 = vadd.f32 %v129, %v134
    %v138 = vadd.f32 %v130, %v134
    %v139 = vadd.f32 %v131, %v134
    %140 = vst.msk [vmem:[#allocation2] sm:$0xff] %vm28, %v136
    %141 = vst.msk [vmem:[#allocation2 + $0x8] sm:$0xff] %vm28, %v137
    %142 = vst.msk [vmem:[#allocation2 + $0x10] sm:$0xff] %vm28, %v138
    %143 = vst.msk [vmem:[#allocation2 + $0x18] sm:$0xff] %vm28, %v139
  $region25: #{transformer_block_forward.8} parent=0 // pred_fallthru
    _
  %v144 = vld [vmem:[#allocation2] sm:$0xff]
  %v145 = vld [vmem:[#allocation2 + $0x8] sm:$0xff]
  %v146 = vld [vmem:[#allocation2 + $0x10] sm:$0xff]
  %v147 = vld [vmem:[#allocation2 + $0x18] sm:$0xff]
  %v148 = vld [vmem:[%s3] sm:$0xff]
  %v149 = vld [vmem:[%s3 + $0x8] sm:$0xff]
  %v150 = vld [vmem:[%s3 + $0x10] sm:$0xff]
  %v151 = vld [vmem:[%s3 + $0x18] sm:$0xff]
  %v152 = vld [vmem:[%s4] sm:$0x1]
  %v154 = vperm.slane %v152, 0
  %vm156 = vcmask 261120
  %v158 = vsel %vm156, %v144, 0
  %v161 = vsel %vm156, %v145, 0
  %v164 = vsel %vm156, %v146, 0
  %v167 = vsel %vm156, %v147, 0
  %169 = vmatpush.msra.mxu0 0.0
  %170 = vmatpush.msra.mxu0 0.0
  %171 = vmatpush.msra.mxu0 0.0
  %172 = vmatpush.msra.mxu0 0.0
  %173 = vmatpush.msra.mxu0 0.0
  %174 = vmatpush.msra.mxu0 0.0
  %175 = vmatpush.msra.mxu0 0.0
  %176 = vmatpush.msra.mxu0 0.0
  %177 = vmatpush.msra.mxu0 0.0
  %178 = vmatpush.msra.mxu0 0.0
  %179 = vmatpush.msra.mxu0 0.0
  %180 = vmatpush.msra.mxu0 0.0
  %181 = vmatpush.msra.mxu0 %v151
  %182 = vmatpush.msra.mxu0 %v150
  %183 = vmatpush.msra.mxu0 %v149
  %184 = vmatpush.msra.mxu0 %v148
  %185 = vmatmul.f32.gmra.mxu0 %v158
  %v186 = vpop.f32.mrf.mxu0
  %v187 = vadd.f32 %v154, %v186
  %188 = vmatmul.f32.gmra.mxu0 %v161
  %v189 = vpop.f32.mrf.mxu0
  %v190 = vadd.f32 %v154, %v189
  %191 = vmatmul.f32.gmra.mxu0 %v164
  %v192 = vpop.f32.mrf.mxu0
  %v193 = vadd.f32 %v154, %v192
  %194 = vmatmul.f32.gmra.mxu0 %v167
  %v195 = vpop.f32.mrf.mxu0
  %v196 = vadd.f32 %v154, %v195
  %197 = vdwg.mxu0
  %v198 = vmul.f32 %v187, 0.5
  %v199 = vmul.f32 %v190, 0.5
  %v200 = vmul.f32 %v193, 0.5
  %v201 = vmul.f32 %v196, 0.5
  %v202 = vmul.f32 %v187, 0.70710677
  %v203 = vmul.f32 %v190, 0.70710677
  %v204 = vmul.f32 %v193, 0.70710677
  %v205 = vmul.f32 %v196, 0.70710677
  %v206 = vmul.f32 %v202, %v202
  %v207 = vmin.f32 16.0, %v206
  %v208 = vmul.f32 %v207, 2.1237322e-06
  %v209 = vadd.f32 %v208, 0.00028619796
  %v210 = vmul.f32 %v207, %v209
  %v211 = vadd.f32 %v210, 0.0036580483
  %v212 = vmul.f32 %v207, %v211
  %v213 = vadd.f32 %v212, 0.05243302
  %v214 = vmul.f32 %v207, %v213
  %v215 = vadd.f32 %v214, 0.18741608
  %v216 = vmul.f32 %v207, %v215
  %v217 = vadd.f32 %v216, 1.1283791
  %v218 = vmul.f32 %v202, %v217
  %v219 = vmul.f32 %v207, 3.8918573e-05
  %v220 = vadd.f32 %v219, 0.001143296
  %v221 = vmul.f32 %v207, %v220
  %v222 = vadd.f32 %v221, 0.014752088
  %v223 = vmul.f32 %v207, %v222
  %v224 = vadd.f32 %v223, 0.112945676
  %v225 = vmul.f32 %v207, %v224
  %v226 = vadd.f32 %v225, 0.4994258
  %v227 = vmul.f32 %v207, %v226
  %v228 = vadd.f32 %v227, 1.0
  %v229 = vrcp.pop %v228
  %v230 = vmul.f32 %v228, %v229
  %v231 = vsub.f32 1.0, %v230
  %v232 = vmul.f32 %v229, %v231
  %v233 = vadd.f32 %v229, %v232
  %vm234 = vweird.f32 %v228
  %vm235 = vweird.f32 %v229
  %vm236 = vmor %vm234, %vm235
  %v237 = vsel %vm236, %v229, %v233
  %v238 = vand.u32 2147483647, %v228
  %vm239 = vcmp.eq.f32.partialorder %v238, 8.507059e+37
  %v240 = vand.u32 %v228, 2147483648
  %v241 = vor.u32 1.1754944e-38, %v240
  %v242 = vsel %vm239, %v241, %v237
  %v243 = vmul.f32 %v218, %v242
  %v244 = vmin.f32 %v243, 1.0
  %v245 = vmax.f32 %v244, -1.0
  %v246 = vmul.f32 %v203, %v203
  %v247 = vmin.f32 16.0, %v246
  %v248 = vmul.f32 %v247, 2.1237322e-06
  %v249 = vadd.f32 %v248, 0.00028619796
  %v250 = vmul.f32 %v247, %v249
  %v251 = vadd.f32 %v250, 0.0036580483
  %v252 = vmul.f32 %v247, %v251
  %v253 = vadd.f32 %v252, 0.05243302
  %v254 = vmul.f32 %v247, %v253
  %v255 = vadd.f32 %v254, 0.18741608
  %v256 = vmul.f32 %v247, %v255
  %v257 = vadd.f32 %v256, 1.1283791
  %v258 = vmul.f32 %v203, %v257
  %v259 = vmul.f32 %v247, 3.8918573e-05
  %v260 = vadd.f32 %v259, 0.001143296
  %v261 = vmul.f32 %v247, %v260
  %v262 = vadd.f32 %v261, 0.014752088
  %v263 = vmul.f32 %v247, %v262
  %v264 = vadd.f32 %v263, 0.112945676
  %v265 = vmul.f32 %v247, %v264
  %v266 = vadd.f32 %v265, 0.4994258
  %v267 = vmul.f32 %v247, %v266
  %v268 = vadd.f32 %v267, 1.0
  %v269 = vrcp.pop %v268
  %v270 = vmul.f32 %v268, %v269
  %v271 = vsub.f32 1.0, %v270
  %v272 = vmul.f32 %v269, %v271
  %v273 = vadd.f32 %v269, %v272
  %vm274 = vweird.f32 %v268
  %vm275 = vweird.f32 %v269
  %vm276 = vmor %vm274, %vm275
  %v277 = vsel %vm276, %v269, %v273
  %v278 = vand.u32 2147483647, %v268
  %vm279 = vcmp.eq.f32.partialorder %v278, 8.507059e+37
  %v280 = vand.u32 %v268, 2147483648
  %v281 = vor.u32 1.1754944e-38, %v280
  %v282 = vsel %vm279, %v281, %v277
  %v283 = vmul.f32 %v258, %v282
  %v284 = vmin.f32 %v283, 1.0
  %v285 = vmax.f32 %v284, -1.0
  %v286 = vmul.f32 %v204, %v204
  %v287 = vmin.f32 16.0, %v286
  %v288 = vmul.f32 %v287, 2.1237322e-06
  %v289 = vadd.f32 %v288, 0.00028619796
  %v290 = vmul.f32 %v287, %v289
  %v291 = vadd.f32 %v290, 0.0036580483
  %v292 = vmul.f32 %v287, %v291
  %v293 = vadd.f32 %v292, 0.05243302
  %v294 = vmul.f32 %v287, %v293
  %v295 = vadd.f32 %v294, 0.18741608
  %v296 = vmul.f32 %v287, %v295
  %v297 = vadd.f32 %v296, 1.1283791
  %v298 = vmul.f32 %v204, %v297
  %v299 = vmul.f32 %v287, 3.8918573e-05
  %v300 = vadd.f32 %v299, 0.001143296
  %v301 = vmul.f32 %v287, %v300
  %v302 = vadd.f32 %v301, 0.014752088
  %v303 = vmul.f32 %v287, %v302
  %v304 = vadd.f32 %v303, 0.112945676
  %v305 = vmul.f32 %v287, %v304
  %v306 = vadd.f32 %v305, 0.4994258
  %v307 = vmul.f32 %v287, %v306
  %v308 = vadd.f32 %v307, 1.0
  %v309 = vrcp.pop %v308
  %v310 = vmul.f32 %v308, %v309
  %v311 = vsub.f32 1.0, %v310
  %v312 = vmul.f32 %v309, %v311
  %v313 = vadd.f32 %v309, %v312
  %vm314 = vweird.f32 %v308
  %vm315 = vweird.f32 %v309
  %vm316 = vmor %vm314, %vm315
  %v317 = vsel %vm316, %v309, %v313
  %v318 = vand.u32 2147483647, %v308
  %vm319 = vcmp.eq.f32.partialorder %v318, 8.507059e+37
  %v320 = vand.u32 %v308, 2147483648
  %v321 = vor.u32 1.1754944e-38, %v320
  %v322 = vsel %vm319, %v321, %v317
  %v323 = vmul.f32 %v298, %v322
  %v324 = vmin.f32 %v323, 1.0
  %v325 = vmax.f32 %v324, -1.0
  %v326 = vmul.f32 %v205, %v205
  %v327 = vmin.f32 16.0, %v326
  %v328 = vmul.f32 %v327, 2.1237322e-06
  %v329 = vadd.f32 %v328, 0.00028619796
  %v330 = vmul.f32 %v327, %v329
  %v331 = vadd.f32 %v330, 0.0036580483
  %v332 = vmul.f32 %v327, %v331
  %v333 = vadd.f32 %v332, 0.05243302
  %v334 = vmul.f32 %v327, %v333
  %v335 = vadd.f32 %v334, 0.18741608
  %v336 = vmul.f32 %v327, %v335
  %v337 = vadd.f32 %v336, 1.1283791
  %v338 = vmul.f32 %v205, %v337
  %v339 = vmul.f32 %v327, 3.8918573e-05
  %v340 = vadd.f32 %v339, 0.001143296
  %v341 = vmul.f32 %v327, %v340
  %v342 = vadd.f32 %v341, 0.014752088
  %v343 = vmul.f32 %v327, %v342
  %v344 = vadd.f32 %v343, 0.112945676
  %v345 = vmul.f32 %v327, %v344
  %v346 = vadd.f32 %v345, 0.4994258
  %v347 = vmul.f32 %v327, %v346
  %v348 = vadd.f32 %v347, 1.0
  %v349 = vrcp.pop %v348
  %v350 = vmul.f32 %v348, %v349
  %v351 = vsub.f32 1.0, %v350
  %v352 = vmul.f32 %v349, %v351
  %v353 = vadd.f32 %v349, %v352
  %vm354 = vweird.f32 %v348
  %vm355 = vweird.f32 %v349
  %vm356 = vmor %vm354, %vm355
  %v357 = vsel %vm356, %v349, %v353
  %v358 = vand.u32 2147483647, %v348
  %vm359 = vcmp.eq.f32.partialorder %v358, 8.507059e+37
  %v360 = vand.u32 %v348, 2147483648
  %v361 = vor.u32 1.1754944e-38, %v360
  %v362 = vsel %vm359, %v361, %v357
  %v363 = vmul.f32 %v338, %v362
  %v364 = vmin.f32 %v363, 1.0
  %v365 = vmax.f32 %v364, -1.0
  %v366 = vadd.f32 %v245, 1.0
  %v367 = vadd.f32 %v285, 1.0
  %v368 = vadd.f32 %v325, 1.0
  %v369 = vadd.f32 %v365, 1.0
  %v370 = vmul.f32 %v198, %v366
  %v371 = vmul.f32 %v199, %v367
  %v372 = vmul.f32 %v200, %v368
  %v373 = vmul.f32 %v201, %v369
  %374 = vst [vmem:[%s5] sm:$0xff] %v370
  %375 = vst [vmem:[%s5 + $0x8] sm:$0xff] %v371
  %376 = vst [vmem:[%s5 + $0x10] sm:$0xff] %v372
  %377 = vst [vmem:[%s5 + $0x18] sm:$0xff] %v373
  // Predicated region
  $region26: #{transformer_block_forward.8} parent=0 // pred_check
    _
  $region27: #{transformer_block_forward.8} parent=0 // pred_check_branch
    %379 = sbr.rel (0) target = $region29
  $region28: #{transformer_block_forward.8} parent=0 // pred_region
    _
  $region29: #{transformer_block_forward.8} parent=0 // pred_fallthru
    _
  // Predicated region
  $region30: #{transformer_block_forward.8} parent=0 // pred_check
    _
  $region31: #{transformer_block_forward.8} parent=0 // pred_check_branch
    %381 = sbr.rel (0) target = $region33
  $region32: #{transformer_block_forward.8} parent=0 // pred_region
    _
  $region33: #{transformer_block_forward.8} parent=0 // pred_fallthru
    _

// kernel: transformer_block_forward.9
$region0: #{transformer_block_forward.9}
  #allocation0 [shape = 'u32[]', space=smem, size = 0x4, offset = 0x4, fixed_abs, tag = 'smem constant byte address 0x4 - core index']
  #allocation1 [shape = 'u32[72,128]{1,0:T(1,128)}', space=vmem, size = 0x9000, scoped, tag = 'internal scratch']
  #allocation2 [shape = 'f32[32,32]{1,0:T(8,128)}', space=vmem, size = 0x4000, scoped, tag = 'scratch operand']
  %s0 = inlined_call_operand.vmem [shape: f32[32,128], index: 0, kind: input, shape index: {}]
  %s1 = inlined_call_operand.vmem [shape: f32[128,32], index: 1, kind: input, shape index: {}]
  %s2 = inlined_call_operand.vmem [shape: f32[1,32], index: 2, kind: input, shape index: {}]
  %s3 = inlined_call_operand.vmem [shape: f32[32,32], index: 3, kind: input, shape index: {}]
  %s4 = inlined_call_operand.hbm [shape: f32[32,32], index: 4, kind: output, shape index: {}]
  %s5 = sld [smem:[#allocation0]]
  $region34: #{transformer_block_forward.9} parent=0
    _
  %s7 = ssub.s32 1, %s5
  %s8 = scalar_select 0, %s7, %s5
  $region1: #{transformer_block_forward.9} parent=0
    #allocation3 [shape = 'u8[16384]{0}', space=vmem, size = 0x4000, scoped, tag = 'output window, operand 0, single buffered']
    #allocation4 [shape = 's32[1]{0}', space=sflag, size = 0x4, scoped, tag = 'scoped memory for transformer_block_forward.9']
    %9 = vsyncpa [#allocation4], 0
    // Predicated region
    $region2: #{transformer_block_forward.9} parent=1 // pred_check
      _
    $region3: #{transformer_block_forward.9} parent=1 // pred_check_branch
      %11 = sbr.rel (0) target = $region5
    $region4: #{transformer_block_forward.9} parent=1 // pred_region
      _
    $region5: #{transformer_block_forward.9} parent=1 // pred_fallthru
      _
    // Predicated region
    $region6: #{transformer_block_forward.9} parent=1 // pred_check
      _
    $region7: #{transformer_block_forward.9} parent=1 // pred_check_branch
      %13 = sbr.rel (0) target = $region9
    $region8: #{transformer_block_forward.9} parent=1 // pred_region
      _
    $region9: #{transformer_block_forward.9} parent=1 // pred_fallthru
      _
    // Predicated region
    $region10: #{transformer_block_forward.9} parent=1 // pred_check
      _
    $region11: #{transformer_block_forward.9} parent=1 // pred_check_branch
      %15 = sbr.rel (0) target = $region13
    $region12: #{transformer_block_forward.9} parent=1 // pred_region
      _
    $region13: #{transformer_block_forward.9} parent=1 // pred_fallthru
      _
    // Predicated region
    $region14: #{transformer_block_forward.9} parent=1 // pred_check
      _
    $region15: #{transformer_block_forward.9} parent=1 // pred_check_branch
      %17 = sbr.rel (0) target = $region17
    $region16: #{transformer_block_forward.9} parent=1 // pred_region
      _
    $region17: #{transformer_block_forward.9} parent=1 // pred_fallthru
      _
    %p18 = scmp.eq.s32.totalorder 0, 0
    // Predicated region
    $region18: #{transformer_block_forward.9} parent=1 // pred_check
      %p19 = pneg %p18
    $region19: #{transformer_block_forward.9} parent=1 // pred_check_branch
      %21 = sbr.rel (%p19) target = $region21
    $region20: #{transformer_block_forward.9} parent=1 // pred_region
      %vm22 = vcmask 261120
      %23 = vst.msk [vmem:[#allocation2] sm:$0xff] %vm22, 0.0
      %24 = vst.msk [vmem:[#allocation2 + $0x8] sm:$0xff] %vm22, 0.0
      %25 = vst.msk [vmem:[#allocation2 + $0x10] sm:$0xff] %vm22, 0.0
      %26 = vst.msk [vmem:[#allocation2 + $0x18] sm:$0xff] %vm22, 0.0
    $region21: #{transformer_block_forward.9} parent=1 // pred_fallthru
      _
    %v27 = vld [vmem:[#allocation2] sm:$0xff]
    %v28 = vld [vmem:[#allocation2 + $0x8] sm:$0xff]
    %v29 = vld [vmem:[#allocation2 + $0x10] sm:$0xff]
    %v30 = vld [vmem:[#allocation2 + $0x18] sm:$0xff]
    %v31 = vld [vmem:[%s0] sm:$0xff]
    %v32 = vld [vmem:[%s0 + $0x8] sm:$0xff]
    %v33 = vld [vmem:[%s0 + $0x10] sm:$0xff]
    %v34 = vld [vmem:[%s0 + $0x18] sm:$0xff]
    %v35 = vld [vmem:[%s1] sm:$0xff]
    %v36 = vld [vmem:[%s1 + $0x8] sm:$0xff]
    %v37 = vld [vmem:[%s1 + $0x10] sm:$0xff]
    %v38 = vld [vmem:[%s1 + $0x18] sm:$0xff]
    %v39 = vld [vmem:[%s1 + $0x20] sm:$0xff]
    %v40 = vld [vmem:[%s1 + $0x28] sm:$0xff]
    %v41 = vld [vmem:[%s1 + $0x30] sm:$0xff]
    %v42 = vld [vmem:[%s1 + $0x38] sm:$0xff]
    %v43 = vld [vmem:[%s1 + $0x40] sm:$0xff]
    %v44 = vld [vmem:[%s1 + $0x48] sm:$0xff]
    %v45 = vld [vmem:[%s1 + $0x50] sm:$0xff]
    %v46 = vld [vmem:[%s1 + $0x58] sm:$0xff]
    %v47 = vld [vmem:[%s1 + $0x60] sm:$0xff]
    %v48 = vld [vmem:[%s1 + $0x68] sm:$0xff]
    %v49 = vld [vmem:[%s1 + $0x70] sm:$0xff]
    %v50 = vld [vmem:[%s1 + $0x78] sm:$0xff]
    %51 = vmatpush.msra.mxu0 %v50
    %52 = vmatpush.msra.mxu0 %v49
    %53 = vmatpush.msra.mxu0 %v48
    %54 = vmatpush.msra.mxu0 %v47
    %55 = vmatpush.msra.mxu0 %v46
    %56 = vmatpush.msra.mxu0 %v45
    %57 = vmatpush.msra.mxu0 %v44
    %58 = vmatpush.msra.mxu0 %v43
    %59 = vmatpush.msra.mxu0 %v42
    %60 = vmatpush.msra.mxu0 %v41
    %61 = vmatpush.msra.mxu0 %v40
    %62 = vmatpush.msra.mxu0 %v39
    %63 = vmatpush.msra.mxu0 %v38
    %64 = vmatpush.msra.mxu0 %v37
    %65 = vmatpush.msra.mxu0 %v36
    %66 = vmatpush.msra.mxu0 %v35
    %67 = vmatmul.f32.gmra.mxu0 %v31
    %v68 = vpop.f32.mrf.mxu0
    %v69 = vadd.f32 0.0, %v68
    %70 = vmatmul.f32.gmra.mxu0 %v32
    %v71 = vpop.f32.mrf.mxu0
    %v72 = vadd.f32 0.0, %v71
    %73 = vmatmul.f32.gmra.mxu0 %v33
    %v74 = vpop.f32.mrf.mxu0
    %v75 = vadd.f32 0.0, %v74
    %76 = vmatmul.f32.gmra.mxu0 %v34
    %v77 = vpop.f32.mrf.mxu0
    %v78 = vadd.f32 0.0, %v77
    %79 = vdwg.mxu0
    %v80 = vadd.f32 %v27, %v69
    %v81 = vadd.f32 %v28, %v72
    %v82 = vadd.f32 %v29, %v75
    %v83 = vadd.f32 %v30, %v78
    %vm84 = vcmask 261120
    %85 = vst.msk [vmem:[#allocation2] sm:$0xff] %vm84, %v80
    %86 = vst.msk [vmem:[#allocation2 + $0x8] sm:$0xff] %vm84, %v81
    %87 = vst.msk [vmem:[#allocation2 + $0x10] sm:$0xff] %vm84, %v82
    %88 = vst.msk [vmem:[#allocation2 + $0x18] sm:$0xff] %vm84, %v83
    // Predicated region
    $region22: #{transformer_block_forward.9} parent=1 // pred_check
      %p89 = pneg %p18
    $region23: #{transformer_block_forward.9} parent=1 // pred_check_branch
      %91 = sbr.rel (%p89) target = $region25
    $region24: #{transformer_block_forward.9} parent=1 // pred_region
      %v92 = vld [vmem:[#allocation2] sm:$0xff]
      %v93 = vld [vmem:[#allocation2 + $0x8] sm:$0xff]
      %v94 = vld [vmem:[#allocation2 + $0x10] sm:$0xff]
      %v95 = vld [vmem:[#allocation2 + $0x18] sm:$0xff]
      %v96 = vld [vmem:[%s2] sm:$0x1]
      %v98 = vperm.slane %v96, 0
      %v100 = vadd.f32 %v92, %v98
      %v101 = vadd.f32 %v93, %v98
      %v102 = vadd.f32 %v94, %v98
      %v103 = vadd.f32 %v95, %v98
      %v104 = vld [vmem:[%s3] sm:$0xff]
      %v105 = vld [vmem:[%s3 + $0x8] sm:$0xff]
      %v106 = vld [vmem:[%s3 + $0x10] sm:$0xff]
      %v107 = vld [vmem:[%s3 + $0x18] sm:$0xff]
      %v108 = vadd.f32 %v100, %v104
      %v109 = vadd.f32 %v101, %v105
      %v110 = vadd.f32 %v102, %v106
      %v111 = vadd.f32 %v103, %v107
      %112 = vst.msk [vmem:[#allocation3] sm:$0xff] %vm84, %v108
      %113 = vst.msk [vmem:[#allocation3 + $0x8] sm:$0xff] %vm84, %v109
      %114 = vst.msk [vmem:[#allocation3 + $0x10] sm:$0xff] %vm84, %v110
      %115 = vst.msk [vmem:[#allocation3 + $0x18] sm:$0xff] %vm84, %v111
    $region25: #{transformer_block_forward.9} parent=1 // pred_fallthru
      _
    // Predicated region
    $region26: #{transformer_block_forward.9} parent=1 // pred_check
      _
    $region27: #{transformer_block_forward.9} parent=1 // pred_check_branch
      %117 = sbr.rel (0) target = $region29
    $region28: #{transformer_block_forward.9} parent=1 // pred_region
      %119 = vsyncadd [#allocation4], 0
      %s120 = sshll.u32 [#allocation3], 4
      %s121 = int_to_ptr.vmem [resolvable:$true] %s120
      %s122 = sshll.u32 %s4, 4
      %s123 = int_to_ptr.hbm [resolvable:$true] %s122
      %128 = dma.vmem_to_hbm [thread:$0]  %s121, 512, %s123, [#allocation4], 128, 128, 8
    $region29: #{transformer_block_forward.9} parent=1 // pred_fallthru
      _
    // Predicated region
    $region30: #{transformer_block_forward.9} parent=1 // pred_check
      _
    $region31: #{transformer_block_forward.9} parent=1 // pred_check_branch
      %130 = sbr.rel (0) target = $region33
    $region32: #{transformer_block_forward.9} parent=1 // pred_region
      %132 = dma.done [#allocation4], 512
    $region33: #{transformer_block_forward.9} parent=1 // pred_fallthru
      _
    %133 = vsyncpa [#allocation4], 1

// kernel: transformer_block_forward.6
$region0: #{transformer_block_forward.6}
  #allocation0 [shape = 'u32[]', space=smem, size = 0x4, offset = 0x4, fixed_abs, tag = 'smem constant byte address 0x4 - core index']
  #allocation1 [shape = 'u32[72,128]{1,0:T(1,128)}', space=vmem, size = 0x9000, scoped, tag = 'internal scratch']
  #allocation2 [shape = 'f32[16,40]{1,0:T(8,128)}', space=vmem, size = 0x2000, scoped, tag = 'scratch operand']
  %s0 = inlined_call_operand.vmem [shape: f32[3,2,16,32], index: 0, kind: input, shape index: {}, may-alias: {0,1,2}]
  %s1 = inlined_call_operand.vmem [shape: f32[3,2,16,32], index: 1, kind: input, shape index: {}, may-alias: {0,1,2}]
  %s2 = inlined_call_operand.vmem [shape: f32[3,2,16,32], index: 2, kind: input, shape index: {}, may-alias: {0,1,2}]
  %s3 = inlined_call_operand.vmem [shape: f32[32,4], index: 3, kind: input, shape index: {}]
  %s4 = inlined_call_operand.vmem [shape: f32[4,32], index: 4, kind: input, shape index: {}]
  %s5 = inlined_call_operand.vmem [shape: f32[2,32], index: 5, kind: input, shape index: {}]
  %s6 = inlined_call_operand.vmem [shape: f32[4,40], index: 6, kind: input, shape index: {}]
  %s7 = inlined_call_operand.vmem [shape: f32[32,40], index: 7, kind: input, shape index: {}]
  %s8 = inlined_call_operand.vmem [shape: f32[6,40], index: 8, kind: input, shape index: {}]
  %s9 = inlined_call_operand.vmem [shape: f32[2,16,32], index: 9, kind: output, shape index: {}]
  %s10 = sld [smem:[#allocation0]]
  $region73: #{transformer_block_forward.6} parent=0
    _
  %s12 = ssub.s32 1, %s10
  %s13 = scalar_select 0, %s12, %s10
  loop: start=0, step=1, limit=6
  $region2: #{transformer_block_forward.6} parent=0 // loop_pre_header
    _
  $region3: #{transformer_block_forward.6} parent=0 // loop_header
    %s15 = sphi 0, %s19
    %p16 = scmp.ge.s32.totalorder %s15, 6
    %s22 = sphi 0, %s34
    %s23 = sphi 0, %s30
    %s24 = sphi 0, %s22
    %s25 = sphi 0, %s23
    %s26 = sphi 0, %s24
    %s27 = sphi 0, %s25
    %s39 = sphi 0, %s41
    %s42 = sphi 0, %s39
    %s43 = sphi 0, %s42
    %s59 = sphi 0, %s43
    %s65 = sphi 0, %s67
    %s68 = sphi 0, %s65
    %s69 = sphi 0, %s68
    %s85 = sphi 0, %s69
    %s91 = sphi 0, %s93
    %s94 = sphi 0, %s91
    %s95 = sphi 0, %s94
    %s111 = sphi 0, %s95
    %s115 = sphi 0, %s115
    %s117 = sphi 0, %s115
    %s118 = sphi 0, %s117
    %s132 = sphi 0, %s118
    %s136 = sphi 0, %s136
    %s138 = sphi 0, %s136
    %s139 = sphi 0, %s138
    %s153 = sphi 0, %s139
    %s157 = sphi 0, %s157
    %s159 = sphi 0, %s157
    %s160 = sphi 0, %s159
    %s174 = sphi 0, %s160
    %s178 = sphi 0, %s178
    %s180 = sphi 0, %s178
    %s181 = sphi 0, %s180
    %s195 = sphi 0, %s181
    %s199 = sphi 0, %s199
    %s201 = sphi 0, %s199
    %s202 = sphi 0, %s201
    %s216 = sphi 0, %s202
    %s220 = sphi 0, %s220
    %s222 = sphi 0, %s220
    %s223 = sphi 0, %s222
    %s237 = sphi 0, %s223
    %s245 = sphi 0, %s247
    %s248 = sphi 0, %s245
    %s249 = sphi 0, %s248
    %s265 = sphi 0, %s249
  $region4: #{transformer_block_forward.6} parent=0 // loop_header_branch
    %18 = sbr.rel (%p16) target = $region8
  $region5: #{transformer_block_forward.6} parent=0 // loop_body
    %s20 = ssub.s32 %s15, 1
    %s21 = ssub.s32 %s15, 2
    %s28 = sadd.s32 1, %s23
    %p29 = scmp.ge.s32.totalorder %s28, 2
    %s30 = scalar_select %p29, 0, %s28
    %s31 = sadd.s32 1, %s22
    %s32 = scalar_select %p29, %s31, %s22
    %p33 = scmp.ge.s32.totalorder %s32, 2
    %s34 = scalar_select %p33, 0, %s32
    %s35 = ssub.s32 %s22, %s34
    %s36 = ssub.s32 %s23, %s30
    %s37 = sor.u32 %s35, %s36
    %p38 = scmp.eq.s32.totalorder %s37, 0
    %s40 = sadd.s32 %s39, 1
    %s41 = scalar_select %p38, %s39, %s40
    %p44 = pneg %p38
    %p45 = scmp.eq.s32.totalorder %s15, 3
    %p46 = por %p44, %p45
    %p47 = scmp.ne.s32.totalorder %s39, %s42
    %p48 = scmp.eq.s32.totalorder %s15, 0
    %p49 = por %p47, %p48
    %p50 = scmp.ne.s32.totalorder %s39, %s42
    %p51 = scmp.eq.s32.totalorder %s20, 3
    %p52 = por %p50, %p51
    %p53 = scmp.ne.s32.totalorder %s42, %s43
    %p54 = scmp.eq.s32.totalorder %s20, 0
    %p55 = por %p53, %p54
    %p56 = scmp.ne.s32.totalorder %s42, %s43
    %p57 = scmp.eq.s32.totalorder %s21, 3
    %p58 = por %p56, %p57
    %p60 = scmp.ne.s32.totalorder %s43, %s59
    %p61 = scmp.eq.s32.totalorder %s21, 0
    %p62 = por %p60, %p61
    %s63 = ssub.s32 %s22, %s34
    %p64 = scmp.eq.s32.totalorder %s63, 0
    %s66 = sadd.s32 %s65, 1
    %s67 = scalar_select %p64, %s65, %s66
    %p70 = pneg %p64
    %p71 = scmp.eq.s32.totalorder %s15, 3
    %p72 = por %p70, %p71
    %p73 = scmp.ne.s32.totalorder %s65, %s68
    %p74 = scmp.eq.s32.totalorder %s15, 0
    %p75 = por %p73, %p74
    %p76 = scmp.ne.s32.totalorder %s65, %s68
    %p77 = scmp.eq.s32.totalorder %s20, 3
    %p78 = por %p76, %p77
    %p79 = scmp.ne.s32.totalorder %s68, %s69
    %p80 = scmp.eq.s32.totalorder %s20, 0
    %p81 = por %p79, %p80
    %p82 = scmp.ne.s32.totalorder %s68, %s69
    %p83 = scmp.eq.s32.totalorder %s21, 3
    %p84 = por %p82, %p83
    %p86 = scmp.ne.s32.totalorder %s69, %s85
    %p87 = scmp.eq.s32.totalorder %s21, 0
    %p88 = por %p86, %p87
    %s89 = ssub.s32 %s22, %s34
    %p90 = scmp.eq.s32.totalorder %s89, 0
    %s92 = sadd.s32 %s91, 1
    %s93 = scalar_select %p90, %s91, %s92
    %p96 = pneg %p90
    %p97 = scmp.eq.s32.totalorder %s15, 3
    %p98 = por %p96, %p97
    %p99 = scmp.ne.s32.totalorder %s91, %s94
    %p100 = scmp.eq.s32.totalorder %s15, 0
    %p101 = por %p99, %p100
    %p102 = scmp.ne.s32.totalorder %s91, %s94
    %p103 = scmp.eq.s32.totalorder %s20, 3
    %p104 = por %p102, %p103
    %p105 = scmp.ne.s32.totalorder %s94, %s95
    %p106 = scmp.eq.s32.totalorder %s20, 0
    %p107 = por %p105, %p106
    %p108 = scmp.ne.s32.totalorder %s94, %s95
    %p109 = scmp.eq.s32.totalorder %s21, 3
    %p110 = por %p108, %p109
    %p112 = scmp.ne.s32.totalorder %s95, %s111
    %p113 = scmp.eq.s32.totalorder %s21, 0
    %p114 = por %p112, %p113
    %s116 = sadd.s32 %s115, 1
    %p119 = scmp.eq.s32.totalorder %s15, 3
    %p120 = scmp.ne.s32.totalorder %s115, %s117
    %p121 = scmp.eq.s32.totalorder %s15, 0
    %p122 = por %p120, %p121
    %p123 = scmp.ne.s32.totalorder %s115, %s117
    %p124 = scmp.eq.s32.totalorder %s20, 3
    %p125 = por %p123, %p124
    %p126 = scmp.ne.s32.totalorder %s117, %s118
    %p127 = scmp.eq.s32.totalorder %s20, 0
    %p128 = por %p126, %p127
    %p129 = scmp.ne.s32.totalorder %s117, %s118
    %p130 = scmp.eq.s32.totalorder %s21, 3
    %p131 = por %p129, %p130
    %p133 = scmp.ne.s32.totalorder %s118, %s132
    %p134 = scmp.eq.s32.totalorder %s21, 0
    %p135 = por %p133, %p134
    %s137 = sadd.s32 %s136, 1
    %p140 = scmp.eq.s32.totalorder %s15, 3
    %p141 = scmp.ne.s32.totalorder %s136, %s138
    %p142 = scmp.eq.s32.totalorder %s15, 0
    %p143 = por %p141, %p142
    %p144 = scmp.ne.s32.totalorder %s136, %s138
    %p145 = scmp.eq.s32.totalorder %s20, 3
    %p146 = por %p144, %p145
    %p147 = scmp.ne.s32.totalorder %s138, %s139
    %p148 = scmp.eq.s32.totalorder %s20, 0
    %p149 = por %p147, %p148
    %p150 = scmp.ne.s32.totalorder %s138, %s139
    %p151 = scmp.eq.s32.totalorder %s21, 3
    %p152 = por %p150, %p151
    %p154 = scmp.ne.s32.totalorder %s139, %s153
    %p155 = scmp.eq.s32.totalorder %s21, 0
    %p156 = por %p154, %p155
    %s158 = sadd.s32 %s157, 1
    %p161 = scmp.eq.s32.totalorder %s15, 3
    %p162 = scmp.ne.s32.totalorder %s157, %s159
    %p163 = scmp.eq.s32.totalorder %s15, 0
    %p164 = por %p162, %p163
    %p165 = scmp.ne.s32.totalorder %s157, %s159
    %p166 = scmp.eq.s32.totalorder %s20, 3
    %p167 = por %p165, %p166
    %p168 = scmp.ne.s32.totalorder %s159, %s160
    %p169 = scmp.eq.s32.totalorder %s20, 0
    %p170 = por %p168, %p169
    %p171 = scmp.ne.s32.totalorder %s159, %s160
    %p172 = scmp.eq.s32.totalorder %s21, 3
    %p173 = por %p171, %p172
    %p175 = scmp.ne.s32.totalorder %s160, %s174
    %p176 = scmp.eq.s32.totalorder %s21, 0
    %p177 = por %p175, %p176
    %s179 = sadd.s32 %s178, 1
    %p182 = scmp.eq.s32.totalorder %s15, 3
    %p183 = scmp.ne.s32.totalorder %s178, %s180
    %p184 = scmp.eq.s32.totalorder %s15, 0
    %p185 = por %p183, %p184
    %p186 = scmp.ne.s32.totalorder %s178, %s180
    %p187 = scmp.eq.s32.totalorder %s20, 3
    %p188 = por %p186, %p187
    %p189 = scmp.ne.s32.totalorder %s180, %s181
    %p190 = scmp.eq.s32.totalorder %s20, 0
    %p191 = por %p189, %p190
    %p192 = scmp.ne.s32.totalorder %s180, %s181
    %p193 = scmp.eq.s32.totalorder %s21, 3
    %p194 = por %p192, %p193
    %p196 = scmp.ne.s32.totalorder %s181, %s195
    %p197 = scmp.eq.s32.totalorder %s21, 0
    %p198 = por %p196, %p197
    %s200 = sadd.s32 %s199, 1
    %p203 = scmp.eq.s32.totalorder %s15, 3
    %p204 = scmp.ne.s32.totalorder %s199, %s201
    %p205 = scmp.eq.s32.totalorder %s15, 0
    %p206 = por %p204, %p205
    %p207 = scmp.ne.s32.totalorder %s199, %s201
    %p208 = scmp.eq.s32.totalorder %s20, 3
    %p209 = por %p207, %p208
    %p210 = scmp.ne.s32.totalorder %s201, %s202
    %p211 = scmp.eq.s32.totalorder %s20, 0
    %p212 = por %p210, %p211
    %p213 = scmp.ne.s32.totalorder %s201, %s202
    %p214 = scmp.eq.s32.totalorder %s21, 3
    %p215 = por %p213, %p214
    %p217 = scmp.ne.s32.totalorder %s202, %s216
    %p218 = scmp.eq.s32.totalorder %s21, 0
    %p219 = por %p217, %p218
    %s221 = sadd.s32 %s220, 1
    %p224 = scmp.eq.s32.totalorder %s15, 3
    %p225 = scmp.ne.s32.totalorder %s220, %s222
    %p226 = scmp.eq.s32.totalorder %s15, 0
    %p227 = por %p225, %p226
    %p228 = scmp.ne.s32.totalorder %s220, %s222
    %p229 = scmp.eq.s32.totalorder %s20, 3
    %p230 = por %p228, %p229
    %p231 = scmp.ne.s32.totalorder %s222, %s223
    %p232 = scmp.eq.s32.totalorder %s20, 0
    %p233 = por %p231, %p232
    %p234 = scmp.ne.s32.totalorder %s222, %s223
    %p235 = scmp.eq.s32.totalorder %s21, 3
    %p236 = por %p234, %p235
    %p238 = scmp.ne.s32.totalorder %s223, %s237
    %p239 = scmp.eq.s32.totalorder %s21, 0
    %p240 = por %p238, %p239
    %s241 = ssub.s32 %s22, %s34
    %s242 = ssub.s32 %s23, %s30
    %s243 = sor.u32 %s241, %s242
    %p244 = scmp.eq.s32.totalorder %s243, 0
    %s246 = sadd.s32 %s245, 1
    %s247 = scalar_select %p244, %s245, %s246
    %p250 = pneg %p244
    %p251 = scmp.eq.s32.totalorder %s15, 3
    %p252 = por %p250, %p251
    %p253 = scmp.ne.s32.totalorder %s245, %s248
    %p254 = scmp.eq.s32.totalorder %s15, 0
    %p255 = por %p253, %p254
    %p256 = scmp.ne.s32.totalorder %s245, %s248
    %p257 = scmp.eq.s32.totalorder %s20, 3
    %p258 = por %p256, %p257
    %p259 = scmp.ne.s32.totalorder %s248, %s249
    %p260 = scmp.eq.s32.totalorder %s20, 0
    %p261 = por %p259, %p260
    %p262 = scmp.ne.s32.totalorder %s248, %s249
    %p263 = scmp.eq.s32.totalorder %s21, 3
    %p264 = por %p262, %p263
    %p266 = scmp.ne.s32.totalorder %s249, %s265
    %p267 = scmp.eq.s32.totalorder %s21, 0
    %p268 = por %p266, %p267
    %p269 = scmp.le.s32.totalorder 1, %s15
    %p270 = scmp.lt.s32.totalorder %s15, 5
    %p271 = pnand %p269, %p270
    %p272 = pneg %p271
    // Predicated region
    $region9: #{transformer_block_forward.6} parent=5 // pred_check
      _
    $region10: #{transformer_block_forward.6} parent=5 // pred_check_branch
      %274 = sbr.rel (%p271) target = $region12
    $region11: #{transformer_block_forward.6} parent=5 // pred_region
      %s275 = ssub.s32 %s15, 1
      // Predicated region
      $region13: #{transformer_block_forward.6} parent=11 // pred_check
        %p276 = pneg %p128
      $region14: #{transformer_block_forward.6} parent=11 // pred_check_branch
        %278 = sbr.rel (%p276) target = $region16
      $region15: #{transformer_block_forward.6} parent=11 // pred_region
        _
      $region16: #{transformer_block_forward.6} parent=11 // pred_fallthru
        _
      // Predicated region
      $region17: #{transformer_block_forward.6} parent=11 // pred_check
        %p279 = pneg %p149
      $region18: #{transformer_block_forward.6} parent=11 // pred_check_branch
        %281 = sbr.rel (%p279) target = $region20
      $region19: #{transformer_block_forward.6} parent=11 // pred_region
        _
      $region20: #{transformer_block_forward.6} parent=11 // pred_fallthru
        _
      // Predicated region
      $region21: #{transformer_block_forward.6} parent=11 // pred_check
        %p282 = pneg %p170
      $region22: #{transformer_block_forward.6} parent=11 // pred_check_branch
        %284 = sbr.rel (%p282) target = $region24
      $region23: #{transformer_block_forward.6} parent=11 // pred_region
        _
      $region24: #{transformer_block_forward.6} parent=11 // pred_fallthru
        _
      // Predicated region
      $region25: #{transformer_block_forward.6} parent=11 // pred_check
        %p285 = pneg %p191
      $region26: #{transformer_block_forward.6} parent=11 // pred_check_branch
        %287 = sbr.rel (%p285) target = $region28
      $region27: #{transformer_block_forward.6} parent=11 // pred_region
        _
      $region28: #{transformer_block_forward.6} parent=11 // pred_fallthru
        _
      // Predicated region
      $region29: #{transformer_block_forward.6} parent=11 // pred_check
        %p288 = pneg %p212
      $region30: #{transformer_block_forward.6} parent=11 // pred_check_branch
        %290 = sbr.rel (%p288) target = $region32
      $region31: #{transformer_block_forward.6} parent=11 // pred_region
        _
      $region32: #{transformer_block_forward.6} parent=11 // pred_fallthru
        _
      // Predicated region
      $region33: #{transformer_block_forward.6} parent=11 // pred_check
        %p291 = pneg %p233
      $region34: #{transformer_block_forward.6} parent=11 // pred_check_branch
        %293 = sbr.rel (%p291) target = $region36
      $region35: #{transformer_block_forward.6} parent=11 // pred_region
        _
      $region36: #{transformer_block_forward.6} parent=11 // pred_fallthru
        _
    $region12: #{transformer_block_forward.6} parent=5 // pred_fallthru
      _
    %p294 = scmp.lt.s32.totalorder %s15, 4
    // Predicated region
    $region37: #{transformer_block_forward.6} parent=5 // pred_check
      %p295 = pneg %p294
    $region38: #{transformer_block_forward.6} parent=5 // pred_check_branch
      %297 = sbr.rel (%p295) target = $region40
    $region39: #{transformer_block_forward.6} parent=5 // pred_region
      // Predicated region
      $region41: #{transformer_block_forward.6} parent=39 // pred_check
        %p298 = pneg %p49
      $region42: #{transformer_block_forward.6} parent=39 // pred_check_branch
        %300 = sbr.rel (%p298) target = $region44
      $region43: #{transformer_block_forward.6} parent=39 // pred_region
        %p301 = scmp.lt.s32.totalorder %s22, 1
        %s302 = scalar_select %p301, %s22, 1
        %p303 = scmp.lt.s32.totalorder %s23, 1
        %s304 = scalar_select %p303, %s23, 1
        %s305 = smul.addr %s302, 2
        %s306 = sadd.s32 %s304, %s305
        %s307 = smul.addr %s306, 8
        %s308 = scalar_lea.vmem %s0, %s307
      $region44: #{transformer_block_forward.6} parent=39 // pred_fallthru
        _
      // Predicated region
      $region45: #{transformer_block_forward.6} parent=39 // pred_check
        %p309 = pneg %p75
      $region46: #{transformer_block_forward.6} parent=39 // pred_check_branch
        %311 = sbr.rel (%p309) target = $region48
      $region47: #{transformer_block_forward.6} parent=39 // pred_region
        %p312 = scmp.lt.s32.totalorder %s22, 1
        %s313 = scalar_select %p312, %s22, 1
        %s314 = smul.addr %s313, 2
        %s315 = sadd.s32 %s314, 4
        %s316 = smul.addr %s315, 8
        %s317 = scalar_lea.vmem %s1, %s316
      $region48: #{transformer_block_forward.6} parent=39 // pred_fallthru
        _
      // Predicated region
      $region49: #{transformer_block_forward.6} parent=39 // pred_check
        %p318 = pneg %p101
      $region50: #{transformer_block_forward.6} parent=39 // pred_check_branch
        %320 = sbr.rel (%p318) target = $region52
      $region51: #{transformer_block_forward.6} parent=39 // pred_region
        %p321 = scmp.lt.s32.totalorder %s22, 1
        %s322 = scalar_select %p321, %s22, 1
        %s323 = smul.addr %s322, 2
        %s324 = sadd.s32 %s323, 8
        %s325 = smul.addr %s324, 8
        %s326 = scalar_lea.vmem %s2, %s325
      $region52: #{transformer_block_forward.6} parent=39 // pred_fallthru
        _
    $region40: #{transformer_block_forward.6} parent=5 // pred_fallthru
      _
    %p327 = scmp.le.s32.totalorder 1, %s15
    %p328 = scmp.lt.s32.totalorder %s15, 5
    %p329 = pnand %p327, %p328
    %p330 = pneg %p329
    // Predicated region
    $region53: #{transformer_block_forward.6} parent=5 // pred_check
      _
    $region54: #{transformer_block_forward.6} parent=5 // pred_check_branch
      %332 = sbr.rel (%p329) target = $region56
    $region55: #{transformer_block_forward.6} parent=5 // pred_region
      %s333 = ssub.s32 %s15, 1
      %p334 = scmp.lt.s32.totalorder %s24, 1
      %s335 = scalar_select %p334, %s24, 1
      %p336 = scmp.lt.s32.totalorder %s25, 1
      %s337 = scalar_select %p336, %s25, 1
      %s338 = smul.addr %s335, 2
      %s339 = sadd.s32 %s337, %s338
      %s340 = smul.addr %s339, 8
      %s341 = scalar_lea.vmem %s0, %s340
      %p342 = pneg %p55
      %p343 = pneg %p52
      %p344 = scmp.lt.s32.totalorder %s24, 1
      %s345 = scalar_select %p344, %s24, 1
      %s346 = smul.addr %s345, 2
      %s347 = sadd.s32 %s346, 4
      %s348 = smul.addr %s347, 8
      %s349 = scalar_lea.vmem %s1, %s348
      %p350 = pneg %p81
      %p351 = pneg %p78
      %p352 = scmp.lt.s32.totalorder %s24, 1
      %s353 = scalar_select %p352, %s24, 1
      %s354 = smul.addr %s353, 2
      %s355 = sadd.s32 %s354, 8
      %s356 = smul.addr %s355, 8
      %s357 = scalar_lea.vmem %s2, %s356
      %p358 = pneg %p107
      %p359 = pneg %p104
      %p360 = pneg %p128
      %p361 = pneg %p125
      %p362 = pneg %p149
      %p363 = pneg %p146
      %p364 = pneg %p170
      %p365 = pneg %p167
      %p366 = pneg %p191
      %p367 = pneg %p188
      %p368 = pneg %p212
      %p369 = pneg %p209
      %p370 = pneg %p233
      %p371 = pneg %p230
      %p372 = pneg %p261
      %p373 = pneg %p258
      %p374 = scmp.lt.s32.totalorder %s24, 1
      %s375 = scalar_select %p374, %s24, 1
      %p376 = scmp.lt.s32.totalorder %s25, 1
      %s377 = scalar_select %p376, %s25, 1
      %s378 = smul.addr %s375, 2
      %s379 = sadd.s32 %s377, %s378
      %s380 = smul.addr %s379, 8
      %s381 = scalar_lea.vmem %s9, %s380
      %p382 = scmp.lt.s32.totalorder %s24, 1
      %s383 = scalar_select %p382, %s24, 1
      %p384 = scmp.lt.s32.totalorder %s25, 1
      %s385 = scalar_select %p384, %s25, 1
      %s386 = smul.addr %s383, 2
      %s387 = sadd.s32 %s385, %s386
      %s388 = smul.addr %s387, 8
      %s389 = scalar_lea.vmem %s0, %s388
      %p390 = scmp.lt.s32.totalorder %s24, 1
      %s391 = scalar_select %p390, %s24, 1
      %s392 = smul.addr %s391, 2
      %s393 = sadd.s32 %s392, 4
      %s394 = smul.addr %s393, 8
      %s395 = scalar_lea.vmem %s1, %s394
      %p396 = scmp.lt.s32.totalorder %s24, 1
      %s397 = scalar_select %p396, %s24, 1
      %s398 = smul.addr %s397, 2
      %s399 = sadd.s32 %s398, 8
      %s400 = smul.addr %s399, 8
      %s401 = scalar_lea.vmem %s2, %s400
      %p402 = scmp.lt.s32.totalorder %s24, 1
      %s403 = scalar_select %p402, %s24, 1
      %p404 = scmp.lt.s32.totalorder %s25, 1
      %s405 = scalar_select %p404, %s25, 1
      %s406 = smul.addr %s403, 2
      %s407 = sadd.s32 %s405, %s406
      %s408 = smul.addr %s407, 8
      %s409 = scalar_lea.vmem %s9, %s408
      %v410 = vld [vmem:[%s3] sm:$0xff]
      %v411 = vld [vmem:[%s3 + $0x8] sm:$0xff]
      %v412 = vld [vmem:[%s3 + $0x10] sm:$0xff]
      %v413 = vld [vmem:[%s3 + $0x18] sm:$0xff]
      %v414 = vld [vmem:[%s4] sm:$0xf]
      %v415 = vld [vmem:[%s5] sm:$0x3]
      %v416 = vld [vmem:[%s6] sm:$0xf]
      %v417 = vld [vmem:[%s7] sm:$0xff]
      %v418 = vld [vmem:[%s7 + $0x8] sm:$0xff]
      %v419 = vld [vmem:[%s7 + $0x10] sm:$0xff]
      %v420 = vld [vmem:[%s7 + $0x18] sm:$0xff]
      %v421 = vld [vmem:[%s8] sm:$0x3f]
      %vm422 = vcmp.gt.f32.partialorder %v421, 0.5
      %p423 = scmp.eq.s32.totalorder %s25, 0
      // Predicated region
      $region57: #{transformer_block_forward.6} parent=55 // pred_check
        %p424 = pneg %p423
      $region58: #{transformer_block_forward.6} parent=55 // pred_check_branch
        %426 = sbr.rel (%p424) target = $region60
      $region59: #{transformer_block_forward.6} parent=55 // pred_region
        %v427 = vld [vmem:[%s395] sm:$0xff]
        %v428 = vld [vmem:[%s395 + $0x8] sm:$0xff]
        %vm429 = vcmask 261120
        %v431 = vsel %vm429, %v427, 0
        %v434 = vsel %vm429, %v428, 0
        %436 = vmatpush.msra.mxu0 0.0
        %437 = vmatpush.msra.mxu0 0.0
        %438 = vmatpush.msra.mxu0 0.0
        %439 = vmatpush.msra.mxu0 0.0
        %440 = vmatpush.msra.mxu0 0.0
        %441 = vmatpush.msra.mxu0 0.0
        %442 = vmatpush.msra.mxu0 0.0
        %443 = vmatpush.msra.mxu0 0.0
        %444 = vmatpush.msra.mxu0 0.0
        %445 = vmatpush.msra.mxu0 0.0
        %446 = vmatpush.msra.mxu0 0.0
        %447 = vmatpush.msra.mxu0 0.0
        %448 = vmatpush.msra.mxu0 %v413
        %449 = vmatpush.msra.mxu0 %v412
        %450 = vmatpush.msra.mxu0 %v411
        %451 = vmatpush.msra.mxu0 %v410
        %452 = vmatmul.f32.gmra.mxu0 %v431
        %v453 = vpop.f32.mrf.mxu0
        %v454 = vadd.f32 0.0, %v453
        %455 = vmatmul.f32.gmra.mxu0 %v434
        %v456 = vpop.f32.mrf.mxu0
        %v457 = vadd.f32 0.0, %v456
        %458 = vdwg.mxu0
        %v459 = vmul.f32 %v427, %v427
        %v460 = vmul.f32 %v428, %v428
        %v462 = vsel %vm429, %v459, 0
        %v465 = vsel %vm429, %v460, 0
        %467 = vmatpush.msra.mxu0 0.0
        %468 = vmatpush.msra.mxu0 0.0
        %469 = vmatpush.msra.mxu0 0.0
        %470 = vmatpush.msra.mxu0 0.0
        %471 = vmatpush.msra.mxu0 0.0
        %472 = vmatpush.msra.mxu0 0.0
        %473 = vmatpush.msra.mxu0 0.0
        %474 = vmatpush.msra.mxu0 0.0
        %475 = vmatpush.msra.mxu0 0.0
        %476 = vmatpush.msra.mxu0 0.0
        %477 = vmatpush.msra.mxu0 0.0
        %478 = vmatpush.msra.mxu0 0.0
        %479 = vmatpush.msra.mxu0 %v413
        %480 = vmatpush.msra.mxu0 %v412
        %481 = vmatpush.msra.mxu0 %v411
        %482 = vmatpush.msra.mxu0 %v410
        %483 = vmatmul.f32.gmra.mxu0 %v462
        %v484 = vpop.f32.mrf.mxu0
        %v485 = vadd.f32 0.0, %v484
        %486 = vmatmul.f32.gmra.mxu0 %v465
        %v487 = vpop.f32.mrf.mxu0
        %v488 = vadd.f32 0.0, %v487
        %489 = vdwg.mxu0
        %v490 = vmul.f32 %v454, %v454
        %v491 = vmul.f32 %v457, %v457
        %v492 = vsub.f32 %v485, %v490
        %v493 = vsub.f32 %v488, %v491
        %v494 = vmax.f32 %v492, 0.0
        %v495 = vmax.f32 %v493, 0.0
        %v496 = vadd.f32 %v494, 1e-05
        %v497 = vadd.f32 %v495, 1e-05
        %v498 = vrsqrt.pop %v496
        %v499 = vmul.f32 %v498, %v496
        %v500 = vmul.f32 %v499, %v498
        %v501 = vmul.f32 0.5, %v500
        %v502 = vsub.f32 1.5, %v501
        %v503 = vmul.f32 %v498, %v502
        %vm504 = vweird.f32 %v496
        %vm505 = vweird.f32 %v498
        %vm506 = vmor %vm504, %vm505
        %v507 = vsel %vm506, %v498, %v503
        %v508 = vrsqrt.pop %v497
        %v509 = vmul.f32 %v508, %v497
        %v510 = vmul.f32 %v509, %v508
        %v511 = vmul.f32 0.5, %v510
        %v512 = vsub.f32 1.5, %v511
        %v513 = vmul.f32 %v508, %v512
        %vm514 = vweird.f32 %v497
        %vm515 = vweird.f32 %v508
        %vm516 = vmor %vm514, %vm515
        %v517 = vsel %vm516, %v508, %v513
        %vm518 = vcmask 31744
        %v520 = vsel %vm518, %v454, 0
        %v523 = vsel %vm518, %v457, 0
        %vm525 = vcmask 1043456
        %v527 = vsel %vm525, %v414, 0
        %529 = vmatpush.msra.mxu0 0.0
        %530 = vmatpush.msra.mxu0 0.0
        %531 = vmatpush.msra.mxu0 0.0
        %532 = vmatpush.msra.mxu0 0.0
        %533 = vmatpush.msra.mxu0 0.0
        %534 = vmatpush.msra.mxu0 0.0
        %535 = vmatpush.msra.mxu0 0.0
        %536 = vmatpush.msra.mxu0 0.0
        %537 = vmatpush.msra.mxu0 0.0
        %538 = vmatpush.msra.mxu0 0.0
        %539 = vmatpush.msra.mxu0 0.0
        %540 = vmatpush.msra.mxu0 0.0
        %541 = vmatpush.msra.mxu0 0.0
        %542 = vmatpush.msra.mxu0 0.0
        %543 = vmatpush.msra.mxu0 0.0
        %544 = vmatpush.msra.mxu0 %v527
        %545 = vmatmul.f32.gmra.mxu0 %v520
        %v546 = vpop.f32.mrf.mxu0
        %v547 = vadd.f32 0.0, %v546
        %548 = vmatmul.f32.gmra.mxu0 %v523
        %v549 = vpop.f32.mrf.mxu0
        %v550 = vadd.f32 0.0, %v549
        %551 = vdwg.mxu0
        %v553 = vsel %vm518, %v507, 0
        %v556 = vsel %vm518, %v517, 0
        %558 = vmatpush.msra.mxu0 0.0
        %559 = vmatpush.msra.mxu0 0.0
        %560 = vmatpush.msra.mxu0 0.0
        %561 = vmatpush.msra.mxu0 0.0
        %562 = vmatpush.msra.mxu0 0.0
        %563 = vmatpush.msra.mxu0 0.0
        %564 = vmatpush.msra.mxu0 0.0
        %565 = vmatpush.msra.mxu0 0.0
        %566 = vmatpush.msra.mxu0 0.0
        %567 = vmatpush.msra.mxu0 0.0
        %568 = vmatpush.msra.mxu0 0.0
        %569 = vmatpush.msra.mxu0 0.0
        %570 = vmatpush.msra.mxu0 0.0
        %571 = vmatpush.msra.mxu0 0.0
        %572 = vmatpush.msra.mxu0 0.0
        %573 = vmatpush.msra.mxu0 %v527
        %574 = vmatmul.f32.gmra.mxu0 %v553
        %v575 = vpop.f32.mrf.mxu0
        %v576 = vadd.f32 0.0, %v575
        %577 = vmatmul.f32.gmra.mxu0 %v556
        %v578 = vpop.f32.mrf.mxu0
        %v579 = vadd.f32 0.0, %v578
        %580 = vdwg.mxu0
        %v581 = vsub.f32 %v427, %v547
        %v582 = vsub.f32 %v428, %v550
        %v583 = vmul.f32 %v581, %v576
        %v584 = vmul.f32 %v582, %v579
        %v585 = vperm.slane %v415, 0
        %v586 = vmul.f32 %v583, %v585
        %v587 = vmul.f32 %v584, %v585
        %v588 = vperm.slane %v415, 1
        %v589 = vadd.f32 %v586, %v588
        %v590 = vadd.f32 %v587, %v588
        %v591 = vmul.f32 %v589, %v589
        %v592 = vmul.f32 %v590, %v590
        %v594 = vsel %vm429, %v591, 0
        %v597 = vsel %vm429, %v592, 0
        %599 = vmatpush.msra.mxu0 0.0
        %600 = vmatpush.msra.mxu0 0.0
        %601 = vmatpush.msra.mxu0 0.0
        %602 = vmatpush.msra.mxu0 0.0
        %603 = vmatpush.msra.mxu0 0.0
        %604 = vmatpush.msra.mxu0 0.0
        %605 = vmatpush.msra.mxu0 0.0
        %606 = vmatpush.msra.mxu0 0.0
        %607 = vmatpush.msra.mxu0 0.0
        %608 = vmatpush.msra.mxu0 0.0
        %609 = vmatpush.msra.mxu0 0.0
        %610 = vmatpush.msra.mxu0 0.0
        %611 = vmatpush.msra.mxu0 %v413
        %612 = vmatpush.msra.mxu0 %v412
        %613 = vmatpush.msra.mxu0 %v411
        %614 = vmatpush.msra.mxu0 %v410
        %615 = vmatmul.f32.gmra.mxu0 %v594
        %v616 = vpop.f32.mrf.mxu0
        %v617 = vadd.f32 0.0, %v616
        %618 = vmatmul.f32.gmra.mxu0 %v597
        %v619 = vpop.f32.mrf.mxu0
        %v620 = vadd.f32 0.0, %v619
        %621 = vdwg.mxu0
        %v622 = vmul.f32 %v617, 8.0
        %v623 = vmul.f32 %v620, 8.0
        %v624 = vperm.slane %v421, 0
        %v626 = vsel %vm518, %v622, 0
        %v629 = vsel %vm518, %v623, 0
        %v632 = vsel %vm525, %v416, 0
        %634 = vmatpush.msra.mxu0 0.0
        %635 = vmatpush.msra.mxu0 0.0
        %636 = vmatpush.msra.mxu0 0.0
        %637 = vmatpush.msra.mxu0 0.0
        %638 = vmatpush.msra.mxu0 0.0
        %639 = vmatpush.msra.mxu0 0.0
        %640 = vmatpush.msra.mxu0 0.0
        %641 = vmatpush.msra.mxu0 0.0
        %642 = vmatpush.msra.mxu0 0.0
        %643 = vmatpush.msra.mxu0 0.0
        %644 = vmatpush.msra.mxu0 0.0
        %645 = vmatpush.msra.mxu0 0.0
        %646 = vmatpush.msra.mxu0 0.0
        %647 = vmatpush.msra.mxu0 0.0
        %648 = vmatpush.msra.mxu0 0.0
        %649 = vmatpush.msra.mxu0 %v632
        %650 = vmatmul.f32.gmra.mxu0 %v626
        %v651 = vpop.f32.mrf.mxu0
        %v652 = vadd.f32 %v624, %v651
        %653 = vmatmul.f32.gmra.mxu0 %v629
        %v654 = vpop.f32.mrf.mxu0
        %v655 = vadd.f32 %v624, %v654
        %656 = vdwg.mxu0
        %v658 = vsel %vm429, %v589, 0
        %v661 = vsel %vm429, %v590, 0
        %663 = vmatpush.msra.mxu0 0.0
        %664 = vmatpush.msra.mxu0 0.0
        %665 = vmatpush.msra.mxu0 0.0
        %666 = vmatpush.msra.mxu0 0.0
        %667 = vmatpush.msra.mxu0 0.0
        %668 = vmatpush.msra.mxu0 0.0
        %669 = vmatpush.msra.mxu0 0.0
        %670 = vmatpush.msra.mxu0 0.0
        %671 = vmatpush.msra.mxu0 0.0
        %672 = vmatpush.msra.mxu0 0.0
        %673 = vmatpush.msra.mxu0 0.0
        %674 = vmatpush.msra.mxu0 0.0
        %675 = vmatpush.msra.mxu0 %v420
        %676 = vmatpush.msra.mxu0 %v419
        %677 = vmatpush.msra.mxu0 %v418
        %678 = vmatpush.msra.mxu0 %v417
        %679 = vmatmul.f32.gmra.mxu0 %v658
        %v680 = vpop.f32.mrf.mxu0
        %v681 = vadd.f32 0.0, %v680
        %682 = vmatmul.f32.gmra.mxu0 %v661
        %v683 = vpop.f32.mrf.mxu0
        %v684 = vadd.f32 0.0, %v683
        %685 = vdwg.mxu0
        %v686 = vmul.f32 %v681, 2.0
        %v687 = vmul.f32 %v684, 2.0
        %v688 = vsub.f32 %v652, %v686
        %v689 = vsub.f32 %v655, %v687
        %v690 = vmax.f32 %v688, 0.0
        %v691 = vmax.f32 %v689, 0.0
        %v692 = vrsqrt.pop %v690
        %v693 = vmul.f32 %v692, %v690
        %v694 = vmul.f32 %v693, %v692
        %v695 = vmul.f32 0.5, %v694
        %v696 = vsub.f32 1.5, %v695
        %v697 = vmul.f32 %v692, %v696
        %v698 = vmul.f32 %v690, %v697
        %vm699 = vcmp.eq.f32.partialorder %v690, inf
        %v700 = vsel %vm699, %v690, %v698
        %vm701 = vcmp.eq.f32.partialorder %v690, 0.0
        %v702 = vand.u32 %v690, 2147483648
        %v703 = vsel %vm701, %v702, %v700
        %v704 = vrsqrt.pop %v691
        %v705 = vmul.f32 %v704, %v691
        %v706 = vmul.f32 %v705, %v704
        %v707 = vmul.f32 0.5, %v706
        %v708 = vsub.f32 1.5, %v707
        %v709 = vmul.f32 %v704, %v708
        %v710 = vmul.f32 %v691, %v709
        %vm711 = vcmp.eq.f32.partialorder %v691, inf
        %v712 = vsel %vm711, %v691, %v710
        %vm713 = vcmp.eq.f32.partialorder %v691, 0.0
        %v714 = vand.u32 %v691, 2147483648
        %v715 = vsel %vm713, %v714, %v712
        %v716 = vperm.slane %v421, 1
        %v717 = vsub.f32 %v703, %v716
        %v718 = vsub.f32 %v715, %v716
        %v719 = vand.u32 2147483647, %v717
        %v720 = vand.u32 2147483647, %v718
        %v721 = vmul.f32 %v719, %v719
        %v722 = vmul.f32 %v720, %v720
        %v723 = vmul.f32 %v421, %v421
        %v724 = vperm.slane %v723, 2
        %v725 = vadd.f32 %v721, %v724
        %v726 = vadd.f32 %v722, %v724
        %v727 = vrsqrt.pop %v725
        %v728 = vmul.f32 %v727, %v725
        %v729 = vmul.f32 %v728, %v727
        %v730 = vmul.f32 0.5, %v729
        %v731 = vsub.f32 1.5, %v730
        %v732 = vmul.f32 %v727, %v731
        %v733 = vmul.f32 %v725, %v732
        %vm734 = vcmp.eq.f32.partialorder %v725, inf
        %v735 = vsel %vm734, %v725, %v733
        %vm736 = vcmp.eq.f32.partialorder %v725, 0.0
        %v737 = vand.u32 %v725, 2147483648
        %v738 = vsel %vm736, %v737, %v735
        %v739 = vrsqrt.pop %v726
        %v740 = vmul.f32 %v739, %v726
        %v741 = vmul.f32 %v740, %v739
        %v742 = vmul.f32 0.5, %v741
        %v743 = vsub.f32 1.5, %v742
        %v744 = vmul.f32 %v739, %v743
        %v745 = vmul.f32 %v726, %v744
        %vm746 = vcmp.eq.f32.partialorder %v726, inf
        %v747 = vsel %vm746, %v726, %v745
        %vm748 = vcmp.eq.f32.partialorder %v726, 0.0
        %v749 = vand.u32 %v726, 2147483648
        %v750 = vsel %vm748, %v749, %v747
        %v751 = vperm.slane %v421, 2
        %v752 = vsub.f32 %v738, %v751
        %v753 = vsub.f32 %v750, %v751
        %v754 = vand.u32 2147483647, %v752
        %v755 = vand.u32 2147483647, %v753
        %v756 = vsel %vm422, 1, 0
        %v757 = vperm.slane %v756, 5
        %vm758 = vcmp.eq.s32.totalorder %v757, 1
        %v759 = vsel %vm758, %v719, %v754
        %v760 = vsel %vm758, %v720, %v755
        %v761 = vmul.f32 %v759, %v759
        %v762 = vmul.f32 %v760, %v760
        %v763 = vperm.slane %v756, 4
        %vm764 = vcmp.eq.s32.totalorder %v763, 1
        %v765 = vsel %vm764, %v761, %v690
        %v766 = vsel %vm764, %v762, %v691
        %v767 = vmul.f32 %v765, -0.5
        %v768 = vmul.f32 %v766, -0.5
        %v769 = vmul.f32 %v767, 1.442695
        %v770 = vpow.pop %v769
        %v771 = vmul.f32 %v768, 1.442695
        %v772 = vpow.pop %v771
        %vm773 = vcmask 326656
        %774 = vst.msk [vmem:[#allocation2] sm:$0xff] %vm773, %v770
        %775 = vst.msk [vmem:[#allocation2 + $0x8] sm:$0xff] %vm773, %v772
      $region60: #{transformer_block_forward.6} parent=55 // pred_fallthru
        _
      %v776 = vld [vmem:[%s389] sm:$0xff]
      %vm777 = vcmask 261120
      %v779 = vsel %vm777, %v776, 0
      %781 = vmatpush.msra.mxu0 0.0
      %782 = vmatpush.msra.mxu0 0.0
      %783 = vmatpush.msra.mxu0 0.0
      %784 = vmatpush.msra.mxu0 0.0
      %785 = vmatpush.msra.mxu0 0.0
      %786 = vmatpush.msra.mxu0 0.0
      %787 = vmatpush.msra.mxu0 0.0
      %788 = vmatpush.msra.mxu0 0.0
      %789 = vmatpush.msra.mxu0 0.0
      %790 = vmatpush.msra.mxu0 0.0
      %791 = vmatpush.msra.mxu0 0.0
      %792 = vmatpush.msra.mxu0 0.0
      %793 = vmatpush.msra.mxu0 %v413
      %794 = vmatpush.msra.mxu0 %v412
      %795 = vmatpush.msra.mxu0 %v411
      %796 = vmatpush.msra.mxu0 %v410
      %797 = vmatmul.f32.gmra.mxu0 %v779
      %v798 = vpop.f32.mrf.mxu0
      %v799 = vadd.f32 0.0, %v798
      %800 = vdwg.mxu0
      %v801 = vmul.f32 %v776, %v776
      %v803 = vsel %vm777, %v801, 0
      %805 = vmatpush.msra.mxu0 0.0
      %806 = vmatpush.msra.mxu0 0.0
      %807 = vmatpush.msra.mxu0 0.0
      %808 = vmatpush.msra.mxu0 0.0
      %809 = vmatpush.msra.mxu0 0.0
      %810 = vmatpush.msra.mxu0 0.0
      %811 = vmatpush.msra.mxu0 0.0
      %812 = vmatpush.msra.mxu0 0.0
      %813 = vmatpush.msra.mxu0 0.0
      %814 = vmatpush.msra.mxu0 0.0
      %815 = vmatpush.msra.mxu0 0.0
      %816 = vmatpush.msra.mxu0 0.0
      %817 = vmatpush.msra.mxu0 %v413
      %818 = vmatpush.msra.mxu0 %v412
      %819 = vmatpush.msra.mxu0 %v411
      %820 = vmatpush.msra.mxu0 %v410
      %821 = vmatmul.f32.gmra.mxu0 %v803
      %v822 = vpop.f32.mrf.mxu0
      %v823 = vadd.f32 0.0, %v822
      %824 = vdwg.mxu0
      %v825 = vmul.f32 %v799, %v799
      %v826 = vsub.f32 %v823, %v825
      %v827 = vmax.f32 %v826, 0.0
      %v828 = vadd.f32 %v827, 1e-05
      %v829 = vrsqrt.pop %v828
      %v830 = vmul.f32 %v829, %v828
      %v831 = vmul.f32 %v830, %v829
      %v832 = vmul.f32 0.5, %v831
      %v833 = vsub.f32 1.5, %v832
      %v834 = vmul.f32 %v829, %v833
      %vm835 = vweird.f32 %v828
      %vm836 = vweird.f32 %v829
      %vm837 = vmor %vm835, %vm836
      %v838 = vsel %vm837, %v829, %v834
      %vm839 = vcmask 31744
      %v841 = vsel %vm839, %v799, 0
      %vm843 = vcmask 1043456
      %v845 = vsel %vm843, %v414, 0
      %847 = vmatpush.msra.mxu0 0.0
      %848 = vmatpush.msra.mxu0 0.0
      %849 = vmatpush.msra.mxu0 0.0
      %850 = vmatpush.msra.mxu0 0.0
      %851 = vmatpush.msra.mxu0 0.0
      %852 = vmatpush.msra.mxu0 0.0
      %853 = vmatpush.msra.mxu0 0.0
      %854 = vmatpush.msra.mxu0 0.0
      %855 = vmatpush.msra.mxu0 0.0
      %856 = vmatpush.msra.mxu0 0.0
      %857 = vmatpush.msra.mxu0 0.0
      %858 = vmatpush.msra.mxu0 0.0
      %859 = vmatpush.msra.mxu0 0.0
      %860 = vmatpush.msra.mxu0 0.0
      %861 = vmatpush.msra.mxu0 0.0
      %862 = vmatpush.msra.mxu0 %v845
      %863 = vmatmul.f32.gmra.mxu0 %v841
      %v864 = vpop.f32.mrf.mxu0
      %v865 = vadd.f32 0.0, %v864
      %866 = vdwg.mxu0
      %v868 = vsel %vm839, %v838, 0
      %870 = vmatpush.msra.mxu0 0.0
      %871 = vmatpush.msra.mxu0 0.0
      %872 = vmatpush.msra.mxu0 0.0
      %873 = vmatpush.msra.mxu0 0.0
      %874 = vmatpush.msra.mxu0 0.0
      %875 = vmatpush.msra.mxu0 0.0
      %876 = vmatpush.msra.mxu0 0.0
      %877 = vmatpush.msra.mxu0 0.0
      %878 = vmatpush.msra.mxu0 0.0
      %879 = vmatpush.msra.mxu0 0.0
      %880 = vmatpush.msra.mxu0 0.0
      %881 = vmatpush.msra.mxu0 0.0
      %882 = vmatpush.msra.mxu0 0.0
      %883 = vmatpush.msra.mxu0 0.0
      %884 = vmatpush.msra.mxu0 0.0
      %885 = vmatpush.msra.mxu0 %v845
      %886 = vmatmul.f32.gmra.mxu0 %v868
      %v887 = vpop.f32.mrf.mxu0
      %v888 = vadd.f32 0.0, %v887
      %889 = vdwg.mxu0
      %v890 = vsub.f32 %v776, %v865
      %v891 = vmul.f32 %v890, %v888
      %v892 = vperm.slane %v415, 0
      %v893 = vmul.f32 %v891, %v892
      %v894 = vperm.slane %v415, 1
      %v895 = vadd.f32 %v893, %v894
      %v896 = vmul.f32 %v895, %v895
      %v898 = vsel %vm777, %v896, 0
      %900 = vmatpush.msra.mxu0 0.0
      %901 = vmatpush.msra.mxu0 0.0
      %902 = vmatpush.msra.mxu0 0.0
      %903 = vmatpush.msra.mxu0 0.0
      %904 = vmatpush.msra.mxu0 0.0
      %905 = vmatpush.msra.mxu0 0.0
      %906 = vmatpush.msra.mxu0 0.0
      %907 = vmatpush.msra.mxu0 0.0
      %908 = vmatpush.msra.mxu0 0.0
      %909 = vmatpush.msra.mxu0 0.0
      %910 = vmatpush.msra.mxu0 0.0
      %911 = vmatpush.msra.mxu0 0.0
      %912 = vmatpush.msra.mxu0 %v413
      %913 = vmatpush.msra.mxu0 %v412
      %914 = vmatpush.msra.mxu0 %v411
      %915 = vmatpush.msra.mxu0 %v410
      %916 = vmatmul.f32.gmra.mxu0 %v898
      %v917 = vpop.f32.mrf.mxu0
      %v918 = vadd.f32 0.0, %v917
      %919 = vdwg.mxu0
      %v920 = vmul.f32 %v918, 8.0
      %v921 = vperm.slane %v421, 0
      %v923 = vsel %vm839, %v920, 0
      %v926 = vsel %vm843, %v416, 0
      %928 = vmatpush.msra.mxu0 0.0
      %929 = vmatpush.msra.mxu0 0.0
      %930 = vmatpush.msra.mxu0 0.0
      %931 = vmatpush.msra.mxu0 0.0
      %932 = vmatpush.msra.mxu0 0.0
      %933 = vmatpush.msra.mxu0 0.0
      %934 = vmatpush.msra.mxu0 0.0
      %935 = vmatpush.msra.mxu0 0.0
      %936 = vmatpush.msra.mxu0 0.0
      %937 = vmatpush.msra.mxu0 0.0
      %938 = vmatpush.msra.mxu0 0.0
      %939 = vmatpush.msra.mxu0 0.0
      %940 = vmatpush.msra.mxu0 0.0
      %941 = vmatpush.msra.mxu0 0.0
      %942 = vmatpush.msra.mxu0 0.0
      %943 = vmatpush.msra.mxu0 %v926
      %944 = vmatmul.f32.gmra.mxu0 %v923
      %v945 = vpop.f32.mrf.mxu0
      %v946 = vadd.f32 %v921, %v945
      %947 = vdwg.mxu0
      %v949 = vsel %vm777, %v895, 0
      %951 = vmatpush.msra.mxu0 0.0
      %952 = vmatpush.msra.mxu0 0.0
      %953 = vmatpush.msra.mxu0 0.0
      %954 = vmatpush.msra.mxu0 0.0
      %955 = vmatpush.msra.mxu0 0.0
      %956 = vmatpush.msra.mxu0 0.0
      %957 = vmatpush.msra.mxu0 0.0
      %958 = vmatpush.msra.mxu0 0.0
      %959 = vmatpush.msra.mxu0 0.0
      %960 = vmatpush.msra.mxu0 0.0
      %961 = vmatpush.msra.mxu0 0.0
      %962 = vmatpush.msra.mxu0 0.0
      %963 = vmatpush.msra.mxu0 %v420
      %964 = vmatpush.msra.mxu0 %v419
      %965 = vmatpush.msra.mxu0 %v418
      %966 = vmatpush.msra.mxu0 %v417
      %967 = vmatmul.f32.gmra.mxu0 %v949
      %v968 = vpop.f32.mrf.mxu0
      %v969 = vadd.f32 0.0, %v968
      %970 = vdwg.mxu0
      %v971 = vmul.f32 %v969, 2.0
      %v972 = vsub.f32 %v946, %v971
      %v973 = vmax.f32 %v972, 0.0
      %v974 = vrsqrt.pop %v973
      %v975 = vmul.f32 %v974, %v973
      %v976 = vmul.f32 %v975, %v974
      %v977 = vmul.f32 0.5, %v976
      %v978 = vsub.f32 1.5, %v977
      %v979 = vmul.f32 %v974, %v978
      %v980 = vmul.f32 %v973, %v979
      %vm981 = vcmp.eq.f32.partialorder %v973, inf
      %v982 = vsel %vm981, %v973, %v980
      %vm983 = vcmp.eq.f32.partialorder %v973, 0.0
      %v984 = vand.u32 %v973, 2147483648
      %v985 = vsel %vm983, %v984, %v982
      %v986 = vperm.slane %v421, 1
      %v987 = vsub.f32 %v985, %v986
      %v988 = vand.u32 2147483647, %v987
      %v989 = vmul.f32 %v988, %v988
      %v990 = vmul.f32 %v421, %v421
      %v991 = vperm.slane %v990, 2
      %v992 = vadd.f32 %v989, %v991
      %v993 = vrsqrt.pop %v992
      %v994 = vmul.f32 %v993, %v992
      %v995 = vmul.f32 %v994, %v993
      %v996 = vmul.f32 0.5, %v995
      %v997 = vsub.f32 1.5, %v996
      %v998 = vmul.f32 %v993, %v997
      %v999 = vmul.f32 %v992, %v998
      %vm1000 = vcmp.eq.f32.partialorder %v992, inf
      %v1001 = vsel %vm1000, %v992, %v999
      %vm1002 = vcmp.eq.f32.partialorder %v992, 0.0
      %v1003 = vand.u32 %v992, 2147483648
      %v1004 = vsel %vm1002, %v1003, %v1001
      %v1005 = vperm.slane %v421, 2
      %v1006 = vsub.f32 %v1004, %v1005
      %v1007 = vand.u32 2147483647, %v1006
      %v1008 = vsel %vm422, 1, 0
      %v1009 = vperm.slane %v1008, 5
      %vm1010 = vcmp.eq.s32.totalorder %v1009, 1
      %v1011 = vsel %vm1010, %v988, %v1007
      %v1012 = vmul.f32 %v1011, %v1011
      %v1013 = vperm.slane %v1008, 4
      %vm1014 = vcmp.eq.s32.totalorder %v1013, 1
      %v1015 = vsel %vm1014, %v1012, %v973
      %v1016 = vmul.f32 %v1015, -0.5
      %v1017 = vmul.f32 %v1016, 1.442695
      %v1018 = vpow.pop %v1017
      %v1019 = vperm.slane %v421, 3
      %v1020 = vmul.f32 %v1018, %v1019
      %v1021 = vld [vmem:[#allocation2] sm:$0xff]
      %v1022 = vld [vmem:[#allocation2 + $0x8] sm:$0xff]
      %v1023 = vld [vmem:[%s401] sm:$0xff]
      %v1024 = vld [vmem:[%s401 + $0x8] sm:$0xff]
      %vm1025 = vcmask 80896
      %v1027 = vsel %vm1025, %v1020, 0
      %v1030 = vsel %vm1025, %v1021, 0
      %v1033 = vsel %vm1025, %v1022, 0
      %1035 = vmatpush.xpose.msra.mxu0 0.0
      %1036 = vmatpush.xpose.msra.mxu0 0.0
      %1037 = vmatpush.xpose.msra.mxu0 0.0
      %1038 = vmatpush.xpose.msra.mxu0 0.0
      %1039 = vmatpush.xpose.msra.mxu0 0.0
      %1040 = vmatpush.xpose.msra.mxu0 0.0
      %1041 = vmatpush.xpose.msra.mxu0 0.0
      %1042 = vmatpush.xpose.msra.mxu0 0.0
      %1043 = vmatpush.xpose.msra.mxu0 0.0
      %1044 = vmatpush.xpose.msra.mxu0 0.0
      %1045 = vmatpush.xpose.msra.mxu0 0.0
      %1046 = vmatpush.xpose.msra.mxu0 0.0
      %1047 = vmatpush.xpose.msra.mxu0 0.0
      %1048 = vmatpush.xpose.msra.mxu0 0.0
      %1049 = vmatpush.xpose.msra.mxu0 %v1033
      %1050 = vmatpush.xpose.msra.mxu0 %v1030
      %1051 = vmatmul.f32.gmra.mxu0 %v1027
      %v1052 = vpop.f32.mrf.mxu0
      %v1053 = vadd.f32 0.0, %v1052
      %1054 = vdwg.mxu0
      %vm1055 = vcmask 130048
      %v1056 = vsel %vm1055, %v1053, -inf
      %1057 = vmax.xlane.f32.xlu0 %v1056
      %v1058 = vpop.xlane.xlu0 %1057
      %v1059 = vsub.f32 %v1053, %v1058
      %v1060 = vmul.f32 %v1059, 1.442695
      %v1061 = vpow.pop %v1060
      %v1062 = vsel %vm1055, %v1061, 0.0
      %1063 = vadd.xlane.f32.xlu0 %v1062
      %v1064 = vpop.xlane.xlu0 %1063
      %v1065 = vrcp.pop %v1064
      %v1066 = vmul.f32 %v1064, %v1065
      %v1067 = vsub.f32 2.0, %v1066
      %v1068 = vmul.f32 %v1065, %v1067
      %v1070 = vsel %vm1055, %v1061, 0
      %1072 = vmatpush.msra.mxu0 0.0
      %1073 = vmatpush.msra.mxu0 0.0
      %1074 = vmatpush.msra.mxu0 0.0
      %1075 = vmatpush.msra.mxu0 0.0
      %1076 = vmatpush.msra.mxu0 0.0
      %1077 = vmatpush.msra.mxu0 0.0
      %1078 = vmatpush.msra.mxu0 0.0
      %1079 = vmatpush.msra.mxu0 0.0
      %1080 = vmatpush.msra.mxu0 0.0
      %1081 = vmatpush.msra.mxu0 0.0
      %1082 = vmatpush.msra.mxu0 0.0
      %1083 = vmatpush.msra.mxu0 0.0
      %1084 = vmatpush.msra.mxu0 0.0
      %1085 = vmatpush.msra.mxu0 0.0
      %1086 = vmatpush.msra.mxu0 %v1024
      %1087 = vmatpush.msra.mxu0 %v1023
      %1088 = vmatmul.f32.gmra.mxu0 %v1070
      %v1089 = vpop.f32.mrf.mxu0
      %v1090 = vadd.f32 0.0, %v1089
      %1091 = vdwg.mxu0
      %v1092 = vmul.f32 %v1090, %v1068
      %vm1093 = vcmask 64512
      %1094 = vst.msk [vmem:[%s409] sm:$0xff] %vm1093, %v1092
      %1095 = vrot.lane.b32.xlu0 %v1020, 118
      %v1096 = vpop.permute.xlu0 %1095
      %1097 = vrot.lane.b32.xlu0 %v1021, 118
      %v1098 = vpop.permute.xlu0 %1097
      %1099 = vrot.lane.b32.xlu0 %v1022, 118
      %v1100 = vpop.permute.xlu0 %1099
      %v1101 = vsel %vm1025, %v1096, 0
      %v1103 = vsel %vm1025, %v1098, 0
      %v1105 = vsel %vm1025, %v1100, 0
      %1107 = vmatpush.xpose.msra.mxu0 0.0
      %1108 = vmatpush.xpose.msra.mxu0 0.0
      %1109 = vmatpush.xpose.msra.mxu0 0.0
      %1110 = vmatpush.xpose.msra.mxu0 0.0
      %1111 = vmatpush.xpose.msra.mxu0 0.0
      %1112 = vmatpush.xpose.msra.mxu0 0.0
      %1113 = vmatpush.xpose.msra.mxu0 0.0
      %1114 = vmatpush.xpose.msra.mxu0 0.0
      %1115 = vmatpush.xpose.msra.mxu0 0.0
      %1116 = vmatpush.xpose.msra.mxu0 0.0
      %1117 = vmatpush.xpose.msra.mxu0 0.0
      %1118 = vmatpush.xpose.msra.mxu0 0.0
      %1119 = vmatpush.xpose.msra.mxu0 0.0
      %1120 = vmatpush.xpose.msra.mxu0 0.0
      %1121 = vmatpush.xpose.msra.mxu0 %v1105
      %1122 = vmatpush.xpose.msra.mxu0 %v1103
      %1123 = vmatmul.f32.gmra.mxu0 %v1101
      %v1124 = vpop.f32.mrf.mxu0
      %v1125 = vadd.f32 0.0, %v1124
      %1126 = vdwg.mxu0
      %v1127 = vsel %vm1055, %v1125, -inf
      %1128 = vmax.xlane.f32.xlu0 %v1127
      %v1129 = vpop.xlane.xlu0 %1128
      %v1130 = vsub.f32 %v1125, %v1129
      %v1131 = vmul.f32 %v1130, 1.442695
      %v1132 = vpow.pop %v1131
      %v1133 = vsel %vm1055, %v1132, 0.0
      %1134 = vadd.xlane.f32.xlu0 %v1133
      %v1135 = vpop.xlane.xlu0 %1134
      %v1136 = vrcp.pop %v1135
      %v1137 = vmul.f32 %v1135, %v1136
      %v1138 = vsub.f32 2.0, %v1137
      %v1139 = vmul.f32 %v1136, %v1138
      %1142 = vrot.lane.b32.xlu0 %v1023, 120
      %v1143 = vpop.permute.xlu0 %1142
      %1144 = vrot.lane.b32.xlu0 %v1024, 120
      %v1145 = vpop.permute.xlu0 %1144
      %v1149 = vsel %vm1055, %v1132, 0
      %1151 = vmatpush.msra.mxu0 0.0
      %1152 = vmatpush.msra.mxu0 0.0
      %1153 = vmatpush.msra.mxu0 0.0
      %1154 = vmatpush.msra.mxu0 0.0
      %1155 = vmatpush.msra.mxu0 0.0
      %1156 = vmatpush.msra.mxu0 0.0
      %1157 = vmatpush.msra.mxu0 0.0
      %1158 = vmatpush.msra.mxu0 0.0
      %1159 = vmatpush.msra.mxu0 0.0
      %1160 = vmatpush.msra.mxu0 0.0
      %1161 = vmatpush.msra.mxu0 0.0
      %1162 = vmatpush.msra.mxu0 0.0
      %1163 = vmatpush.msra.mxu0 0.0
      %1164 = vmatpush.msra.mxu0 0.0
      %1165 = vmatpush.msra.mxu0 %v1145
      %1166 = vmatpush.msra.mxu0 %v1143
      %1167 = vmatmul.f32.gmra.mxu0 %v1149
      %v1168 = vpop.f32.mrf.mxu0
      %v1169 = vadd.f32 0.0, %v1168
      %1170 = vdwg.mxu0
      %v1171 = vmul.f32 %v1169, %v1139
      %1173 = vrot.lane.b32.xlu0 %v1171, 8
      %v1174 = vpop.permute.xlu0 %1173
      %vm1176 = vcmask 130112
      %1177 = vst.msk [vmem:[%s409] sm:$0xff] %vm1176, %v1174
      %1178 = vrot.lane.b32.xlu0 %v1020, 108
      %v1179 = vpop.permute.xlu0 %1178
      %1180 = vrot.lane.b32.xlu0 %v1021, 108
      %v1181 = vpop.permute.xlu0 %1180
      %1182 = vrot.lane.b32.xlu0 %v1022, 108
      %v1183 = vpop.permute.xlu0 %1182
      %v1184 = vsel %vm1025, %v1179, 0
      %v1186 = vsel %vm1025, %v1181, 0
      %v1188 = vsel %vm1025, %v1183, 0
      %1190 = vmatpush.xpose.msra.mxu0 0.0
      %1191 = vmatpush.xpose.msra.mxu0 0.0
      %1192 = vmatpush.xpose.msra.mxu0 0.0
      %1193 = vmatpush.xpose.msra.mxu0 0.0
      %1194 = vmatpush.xpose.msra.mxu0 0.0
      %1195 = vmatpush.xpose.msra.mxu0 0.0
      %1196 = vmatpush.xpose.msra.mxu0 0.0
      %1197 = vmatpush.xpose.msra.mxu0 0.0
      %1198 = vmatpush.xpose.msra.mxu0 0.0
      %1199 = vmatpush.xpose.msra.mxu0 0.0
      %1200 = vmatpush.xpose.msra.mxu0 0.0
      %1201 = vmatpush.xpose.msra.mxu0 0.0
      %1202 = vmatpush.xpose.msra.mxu0 0.0
      %1203 = vmatpush.xpose.msra.mxu0 0.0
      %1204 = vmatpush.xpose.msra.mxu0 %v1188
      %1205 = vmatpush.xpose.msra.mxu0 %v1186
      %1206 = vmatmul.f32.gmra.mxu0 %v1184
      %v1207 = vpop.f32.mrf.mxu0
      %v1208 = vadd.f32 0.0, %v1207
      %1209 = vdwg.mxu0
      %v1210 = vsel %vm1055, %v1208, -inf
      %1211 = vmax.xlane.f32.xlu0 %v1210
      %v1212 = vpop.xlane.xlu0 %1211
      %v1213 = vsub.f32 %v1208, %v1212
      %v1214 = vmul.f32 %v1213, 1.442695
      %v1215 = vpow.pop %v1214
      %v1216 = vsel %vm1055, %v1215, 0.0
      %1217 = vadd.xlane.f32.xlu0 %v1216
      %v1218 = vpop.xlane.xlu0 %1217
      %v1219 = vrcp.pop %v1218
      %v1220 = vmul.f32 %v1218, %v1219
      %v1221 = vsub.f32 2.0, %v1220
      %v1222 = vmul.f32 %v1219, %v1221
      %1223 = vrot.lane.b32.xlu0 %v1023, 112
      %v1224 = vpop.permute.xlu0 %1223
      %1225 = vrot.lane.b32.xlu0 %v1024, 112
      %v1226 = vpop.permute.xlu0 %1225
      %v1230 = vsel %vm1055, %v1215, 0
      %1232 = vmatpush.msra.mxu0 0.0
      %1233 = vmatpush.msra.mxu0 0.0
      %1234 = vmatpush.msra.mxu0 0.0
      %1235 = vmatpush.msra.mxu0 0.0
      %1236 = vmatpush.msra.mxu0 0.0
      %1237 = vmatpush.msra.mxu0 0.0
      %1238 = vmatpush.msra.mxu0 0.0
      %1239 = vmatpush.msra.mxu0 0.0
      %1240 = vmatpush.msra.mxu0 0.0
      %1241 = vmatpush.msra.mxu0 0.0
      %1242 = vmatpush.msra.mxu0 0.0
      %1243 = vmatpush.msra.mxu0 0.0
      %1244 = vmatpush.msra.mxu0 0.0
      %1245 = vmatpush.msra.mxu0 0.0
      %1246 = vmatpush.msra.mxu0 %v1226
      %1247 = vmatpush.msra.mxu0 %v1224
      %1248 = vmatmul.f32.gmra.mxu0 %v1230
      %v1249 = vpop.f32.mrf.mxu0
      %v1250 = vadd.f32 0.0, %v1249
      %1251 = vdwg.mxu0
      %v1252 = vmul.f32 %v1250, %v1222
      %1254 = vrot.lane.b32.xlu0 %v1252, 16
      %v1255 = vpop.permute.xlu0 %1254
      %vm1257 = vcmask 195712
      %1258 = vst.msk [vmem:[%s409] sm:$0xff] %vm1257, %v1255
      %1259 = vrot.lane.b32.xlu0 %v1020, 98
      %v1260 = vpop.permute.xlu0 %1259
      %1261 = vrot.lane.b32.xlu0 %v1021, 98
      %v1262 = vpop.permute.xlu0 %1261
      %1263 = vrot.lane.b32.xlu0 %v1022, 98
      %v1264 = vpop.permute.xlu0 %1263
      %v1265 = vsel %vm1025, %v1260, 0
      %v1267 = vsel %vm1025, %v1262, 0
      %v1269 = vsel %vm1025, %v1264, 0
      %1271 = vmatpush.xpose.msra.mxu0 0.0
      %1272 = vmatpush.xpose.msra.mxu0 0.0
      %1273 = vmatpush.xpose.msra.mxu0 0.0
      %1274 = vmatpush.xpose.msra.mxu0 0.0
      %1275 = vmatpush.xpose.msra.mxu0 0.0
      %1276 = vmatpush.xpose.msra.mxu0 0.0
      %1277 = vmatpush.xpose.msra.mxu0 0.0
      %1278 = vmatpush.xpose.msra.mxu0 0.0
      %1279 = vmatpush.xpose.msra.mxu0 0.0
      %1280 = vmatpush.xpose.msra.mxu0 0.0
      %1281 = vmatpush.xpose.msra.mxu0 0.0
      %1282 = vmatpush.xpose.msra.mxu0 0.0
      %1283 = vmatpush.xpose.msra.mxu0 0.0
      %1284 = vmatpush.xpose.msra.mxu0 0.0
      %1285 = vmatpush.xpose.msra.mxu0 %v1269
      %1286 = vmatpush.xpose.msra.mxu0 %v1267
      %1287 = vmatmul.f32.gmra.mxu0 %v1265
      %v1288 = vpop.f32.mrf.mxu0
      %v1289 = vadd.f32 0.0, %v1288
      %1290 = vdwg.mxu0
      %v1291 = vsel %vm1055, %v1289, -inf
      %1292 = vmax.xlane.f32.xlu0 %v1291
      %v1293 = vpop.xlane.xlu0 %1292
      %v1294 = vsub.f32 %v1289, %v1293
      %v1295 = vmul.f32 %v1294, 1.442695
      %v1296 = vpow.pop %v1295
      %v1297 = vsel %vm1055, %v1296, 0.0
      %1298 = vadd.xlane.f32.xlu0 %v1297
      %v1299 = vpop.xlane.xlu0 %1298
      %v1300 = vrcp.pop %v1299
      %v1301 = vmul.f32 %v1299, %v1300
      %v1302 = vsub.f32 2.0, %v1301
      %v1303 = vmul.f32 %v1300, %v1302
      %1304 = vrot.lane.b32.xlu0 %v1023, 104
      %v1305 = vpop.permute.xlu0 %1304
      %1306 = vrot.lane.b32.xlu0 %v1024, 104
      %v1307 = vpop.permute.xlu0 %1306
      %v1311 = vsel %vm1055, %v1296, 0
      %1313 = vmatpush.msra.mxu0 0.0
      %1314 = vmatpush.msra.mxu0 0.0
      %1315 = vmatpush.msra.mxu0 0.0
      %1316 = vmatpush.msra.mxu0 0.0
      %1317 = vmatpush.msra.mxu0 0.0
      %1318 = vmatpush.msra.mxu0 0.0
      %1319 = vmatpush.msra.mxu0 0.0
      %1320 = vmatpush.msra.mxu0 0.0
      %1321 = vmatpush.msra.mxu0 0.0
      %1322 = vmatpush.msra.mxu0 0.0
      %1323 = vmatpush.msra.mxu0 0.0
      %1324 = vmatpush.msra.mxu0 0.0
      %1325 = vmatpush.msra.mxu0 0.0
      %1326 = vmatpush.msra.mxu0 0.0
      %1327 = vmatpush.msra.mxu0 %v1307
      %1328 = vmatpush.msra.mxu0 %v1305
      %1329 = vmatmul.f32.gmra.mxu0 %v1311
      %v1330 = vpop.f32.mrf.mxu0
      %v1331 = vadd.f32 0.0, %v1330
      %1332 = vdwg.mxu0
      %v1333 = vmul.f32 %v1331, %v1303
      %1335 = vrot.lane.b32.xlu0 %v1333, 24
      %v1336 = vpop.permute.xlu0 %1335
      %vm1338 = vcmask 261312
      %1339 = vst.msk [vmem:[%s409] sm:$0xff] %vm1338, %v1336
      %p1340 = scmp.lt.s32.totalorder %s24, 1
      %s1341 = scalar_select %p1340, %s24, 1
      %p1342 = scmp.lt.s32.totalorder %s25, 1
      %s1343 = scalar_select %p1342, %s25, 1
      %s1344 = smul.addr %s1341, 2
      %s1345 = sadd.s32 %s1343, %s1344
      %s1346 = smul.addr %s1345, 8
      %s1347 = scalar_lea.vmem %s9, %s1346
      // Predicated region
      $region61: #{transformer_block_forward.6} parent=55 // pred_check
        %p1348 = pneg %p258
      $region62: #{transformer_block_forward.6} parent=55 // pred_check_branch
        %1350 = sbr.rel (%p1348) target = $region64
      $region63: #{transformer_block_forward.6} parent=55 // pred_region
        _
      $region64: #{transformer_block_forward.6} parent=55 // pred_fallthru
        _
    $region56: #{transformer_block_forward.6} parent=5 // pred_fallthru
      _
    %p1351 = scmp.le.s32.totalorder 2, %s15
    // Predicated region
    $region65: #{transformer_block_forward.6} parent=5 // pred_check
      %p1352 = pneg %p1351
    $region66: #{transformer_block_forward.6} parent=5 // pred_check_branch
      %1354 = sbr.rel (%p1352) target = $region68
    $region67: #{transformer_block_forward.6} parent=5 // pred_region
      %s1355 = ssub.s32 %s15, 2
      // Predicated region
      $region69: #{transformer_block_forward.6} parent=67 // pred_check
        %p1356 = pneg %p264
      $region70: #{transformer_block_forward.6} parent=67 // pred_check_branch
        %1358 = sbr.rel (%p1356) target = $region72
      $region71: #{transformer_block_forward.6} parent=67 // pred_region
        %p1359 = scmp.lt.s32.totalorder %s26, 1
        %s1360 = scalar_select %p1359, %s26, 1
        %p1361 = scmp.lt.s32.totalorder %s27, 1
        %s1362 = scalar_select %p1361, %s27, 1
        %s1363 = smul.addr %s1360, 2
        %s1364 = sadd.s32 %s1362, %s1363
        %s1365 = smul.addr %s1364, 8
        %s1366 = scalar_lea.vmem %s9, %s1365
      $region72: #{transformer_block_forward.6} parent=67 // pred_fallthru
        _
    $region68: #{transformer_block_forward.6} parent=5 // pred_fallthru
      _
  $region6: #{transformer_block_forward.6} parent=0 // loop_footer
    %s19 = sadd.s32 1, %s15
  $region7: #{transformer_block_forward.6} parent=0 // loop_footer_branch
    %14 = sbr.rel target = $region3
  $region8: #{transformer_block_forward.6} parent=0 // loop_exit
    _

</llo_original>
